<compile_context>
chip_gen: v7x
topology: tpu7x:2x2x1
jax: 0.10.0
libtpu: 0.0.40
codegen_flags: <defaults>
</compile_context>

<pallas_src>
import functools

import jax
import jax.numpy as jnp
import numpy as np
from jax.experimental import pallas as pl
from jax.experimental.pallas import tpu as pltpu


# ----------------------------------------------------------------------------
# Fused bottleneck kernel: one image per grid step, everything kept in VMEM.
# ----------------------------------------------------------------------------
def _make_bottleneck_kernel(H, W, Cin, Cmid, Cout, stride, downsample):
    Hp, Wp = H + 2, W + 2                    # padded conv1-output extents
    Ho = (H - 1) // stride + 1
    Wo = (W - 1) // stride + 1
    # Fold the 3 kx taps into the contraction dim only when channel blocks are
    # lane-aligned (concat is then pure vreg placement, no lane shuffles).
    fold_kx = (Cmid % 64 == 0) and stride == 1

    def kernel(*refs):
        if downsample:
            (x_ref, w1_ref, b1_ref, w2_ref, b2_ref, w3_ref, b3_ref,
             wd_ref, bd_ref, o_ref, pad_ref, acc_ref) = refs
        else:
            (x_ref, w1_ref, b1_ref, w2_ref, b2_ref, w3_ref, b3_ref,
             o_ref, pad_ref, acc_ref) = refs

        x = x_ref[0]                                   # (H, W, Cin) bf16
        xm = x.reshape(H * W, Cin)

        # ---- conv1 (1x1, stride 1) + folded BN1 + ReLU ---------------------
        h1 = jnp.dot(xm, w1_ref[...], preferred_element_type=jnp.float32)
        h1 = jnp.maximum(h1 + b1_ref[...], 0.0)        # (H*W, Cmid) f32

        # ---- in-kernel zero padding (pad=1) for the 3x3 conv ---------------
        pad_ref[...] = jnp.zeros_like(pad_ref)
        pad_ref[1:H + 1, 1:W + 1, :] = h1.reshape(H, W, Cmid)

        # ---- conv2 (3x3, stride) + folded BN2 + ReLU -----------------------
        h1p = pad_ref[...]                             # (Hp, Wp, Cmid) f32
        acc_ref[...] = jnp.zeros_like(acc_ref)
        for ky in range(3):
            if fold_kx:
                taps = [
                    h1p[ky:ky + Ho, kx:kx + Wo, :].reshape(Ho * Wo, Cmid)
                    for kx in range(3)
                ]
                patch = jnp.concatenate(taps, axis=-1).astype(jnp.bfloat16)
                wk = w2_ref[ky * 3 * Cmid:(ky + 1) * 3 * Cmid, :]
                acc_ref[...] += jnp.dot(patch, wk,
                                        preferred_element_type=jnp.float32)
            else:
                for kx in range(3):
                    if stride == 1:
                        tap = h1p[ky:ky + Ho, kx:kx + Wo, :]
                    else:
                        # TODO(synk): replace the strided-W slice with a
                        # (Wo, stride) reshape to avoid sublane gathers.
                        tap = jax.lax.slice(
                            h1p, (ky, kx, 0),
                            (ky + stride * (Ho - 1) + 1,
                             kx + stride * (Wo - 1) + 1, Cmid),
                            (stride, stride, 1))
                    pm = tap.reshape(Ho * Wo, Cmid).astype(jnp.bfloat16)
                    wk = w2_ref[(ky * 3 + kx) * Cmid:
                                (ky * 3 + kx + 1) * Cmid, :]
                    acc_ref[...] += jnp.dot(pm, wk,
                                            preferred_element_type=jnp.float32)
        h2 = jnp.maximum(acc_ref[...] + b2_ref[...], 0.0)   # (Ho*Wo, Cmid) f32

        # ---- conv3 (1x1) + folded BN3 (no ReLU before the residual add) ----
        y = jnp.dot(h2.astype(jnp.bfloat16), w3_ref[...],
                    preferred_element_type=jnp.float32) + b3_ref[...]

        # ---- residual branch ------------------------------------------------
        if downsample:
            if stride == 1:
                xs = xm
            else:
                xs = jax.lax.slice(
                    x, (0, 0, 0),
                    (stride * (Ho - 1) + 1, stride * (Wo - 1) + 1, Cin),
                    (stride, stride, 1)).reshape(Ho * Wo, Cin)
            res = jnp.dot(xs, wd_ref[...],
                          preferred_element_type=jnp.float32) + bd_ref[...]
        else:
            res = xm.astype(jnp.float32)   # identity: Cin == Cout, stride == 1

        y = jnp.maximum(y + res, 0.0)
        o_ref[0] = y.reshape(Ho, Wo, Cout).astype(o_ref.dtype)

    return kernel


# ----------------------------------------------------------------------------
# Wrapper: NCHW <-> NHWC, host-side BN folding into weights, one pallas_call.
# ----------------------------------------------------------------------------
def bottleneck_forward(x_nchw, params, *, stride=1, downsampling=False):
    """Forward pass matching the PyTorch Bottleneck module (eval-mode BN)."""
    x = jnp.transpose(x_nchw, (0, 2, 3, 1))          # NCHW -> NHWC
    N, H, W, Cin = x.shape
    Cmid = params["w1"].shape[-1]
    Cout = params["w3"].shape[-1]
    Ho = (H - 1) // stride + 1
    Wo = (W - 1) // stride + 1

    def fold(w2d, scale):
        # Fold BN scale into conv weights (per output channel), cast to bf16.
        return (w2d * scale).astype(jnp.bfloat16)

    w1 = fold(params["w1"].reshape(Cin, Cmid), params["s1"])
    w2 = fold(params["w2"].reshape(9 * Cmid, Cmid), params["s2"])   # (ky,kx,cin) rows
    w3 = fold(params["w3"].reshape(Cmid, Cout), params["s3"])
    b1 = params["b1"].reshape(1, Cmid).astype(jnp.float32)
    b2 = params["b2"].reshape(1, Cmid).astype(jnp.float32)
    b3 = params["b3"].reshape(1, Cout).astype(jnp.float32)

    inputs = [x.astype(jnp.bfloat16), w1, b1, w2, b2, w3, b3]
    in_specs = [
        pl.BlockSpec((1, H, W, Cin), lambda n: (n, 0, 0, 0)),
        pl.BlockSpec((Cin, Cmid), lambda n: (0, 0)),
        pl.BlockSpec((1, Cmid), lambda n: (0, 0)),
        pl.BlockSpec((9 * Cmid, Cmid), lambda n: (0, 0)),
        pl.BlockSpec((1, Cmid), lambda n: (0, 0)),
        pl.BlockSpec((Cmid, Cout), lambda n: (0, 0)),
        pl.BlockSpec((1, Cout), lambda n: (0, 0)),
    ]
    if downsampling:
        wd = fold(params["wd"].reshape(Cin, Cout), params["sd"])
        bd = params["bd"].reshape(1, Cout).astype(jnp.float32)
        inputs += [wd, bd]
        in_specs += [
            pl.BlockSpec((Cin, Cout), lambda n: (0, 0)),
            pl.BlockSpec((1, Cout), lambda n: (0, 0)),
        ]

    kernel = _make_bottleneck_kernel(H, W, Cin, Cmid, Cout, stride,
                                     downsampling)

    out = pl.pallas_call(
        kernel,
        out_shape=jax.ShapeDtypeStruct((N, Ho, Wo, Cout), jnp.float32),
        grid=(N,),
        in_specs=in_specs,
        out_specs=pl.BlockSpec((1, Ho, Wo, Cout), lambda n: (n, 0, 0, 0)),
        scratch_shapes=[
            pltpu.VMEM((H + 2, W + 2, Cmid), jnp.float32),   # padded conv1 out
            pltpu.VMEM((Ho * Wo, Cmid), jnp.float32),        # conv2 accumulator
        ],
        compiler_params=pltpu.CompilerParams(
            dimension_semantics=("parallel",)),
    )(*inputs)

    return jnp.transpose(out, (0, 3, 1, 2))          # NHWC -> NCHW


# ----------------------------------------------------------------------------
# Parameter construction (deterministic) + BN folding helper.
# ----------------------------------------------------------------------------
def fold_bn(gamma, beta, mean, var, eps=1e-5):
    scale = gamma / jnp.sqrt(var + eps)
    bias = beta - mean * scale
    return scale, bias


def init_bottleneck_params(key, in_places, places, expansion=4,
                           downsampling=False):
    out_c = places * expansion
    keys = jax.random.split(key, 16)

    def conv_w(k, cout, cin, kh, kw):
        # PyTorch layout (Cout, Cin, KH, KW) -> HWIO (KH, KW, Cin, Cout)
        w = 0.1 * jax.random.normal(k, (cout, cin, kh, kw), jnp.float32)
        return jnp.transpose(w, (2, 3, 1, 0))

    def bn_p(k, c):
        k1, k2, k3, k4 = jax.random.split(k, 4)
        gamma = 1.0 + 0.1 * jax.random.normal(k1, (c,), jnp.float32)
        beta = 0.1 * jax.random.normal(k2, (c,), jnp.float32)
        mean = 0.1 * jax.random.normal(k3, (c,), jnp.float32)
        var = jax.random.uniform(k4, (c,), jnp.float32, 0.5, 1.5)
        return fold_bn(gamma, beta, mean, var)

    p = {}
    p["w1"] = conv_w(keys[0], places, in_places, 1, 1)
    p["s1"], p["b1"] = bn_p(keys[1], places)
    p["w2"] = conv_w(keys[2], places, places, 3, 3)
    p["s2"], p["b2"] = bn_p(keys[3], places)
    p["w3"] = conv_w(keys[4], out_c, places, 1, 1)
    p["s3"], p["b3"] = bn_p(keys[5], out_c)
    if downsampling:
        p["wd"] = conv_w(keys[6], out_c, in_places, 1, 1)
        p["sd"], p["bd"] = bn_p(keys[7], out_c)
    return p


# ----------------------------------------------------------------------------
# Pure-JAX f32 reference (lax.conv) for verification.
# ----------------------------------------------------------------------------
def _ref_conv_bn(x, w, scale, bias, stride, pad, relu, residual=None):
    y = jax.lax.conv_general_dilated(
        x, w, (stride, stride), [(pad, pad), (pad, pad)],
        dimension_numbers=("NHWC", "HWIO", "NHWC"))
    y = y * scale + bias
    if residual is not None:
        y = y + residual
    if relu:
        y = jnp.maximum(y, 0.0)
    return y


def _ref_bottleneck(x_nchw, p, *, stride=1, downsampling=False):
    x = jnp.transpose(x_nchw, (0, 2, 3, 1))
    out = _ref_conv_bn(x, p["w1"], p["s1"], p["b1"], 1, 0, True)
    out = _ref_conv_bn(out, p["w2"], p["s2"], p["b2"], stride, 1, True)
    res = (_ref_conv_bn(x, p["wd"], p["sd"], p["bd"], stride, 0, False)
           if downsampling else x)
    out = _ref_conv_bn(out, p["w3"], p["s3"], p["b3"], 1, 0, True, residual=res)
    return jnp.transpose(out, (0, 3, 1, 2))


if __name__ == "__main__":
    # Bottleneck(in_places=16, places=8, stride=1, downsampling=True,
    # expansion=4) -> out channels = 32.
    N, in_places, H, W = 2, 16, 16, 16
    places, expansion, stride, downsampling = 8, 4, 1, True

    key = jax.random.PRNGKey(0)
    kx_, kp = jax.random.split(key)
    x = jax.random.normal(kx_, (N, in_places, H, W), jnp.float32)  # NCHW
    params = init_bottleneck_params(kp, in_places, places, expansion,
                                    downsampling)

    fwd = jax.jit(functools.partial(bottleneck_forward, stride=stride,
                                    downsampling=downsampling))
    out = jax.block_until_ready(fwd(x, params))

    ref = jax.block_until_ready(
        _ref_bottleneck(x, params, stride=stride, downsampling=downsampling))

    assert out.shape == (N, places * expansion, H // stride, W // stride), out.shape
    # bf16 MXU operands with f32 accumulation vs. full-f32 reference.
    np.testing.assert_allclose(np.asarray(out), np.asarray(ref),
                               rtol=2e-2, atol=2e-2)

    print("KERNEL_OK")
</pallas_src>

<mosaic_0001>
module attributes {stable_mosaic.version = 11 : i64} {
  func.func @kernel(%arg0: i32, %arg1: memref<1x16x16x16xbf16, #tpu.memory_space<vmem>>, %arg2: memref<16x8xbf16, #tpu.memory_space<vmem>>, %arg3: memref<1x8xf32, #tpu.memory_space<vmem>>, %arg4: memref<72x8xbf16, #tpu.memory_space<vmem>>, %arg5: memref<1x8xf32, #tpu.memory_space<vmem>>, %arg6: memref<8x32xbf16, #tpu.memory_space<vmem>>, %arg7: memref<1x32xf32, #tpu.memory_space<vmem>>, %arg8: memref<16x32xbf16, #tpu.memory_space<vmem>>, %arg9: memref<1x32xf32, #tpu.memory_space<vmem>>, %arg10: memref<1x16x16x32xf32, #tpu.memory_space<vmem>>, %arg11: memref<18x18x8xf32, #tpu.memory_space<vmem>>, %arg12: memref<256x8xf32, #tpu.memory_space<vmem>>) attributes {dimension_semantics = [#tpu.dimension_semantics<parallel>], iteration_bounds = array<i64: 2>, scalar_prefetch = 0 : i64, scratch_operands = 2 : i64, tpu.core_type = #tpu.core_type<tc>, window_params = [{transform_indices = @transform_0, window_bounds = array<i64: 1, 16, 16, 16>}, {pipeline_mode = #tpu.pipeline_mode<synchronous>, transform_indices = @transform_1, window_bounds = array<i64: 16, 8>}, {pipeline_mode = #tpu.pipeline_mode<synchronous>, transform_indices = @transform_2, window_bounds = array<i64: 1, 8>}, {pipeline_mode = #tpu.pipeline_mode<synchronous>, transform_indices = @transform_3, window_bounds = array<i64: 72, 8>}, {pipeline_mode = #tpu.pipeline_mode<synchronous>, transform_indices = @transform_4, window_bounds = array<i64: 1, 8>}, {pipeline_mode = #tpu.pipeline_mode<synchronous>, transform_indices = @transform_5, window_bounds = array<i64: 8, 32>}, {pipeline_mode = #tpu.pipeline_mode<synchronous>, transform_indices = @transform_6, window_bounds = array<i64: 1, 32>}, {pipeline_mode = #tpu.pipeline_mode<synchronous>, transform_indices = @transform_7, window_bounds = array<i64: 16, 32>}, {pipeline_mode = #tpu.pipeline_mode<synchronous>, transform_indices = @transform_8, window_bounds = array<i64: 1, 32>}, {transform_indices = @transform_9, window_bounds = array<i64: 1, 16, 16, 32>}]} {
    %c0 = arith.constant 0 : index
    %c0_0 = arith.constant 0 : index
    %c0_1 = arith.constant 0 : index
    %c0_2 = arith.constant 0 : index
    %0 = vector.load %arg1[%c0, %c0_0, %c0_1, %c0_2] : memref<1x16x16x16xbf16, #tpu.memory_space<vmem>>, vector<1x16x16x16xbf16>
    %1 = vector.shape_cast %0 : vector<1x16x16x16xbf16> to vector<16x16x16xbf16>
    %2 = vector.shape_cast %1 : vector<16x16x16xbf16> to vector<256x16xbf16>
    %c0_3 = arith.constant 0 : index
    %c0_4 = arith.constant 0 : index
    %3 = vector.load %arg2[%c0_3, %c0_4] : memref<16x8xbf16, #tpu.memory_space<vmem>>, vector<16x8xbf16>
    %cst = arith.constant dense<0.000000e+00> : vector<256x8xf32>
    %4 = tpu.matmul %2, %3, %cst {dimension_numbers = #tpu.dot_dimension_numbers<[1], [0], [0], [1], [0, 0, 1, 1], [], []>} : vector<256x16xbf16>, vector<16x8xbf16>, vector<256x8xf32> -> vector<256x8xf32>
    %c0_5 = arith.constant 0 : index
    %c0_6 = arith.constant 0 : index
    %5 = vector.load %arg3[%c0_5, %c0_6] : memref<1x8xf32, #tpu.memory_space<vmem>>, vector<1x8xf32>
    %6 = vector.broadcast %5 : vector<1x8xf32> to vector<256x8xf32>
    %7 = arith.addf %4, %6 : vector<256x8xf32>
    %cst_7 = arith.constant 0.000000e+00 : f32
    %8 = vector.broadcast %cst_7 : f32 to vector<256x8xf32>
    %9 = arith.maximumf %7, %8 : vector<256x8xf32>
    %cst_8 = arith.constant 0.000000e+00 : f32
    %10 = vector.broadcast %cst_8 : f32 to vector<18x18x8xf32>
    %c0_9 = arith.constant 0 : index
    %c0_10 = arith.constant 0 : index
    %c0_11 = arith.constant 0 : index
    %11 = vector.load %arg11[%c0_9, %c0_10, %c0_11] : memref<18x18x8xf32, #tpu.memory_space<vmem>>, vector<18x18x8xf32>
    tpu.vector_store %arg11[%c0_9, %c0_10, %c0_11], %10 {strides = array<i32>} : memref<18x18x8xf32, #tpu.memory_space<vmem>>, vector<18x18x8xf32>,
    %12 = vector.shape_cast %9 : vector<256x8xf32> to vector<16x16x8xf32>
    %c1 = arith.constant 1 : index
    %c1_12 = arith.constant 1 : index
    %c0_13 = arith.constant 0 : index
    %13 = vector.load %arg11[%c1, %c1_12, %c0_13] : memref<18x18x8xf32, #tpu.memory_space<vmem>>, vector<16x16x8xf32>
    tpu.vector_store %arg11[%c1, %c1_12, %c0_13], %12 {strides = array<i32>} : memref<18x18x8xf32, #tpu.memory_space<vmem>>, vector<16x16x8xf32>,
    %c0_14 = arith.constant 0 : index
    %c0_15 = arith.constant 0 : index
    %c0_16 = arith.constant 0 : index
    %14 = vector.load %arg11[%c0_14, %c0_15, %c0_16] : memref<18x18x8xf32, #tpu.memory_space<vmem>>, vector<18x18x8xf32>
    %cst_17 = arith.constant 0.000000e+00 : f32
    %15 = vector.broadcast %cst_17 : f32 to vector<256x8xf32>
    %c0_18 = arith.constant 0 : index
    %c0_19 = arith.constant 0 : index
    %16 = vector.load %arg12[%c0_18, %c0_19] : memref<256x8xf32, #tpu.memory_space<vmem>>, vector<256x8xf32>
    tpu.vector_store %arg12[%c0_18, %c0_19], %15 {strides = array<i32>} : memref<256x8xf32, #tpu.memory_space<vmem>>, vector<256x8xf32>,
    %17 = vector.extract_strided_slice %14 {offsets = [0, 0, 0], sizes = [16, 16, 8], strides = [1, 1, 1]} : vector<18x18x8xf32> to vector<16x16x8xf32>
    %18 = vector.shape_cast %17 : vector<16x16x8xf32> to vector<256x8xf32>
    %19 = arith.truncf %18 : vector<256x8xf32> to vector<256x8xbf16>
    %c0_20 = arith.constant 0 : index
    %c0_21 = arith.constant 0 : index
    %20 = vector.load %arg4[%c0_20, %c0_21] : memref<72x8xbf16, #tpu.memory_space<vmem>>, vector<8x8xbf16>
    %c0_22 = arith.constant 0 : index
    %c0_23 = arith.constant 0 : index
    %21 = vector.load %arg12[%c0_22, %c0_23] : memref<256x8xf32, #tpu.memory_space<vmem>>, vector<256x8xf32>
    %cst_24 = arith.constant dense<0.000000e+00> : vector<256x8xf32>
    %22 = tpu.matmul %19, %20, %cst_24 {dimension_numbers = #tpu.dot_dimension_numbers<[1], [0], [0], [1], [0, 0, 1, 1], [], []>} : vector<256x8xbf16>, vector<8x8xbf16>, vector<256x8xf32> -> vector<256x8xf32>
    %23 = arith.addf %21, %22 : vector<256x8xf32>
    %c0_25 = arith.constant 0 : index
    %c0_26 = arith.constant 0 : index
    %24 = vector.load %arg12[%c0_25, %c0_26] : memref<256x8xf32, #tpu.memory_space<vmem>>, vector<256x8xf32>
    tpu.vector_store %arg12[%c0_25, %c0_26], %23 {strides = array<i32>} : memref<256x8xf32, #tpu.memory_space<vmem>>, vector<256x8xf32>,
    %25 = vector.extract_strided_slice %14 {offsets = [0, 1, 0], sizes = [16, 16, 8], strides = [1, 1, 1]} : vector<18x18x8xf32> to vector<16x16x8xf32>
    %26 = vector.shape_cast %25 : vector<16x16x8xf32> to vector<256x8xf32>
    %27 = arith.truncf %26 : vector<256x8xf32> to vector<256x8xbf16>
    %c8 = arith.constant 8 : index
    %c0_27 = arith.constant 0 : index
    %28 = vector.load %arg4[%c8, %c0_27] : memref<72x8xbf16, #tpu.memory_space<vmem>>, vector<8x8xbf16>
    %c0_28 = arith.constant 0 : index
    %c0_29 = arith.constant 0 : index
    %29 = vector.load %arg12[%c0_28, %c0_29] : memref<256x8xf32, #tpu.memory_space<vmem>>, vector<256x8xf32>
    %cst_30 = arith.constant dense<0.000000e+00> : vector<256x8xf32>
    %30 = tpu.matmul %27, %28, %cst_30 {dimension_numbers = #tpu.dot_dimension_numbers<[1], [0], [0], [1], [0, 0, 1, 1], [], []>} : vector<256x8xbf16>, vector<8x8xbf16>, vector<256x8xf32> -> vector<256x8xf32>
    %31 = arith.addf %29, %30 : vector<256x8xf32>
    %c0_31 = arith.constant 0 : index
    %c0_32 = arith.constant 0 : index
    %32 = vector.load %arg12[%c0_31, %c0_32] : memref<256x8xf32, #tpu.memory_space<vmem>>, vector<256x8xf32>
    tpu.vector_store %arg12[%c0_31, %c0_32], %31 {strides = array<i32>} : memref<256x8xf32, #tpu.memory_space<vmem>>, vector<256x8xf32>,
    %33 = vector.extract_strided_slice %14 {offsets = [0, 2, 0], sizes = [16, 16, 8], strides = [1, 1, 1]} : vector<18x18x8xf32> to vector<16x16x8xf32>
    %34 = vector.shape_cast %33 : vector<16x16x8xf32> to vector<256x8xf32>
    %35 = arith.truncf %34 : vector<256x8xf32> to vector<256x8xbf16>
    %c16 = arith.constant 16 : index
    %c0_33 = arith.constant 0 : index
    %36 = vector.load %arg4[%c16, %c0_33] : memref<72x8xbf16, #tpu.memory_space<vmem>>, vector<8x8xbf16>
    %c0_34 = arith.constant 0 : index
    %c0_35 = arith.constant 0 : index
    %37 = vector.load %arg12[%c0_34, %c0_35] : memref<256x8xf32, #tpu.memory_space<vmem>>, vector<256x8xf32>
    %cst_36 = arith.constant dense<0.000000e+00> : vector<256x8xf32>
    %38 = tpu.matmul %35, %36, %cst_36 {dimension_numbers = #tpu.dot_dimension_numbers<[1], [0], [0], [1], [0, 0, 1, 1], [], []>} : vector<256x8xbf16>, vector<8x8xbf16>, vector<256x8xf32> -> vector<256x8xf32>
    %39 = arith.addf %37, %38 : vector<256x8xf32>
    %c0_37 = arith.constant 0 : index
    %c0_38 = arith.constant 0 : index
    %40 = vector.load %arg12[%c0_37, %c0_38] : memref<256x8xf32, #tpu.memory_space<vmem>>, vector<256x8xf32>
    tpu.vector_store %arg12[%c0_37, %c0_38], %39 {strides = array<i32>} : memref<256x8xf32, #tpu.memory_space<vmem>>, vector<256x8xf32>,
    %41 = vector.extract_strided_slice %14 {offsets = [1, 0, 0], sizes = [16, 16, 8], strides = [1, 1, 1]} : vector<18x18x8xf32> to vector<16x16x8xf32>
    %42 = vector.shape_cast %41 : vector<16x16x8xf32> to vector<256x8xf32>
    %43 = arith.truncf %42 : vector<256x8xf32> to vector<256x8xbf16>
    %c24 = arith.constant 24 : index
    %c0_39 = arith.constant 0 : index
    %44 = vector.load %arg4[%c24, %c0_39] : memref<72x8xbf16, #tpu.memory_space<vmem>>, vector<8x8xbf16>
    %c0_40 = arith.constant 0 : index
    %c0_41 = arith.constant 0 : index
    %45 = vector.load %arg12[%c0_40, %c0_41] : memref<256x8xf32, #tpu.memory_space<vmem>>, vector<256x8xf32>
    %cst_42 = arith.constant dense<0.000000e+00> : vector<256x8xf32>
    %46 = tpu.matmul %43, %44, %cst_42 {dimension_numbers = #tpu.dot_dimension_numbers<[1], [0], [0], [1], [0, 0, 1, 1], [], []>} : vector<256x8xbf16>, vector<8x8xbf16>, vector<256x8xf32> -> vector<256x8xf32>
    %47 = arith.addf %45, %46 : vector<256x8xf32>
    %c0_43 = arith.constant 0 : index
    %c0_44 = arith.constant 0 : index
    %48 = vector.load %arg12[%c0_43, %c0_44] : memref<256x8xf32, #tpu.memory_space<vmem>>, vector<256x8xf32>
    tpu.vector_store %arg12[%c0_43, %c0_44], %47 {strides = array<i32>} : memref<256x8xf32, #tpu.memory_space<vmem>>, vector<256x8xf32>,
    %49 = vector.extract_strided_slice %14 {offsets = [1, 1, 0], sizes = [16, 16, 8], strides = [1, 1, 1]} : vector<18x18x8xf32> to vector<16x16x8xf32>
    %50 = vector.shape_cast %49 : vector<16x16x8xf32> to vector<256x8xf32>
    %51 = arith.truncf %50 : vector<256x8xf32> to vector<256x8xbf16>
    %c32 = arith.constant 32 : index
    %c0_45 = arith.constant 0 : index
    %52 = vector.load %arg4[%c32, %c0_45] : memref<72x8xbf16, #tpu.memory_space<vmem>>, vector<8x8xbf16>
    %c0_46 = arith.constant 0 : index
    %c0_47 = arith.constant 0 : index
    %53 = vector.load %arg12[%c0_46, %c0_47] : memref<256x8xf32, #tpu.memory_space<vmem>>, vector<256x8xf32>
    %cst_48 = arith.constant dense<0.000000e+00> : vector<256x8xf32>
    %54 = tpu.matmul %51, %52, %cst_48 {dimension_numbers = #tpu.dot_dimension_numbers<[1], [0], [0], [1], [0, 0, 1, 1], [], []>} : vector<256x8xbf16>, vector<8x8xbf16>, vector<256x8xf32> -> vector<256x8xf32>
    %55 = arith.addf %53, %54 : vector<256x8xf32>
    %c0_49 = arith.constant 0 : index
    %c0_50 = arith.constant 0 : index
    %56 = vector.load %arg12[%c0_49, %c0_50] : memref<256x8xf32, #tpu.memory_space<vmem>>, vector<256x8xf32>
    tpu.vector_store %arg12[%c0_49, %c0_50], %55 {strides = array<i32>} : memref<256x8xf32, #tpu.memory_space<vmem>>, vector<256x8xf32>,
    %57 = vector.extract_strided_slice %14 {offsets = [1, 2, 0], sizes = [16, 16, 8], strides = [1, 1, 1]} : vector<18x18x8xf32> to vector<16x16x8xf32>
    %58 = vector.shape_cast %57 : vector<16x16x8xf32> to vector<256x8xf32>
    %59 = arith.truncf %58 : vector<256x8xf32> to vector<256x8xbf16>
    %c40 = arith.constant 40 : index
    %c0_51 = arith.constant 0 : index
    %60 = vector.load %arg4[%c40, %c0_51] : memref<72x8xbf16, #tpu.memory_space<vmem>>, vector<8x8xbf16>
    %c0_52 = arith.constant 0 : index
    %c0_53 = arith.constant 0 : index
    %61 = vector.load %arg12[%c0_52, %c0_53] : memref<256x8xf32, #tpu.memory_space<vmem>>, vector<256x8xf32>
    %cst_54 = arith.constant dense<0.000000e+00> : vector<256x8xf32>
    %62 = tpu.matmul %59, %60, %cst_54 {dimension_numbers = #tpu.dot_dimension_numbers<[1], [0], [0], [1], [0, 0, 1, 1], [], []>} : vector<256x8xbf16>, vector<8x8xbf16>, vector<256x8xf32> -> vector<256x8xf32>
    %63 = arith.addf %61, %62 : vector<256x8xf32>
    %c0_55 = arith.constant 0 : index
    %c0_56 = arith.constant 0 : index
    %64 = vector.load %arg12[%c0_55, %c0_56] : memref<256x8xf32, #tpu.memory_space<vmem>>, vector<256x8xf32>
    tpu.vector_store %arg12[%c0_55, %c0_56], %63 {strides = array<i32>} : memref<256x8xf32, #tpu.memory_space<vmem>>, vector<256x8xf32>,
    %65 = vector.extract_strided_slice %14 {offsets = [2, 0, 0], sizes = [16, 16, 8], strides = [1, 1, 1]} : vector<18x18x8xf32> to vector<16x16x8xf32>
    %66 = vector.shape_cast %65 : vector<16x16x8xf32> to vector<256x8xf32>
    %67 = arith.truncf %66 : vector<256x8xf32> to vector<256x8xbf16>
    %c48 = arith.constant 48 : index
    %c0_57 = arith.constant 0 : index
    %68 = vector.load %arg4[%c48, %c0_57] : memref<72x8xbf16, #tpu.memory_space<vmem>>, vector<8x8xbf16>
    %c0_58 = arith.constant 0 : index
    %c0_59 = arith.constant 0 : index
    %69 = vector.load %arg12[%c0_58, %c0_59] : memref<256x8xf32, #tpu.memory_space<vmem>>, vector<256x8xf32>
    %cst_60 = arith.constant dense<0.000000e+00> : vector<256x8xf32>
    %70 = tpu.matmul %67, %68, %cst_60 {dimension_numbers = #tpu.dot_dimension_numbers<[1], [0], [0], [1], [0, 0, 1, 1], [], []>} : vector<256x8xbf16>, vector<8x8xbf16>, vector<256x8xf32> -> vector<256x8xf32>
    %71 = arith.addf %69, %70 : vector<256x8xf32>
    %c0_61 = arith.constant 0 : index
    %c0_62 = arith.constant 0 : index
    %72 = vector.load %arg12[%c0_61, %c0_62] : memref<256x8xf32, #tpu.memory_space<vmem>>, vector<256x8xf32>
    tpu.vector_store %arg12[%c0_61, %c0_62], %71 {strides = array<i32>} : memref<256x8xf32, #tpu.memory_space<vmem>>, vector<256x8xf32>,
    %73 = vector.extract_strided_slice %14 {offsets = [2, 1, 0], sizes = [16, 16, 8], strides = [1, 1, 1]} : vector<18x18x8xf32> to vector<16x16x8xf32>
    %74 = vector.shape_cast %73 : vector<16x16x8xf32> to vector<256x8xf32>
    %75 = arith.truncf %74 : vector<256x8xf32> to vector<256x8xbf16>
    %c56 = arith.constant 56 : index
    %c0_63 = arith.constant 0 : index
    %76 = vector.load %arg4[%c56, %c0_63] : memref<72x8xbf16, #tpu.memory_space<vmem>>, vector<8x8xbf16>
    %c0_64 = arith.constant 0 : index
    %c0_65 = arith.constant 0 : index
    %77 = vector.load %arg12[%c0_64, %c0_65] : memref<256x8xf32, #tpu.memory_space<vmem>>, vector<256x8xf32>
    %cst_66 = arith.constant dense<0.000000e+00> : vector<256x8xf32>
    %78 = tpu.matmul %75, %76, %cst_66 {dimension_numbers = #tpu.dot_dimension_numbers<[1], [0], [0], [1], [0, 0, 1, 1], [], []>} : vector<256x8xbf16>, vector<8x8xbf16>, vector<256x8xf32> -> vector<256x8xf32>
    %79 = arith.addf %77, %78 : vector<256x8xf32>
    %c0_67 = arith.constant 0 : index
    %c0_68 = arith.constant 0 : index
    %80 = vector.load %arg12[%c0_67, %c0_68] : memref<256x8xf32, #tpu.memory_space<vmem>>, vector<256x8xf32>
    tpu.vector_store %arg12[%c0_67, %c0_68], %79 {strides = array<i32>} : memref<256x8xf32, #tpu.memory_space<vmem>>, vector<256x8xf32>,
    %81 = vector.extract_strided_slice %14 {offsets = [2, 2, 0], sizes = [16, 16, 8], strides = [1, 1, 1]} : vector<18x18x8xf32> to vector<16x16x8xf32>
    %82 = vector.shape_cast %81 : vector<16x16x8xf32> to vector<256x8xf32>
    %83 = arith.truncf %82 : vector<256x8xf32> to vector<256x8xbf16>
    %c64 = arith.constant 64 : index
    %c0_69 = arith.constant 0 : index
    %84 = vector.load %arg4[%c64, %c0_69] : memref<72x8xbf16, #tpu.memory_space<vmem>>, vector<8x8xbf16>
    %c0_70 = arith.constant 0 : index
    %c0_71 = arith.constant 0 : index
    %85 = vector.load %arg12[%c0_70, %c0_71] : memref<256x8xf32, #tpu.memory_space<vmem>>, vector<256x8xf32>
    %cst_72 = arith.constant dense<0.000000e+00> : vector<256x8xf32>
    %86 = tpu.matmul %83, %84, %cst_72 {dimension_numbers = #tpu.dot_dimension_numbers<[1], [0], [0], [1], [0, 0, 1, 1], [], []>} : vector<256x8xbf16>, vector<8x8xbf16>, vector<256x8xf32> -> vector<256x8xf32>
    %87 = arith.addf %85, %86 : vector<256x8xf32>
    %c0_73 = arith.constant 0 : index
    %c0_74 = arith.constant 0 : index
    %88 = vector.load %arg12[%c0_73, %c0_74] : memref<256x8xf32, #tpu.memory_space<vmem>>, vector<256x8xf32>
    tpu.vector_store %arg12[%c0_73, %c0_74], %87 {strides = array<i32>} : memref<256x8xf32, #tpu.memory_space<vmem>>, vector<256x8xf32>,
    %c0_75 = arith.constant 0 : index
    %c0_76 = arith.constant 0 : index
    %89 = vector.load %arg12[%c0_75, %c0_76] : memref<256x8xf32, #tpu.memory_space<vmem>>, vector<256x8xf32>
    %c0_77 = arith.constant 0 : index
    %c0_78 = arith.constant 0 : index
    %90 = vector.load %arg5[%c0_77, %c0_78] : memref<1x8xf32, #tpu.memory_space<vmem>>, vector<1x8xf32>
    %91 = vector.broadcast %90 : vector<1x8xf32> to vector<256x8xf32>
    %92 = arith.addf %89, %91 : vector<256x8xf32>
    %cst_79 = arith.constant 0.000000e+00 : f32
    %93 = vector.broadcast %cst_79 : f32 to vector<256x8xf32>
    %94 = arith.maximumf %92, %93 : vector<256x8xf32>
    %95 = arith.truncf %94 : vector<256x8xf32> to vector<256x8xbf16>
    %c0_80 = arith.constant 0 : index
    %c0_81 = arith.constant 0 : index
    %96 = vector.load %arg6[%c0_80, %c0_81] : memref<8x32xbf16, #tpu.memory_space<vmem>>, vector<8x32xbf16>
    %cst_82 = arith.constant dense<0.000000e+00> : vector<256x32xf32>
    %97 = tpu.matmul %95, %96, %cst_82 {dimension_numbers = #tpu.dot_dimension_numbers<[1], [0], [0], [1], [0, 0, 1, 1], [], []>} : vector<256x8xbf16>, vector<8x32xbf16>, vector<256x32xf32> -> vector<256x32xf32>
    %c0_83 = arith.constant 0 : index
    %c0_84 = arith.constant 0 : index
    %98 = vector.load %arg7[%c0_83, %c0_84] : memref<1x32xf32, #tpu.memory_space<vmem>>, vector<1x32xf32>
    %99 = vector.broadcast %98 : vector<1x32xf32> to vector<256x32xf32>
    %100 = arith.addf %97, %99 : vector<256x32xf32>
    %c0_85 = arith.constant 0 : index
    %c0_86 = arith.constant 0 : index
    %101 = vector.load %arg8[%c0_85, %c0_86] : memref<16x32xbf16, #tpu.memory_space<vmem>>, vector<16x32xbf16>
    %cst_87 = arith.constant dense<0.000000e+00> : vector<256x32xf32>
    %102 = tpu.matmul %2, %101, %cst_87 {dimension_numbers = #tpu.dot_dimension_numbers<[1], [0], [0], [1], [0, 0, 1, 1], [], []>} : vector<256x16xbf16>, vector<16x32xbf16>, vector<256x32xf32> -> vector<256x32xf32>
    %c0_88 = arith.constant 0 : index
    %c0_89 = arith.constant 0 : index
    %103 = vector.load %arg9[%c0_88, %c0_89] : memref<1x32xf32, #tpu.memory_space<vmem>>, vector<1x32xf32>
    %104 = vector.broadcast %103 : vector<1x32xf32> to vector<256x32xf32>
    %105 = arith.addf %102, %104 : vector<256x32xf32>
    %106 = arith.addf %100, %105 : vector<256x32xf32>
    %cst_90 = arith.constant 0.000000e+00 : f32
    %107 = vector.broadcast %cst_90 : f32 to vector<256x32xf32>
    %108 = arith.maximumf %106, %107 : vector<256x32xf32>
    %109 = vector.shape_cast %108 : vector<256x32xf32> to vector<16x16x32xf32>
    %c0_91 = arith.constant 0 : index
    %c0_92 = arith.constant 0 : index
    %c0_93 = arith.constant 0 : index
    %c0_94 = arith.constant 0 : index
    %110 = vector.load %arg10[%c0_91, %c0_92, %c0_93, %c0_94] : memref<1x16x16x32xf32, #tpu.memory_space<vmem>>, vector<1x16x16x32xf32>
    %111 = vector.shape_cast %110 : vector<1x16x16x32xf32> to vector<16x16x32xf32>
    %112 = vector.shape_cast %109 : vector<16x16x32xf32> to vector<1x16x16x32xf32>
    tpu.vector_store %arg10[%c0_91, %c0_92, %c0_93, %c0_94], %112 {strides = array<i32>} : memref<1x16x16x32xf32, #tpu.memory_space<vmem>>, vector<1x16x16x32xf32>,
    return
  }
  func.func @transform_0(%arg0: i32) -> (i32, i32, i32, i32) {
    %c0_i32 = arith.constant 0 : i32
    %c0_i32_0 = arith.constant 0 : i32
    %c0_i32_1 = arith.constant 0 : i32
    %c0_i32_2 = arith.constant 0 : i32
    return %arg0, %c0_i32, %c0_i32_0, %c0_i32_1 : i32, i32, i32, i32
  }
  func.func @transform_1(%arg0: i32) -> (i32, i32) {
    %c0_i32 = arith.constant 0 : i32
    %c0_i32_0 = arith.constant 0 : i32
    %c0_i32_1 = arith.constant 0 : i32
    return %c0_i32, %c0_i32_0 : i32, i32
  }
  func.func @transform_2(%arg0: i32) -> (i32, i32) {
    %c0_i32 = arith.constant 0 : i32
    %c0_i32_0 = arith.constant 0 : i32
    %c0_i32_1 = arith.constant 0 : i32
    return %c0_i32, %c0_i32_0 : i32, i32
  }
  func.func @transform_3(%arg0: i32) -> (i32, i32) {
    %c0_i32 = arith.constant 0 : i32
    %c0_i32_0 = arith.constant 0 : i32
    %c0_i32_1 = arith.constant 0 : i32
    return %c0_i32, %c0_i32_0 : i32, i32
  }
  func.func @transform_4(%arg0: i32) -> (i32, i32) {
    %c0_i32 = arith.constant 0 : i32
    %c0_i32_0 = arith.constant 0 : i32
    %c0_i32_1 = arith.constant 0 : i32
    return %c0_i32, %c0_i32_0 : i32, i32
  }
  func.func @transform_5(%arg0: i32) -> (i32, i32) {
    %c0_i32 = arith.constant 0 : i32
    %c0_i32_0 = arith.constant 0 : i32
    %c0_i32_1 = arith.constant 0 : i32
    return %c0_i32, %c0_i32_0 : i32, i32
  }
  func.func @transform_6(%arg0: i32) -> (i32, i32) {
    %c0_i32 = arith.constant 0 : i32
    %c0_i32_0 = arith.constant 0 : i32
    %c0_i32_1 = arith.constant 0 : i32
    return %c0_i32, %c0_i32_0 : i32, i32
  }
  func.func @transform_7(%arg0: i32) -> (i32, i32) {
    %c0_i32 = arith.constant 0 : i32
    %c0_i32_0 = arith.constant 0 : i32
    %c0_i32_1 = arith.constant 0 : i32
    return %c0_i32, %c0_i32_0 : i32, i32
  }
  func.func @transform_8(%arg0: i32) -> (i32, i32) {
    %c0_i32 = arith.constant 0 : i32
    %c0_i32_0 = arith.constant 0 : i32
    %c0_i32_1 = arith.constant 0 : i32
    return %c0_i32, %c0_i32_0 : i32, i32
  }
  func.func @transform_9(%arg0: i32) -> (i32, i32, i32, i32) {
    %c0_i32 = arith.constant 0 : i32
    %c0_i32_0 = arith.constant 0 : i32
    %c0_i32_1 = arith.constant 0 : i32
    %c0_i32_2 = arith.constant 0 : i32
    return %arg0, %c0_i32, %c0_i32_0, %c0_i32_1 : i32, i32, i32, i32
  }
}

</mosaic_0001>

<llo_original>
// kernel: bottleneck_forward.1
$region0: #{bottleneck_forward.1}
  #allocation0 [shape = 'u32[]', space=smem, size = 0x4, offset = 0x4, fixed_abs, tag = 'smem constant byte address 0x4 - core index']
  #allocation1 [shape = 'u32[144,128]{1,0:T(1,128)}', space=vmem, size = 0x12000, scoped, tag = 'internal scratch']
  #allocation2 [shape = 'f32[18,18,8]{2,1,0:T(8,128)}', space=vmem, size = 0x36000, scoped, tag = 'scratch operand']
  #allocation3 [shape = 'f32[256,8]{1,0:T(8,128)}', space=vmem, size = 0x20000, scoped, tag = 'scratch operand']
  %s0 = inlined_call_operand.vmem [shape: bf16[2,16,16,16], index: 0, kind: input, shape index: {}]
  %s1 = inlined_call_operand.vmem [shape: bf16[16,8], index: 1, kind: input, shape index: {}]
  %s2 = inlined_call_operand.vmem [shape: f32[1,8], index: 2, kind: input, shape index: {}]
  %s3 = inlined_call_operand.vmem [shape: bf16[72,8], index: 3, kind: input, shape index: {}]
  %s4 = inlined_call_operand.vmem [shape: f32[1,8], index: 4, kind: input, shape index: {}]
  %s5 = inlined_call_operand.vmem [shape: bf16[8,32], index: 5, kind: input, shape index: {}]
  %s6 = inlined_call_operand.vmem [shape: f32[1,32], index: 6, kind: input, shape index: {}]
  %s7 = inlined_call_operand.vmem [shape: bf16[16,32], index: 7, kind: input, shape index: {}]
  %s8 = inlined_call_operand.vmem [shape: f32[1,32], index: 8, kind: input, shape index: {}]
  %s9 = inlined_call_operand.hbm [shape: f32[2,16,16,32], index: 9, kind: output, shape index: {}]
  %s10 = sld [smem:[#allocation0]]
  $region69: #{bottleneck_forward.1} parent=0
    _
  %s12 = ssub.s32 1, %s10
  %s13 = scalar_select 0, %s12, %s10
  $region1: #{bottleneck_forward.1} parent=0
    #allocation4 [shape = 'u8[262144]{0}', space=vmem, size = 0x40000, scoped, tag = 'output window, operand 0']
    #allocation5 [shape = 's32[2]{0}', space=sflag, size = 0x8, scoped, tag = 'scoped memory for bottleneck_forward.1']
    %14 = vsyncpa [#allocation5], 0
    %s15 = scalar_lea.sflag [#allocation5], 1
    %16 = vsyncpa %s15, 0
    loop: start=0, step=1, limit=4
    $region2: #{bottleneck_forward.1} parent=1 // loop_pre_header
      _
    $region3: #{bottleneck_forward.1} parent=1 // loop_header
      %s18 = sphi 0, %s22
      %p19 = scmp.ge.s32.totalorder %s18, 4
      %s28 = sphi 0, %s30
      %s31 = sphi 0, %s28
      %s32 = sphi 0, %s31
      %s48 = sphi 0, %s32
      %s52 = sphi 0, %s52
      %s54 = sphi 0, %s52
      %s55 = sphi 0, %s54
      %s69 = sphi 0, %s55
      %s73 = sphi 0, %s73
      %s75 = sphi 0, %s73
      %s76 = sphi 0, %s75
      %s90 = sphi 0, %s76
      %s94 = sphi 0, %s94
      %s96 = sphi 0, %s94
      %s97 = sphi 0, %s96
      %s111 = sphi 0, %s97
      %s115 = sphi 0, %s115
      %s117 = sphi 0, %s115
      %s118 = sphi 0, %s117
      %s132 = sphi 0, %s118
      %s136 = sphi 0, %s136
      %s138 = sphi 0, %s136
      %s139 = sphi 0, %s138
      %s153 = sphi 0, %s139
      %s157 = sphi 0, %s157
      %s159 = sphi 0, %s157
      %s160 = sphi 0, %s159
      %s174 = sphi 0, %s160
      %s178 = sphi 0, %s178
      %s180 = sphi 0, %s178
      %s181 = sphi 0, %s180
      %s195 = sphi 0, %s181
      %s199 = sphi 0, %s199
      %s201 = sphi 0, %s199
      %s202 = sphi 0, %s201
      %s216 = sphi 0, %s202
      %s222 = sphi 0, %s224
      %s225 = sphi 0, %s222
      %s226 = sphi 0, %s225
      %s242 = sphi 0, %s226
    $region4: #{bottleneck_forward.1} parent=1 // loop_header_branch
      %21 = sbr.rel (%p19) target = $region8
    $region5: #{bottleneck_forward.1} parent=1 // loop_body
      %s23 = ssub.s32 %s18, 1
      %s24 = ssub.s32 %s18, 2
      %s25 = sadd.s32 %s18, 1
      %s26 = ssub.s32 %s18, %s25
      %p27 = scmp.eq.s32.totalorder %s26, 0
      %s29 = sadd.s32 %s28, 1
      %s30 = scalar_select %p27, %s28, %s29
      %p33 = pneg %p27
      %p34 = scmp.eq.s32.totalorder %s18, 1
      %p35 = por %p33, %p34
      %p36 = scmp.ne.s32.totalorder %s28, %s31
      %p37 = scmp.eq.s32.totalorder %s18, 0
      %p38 = por %p36, %p37
      %p39 = scmp.ne.s32.totalorder %s28, %s31
      %p40 = scmp.eq.s32.totalorder %s23, 1
      %p41 = por %p39, %p40
      %p42 = scmp.ne.s32.totalorder %s31, %s32
      %p43 = scmp.eq.s32.totalorder %s23, 0
      %p44 = por %p42, %p43
      %p45 = scmp.ne.s32.totalorder %s31, %s32
      %p46 = scmp.eq.s32.totalorder %s24, 1
      %p47 = por %p45, %p46
      %p49 = scmp.ne.s32.totalorder %s32, %s48
      %p50 = scmp.eq.s32.totalorder %s24, 0
      %p51 = por %p49, %p50
      %s53 = sadd.s32 %s52, 1
      %p56 = scmp.eq.s32.totalorder %s18, 1
      %p57 = scmp.ne.s32.totalorder %s52, %s54
      %p58 = scmp.eq.s32.totalorder %s18, 0
      %p59 = por %p57, %p58
      %p60 = scmp.ne.s32.totalorder %s52, %s54
      %p61 = scmp.eq.s32.totalorder %s23, 1
      %p62 = por %p60, %p61
      %p63 = scmp.ne.s32.totalorder %s54, %s55
      %p64 = scmp.eq.s32.totalorder %s23, 0
      %p65 = por %p63, %p64
      %p66 = scmp.ne.s32.totalorder %s54, %s55
      %p67 = scmp.eq.s32.totalorder %s24, 1
      %p68 = por %p66, %p67
      %p70 = scmp.ne.s32.totalorder %s55, %s69
      %p71 = scmp.eq.s32.totalorder %s24, 0
      %p72 = por %p70, %p71
      %s74 = sadd.s32 %s73, 1
      %p77 = scmp.eq.s32.totalorder %s18, 1
      %p78 = scmp.ne.s32.totalorder %s73, %s75
      %p79 = scmp.eq.s32.totalorder %s18, 0
      %p80 = por %p78, %p79
      %p81 = scmp.ne.s32.totalorder %s73, %s75
      %p82 = scmp.eq.s32.totalorder %s23, 1
      %p83 = por %p81, %p82
      %p84 = scmp.ne.s32.totalorder %s75, %s76
      %p85 = scmp.eq.s32.totalorder %s23, 0
      %p86 = por %p84, %p85
      %p87 = scmp.ne.s32.totalorder %s75, %s76
      %p88 = scmp.eq.s32.totalorder %s24, 1
      %p89 = por %p87, %p88
      %p91 = scmp.ne.s32.totalorder %s76, %s90
      %p92 = scmp.eq.s32.totalorder %s24, 0
      %p93 = por %p91, %p92
      %s95 = sadd.s32 %s94, 1
      %p98 = scmp.eq.s32.totalorder %s18, 1
      %p99 = scmp.ne.s32.totalorder %s94, %s96
      %p100 = scmp.eq.s32.totalorder %s18, 0
      %p101 = por %p99, %p100
      %p102 = scmp.ne.s32.totalorder %s94, %s96
      %p103 = scmp.eq.s32.totalorder %s23, 1
      %p104 = por %p102, %p103
      %p105 = scmp.ne.s32.totalorder %s96, %s97
      %p106 = scmp.eq.s32.totalorder %s23, 0
      %p107 = por %p105, %p106
      %p108 = scmp.ne.s32.totalorder %s96, %s97
      %p109 = scmp.eq.s32.totalorder %s24, 1
      %p110 = por %p108, %p109
      %p112 = scmp.ne.s32.totalorder %s97, %s111
      %p113 = scmp.eq.s32.totalorder %s24, 0
      %p114 = por %p112, %p113
      %s116 = sadd.s32 %s115, 1
      %p119 = scmp.eq.s32.totalorder %s18, 1
      %p120 = scmp.ne.s32.totalorder %s115, %s117
      %p121 = scmp.eq.s32.totalorder %s18, 0
      %p122 = por %p120, %p121
      %p123 = scmp.ne.s32.totalorder %s115, %s117
      %p124 = scmp.eq.s32.totalorder %s23, 1
      %p125 = por %p123, %p124
      %p126 = scmp.ne.s32.totalorder %s117, %s118
      %p127 = scmp.eq.s32.totalorder %s23, 0
      %p128 = por %p126, %p127
      %p129 = scmp.ne.s32.totalorder %s117, %s118
      %p130 = scmp.eq.s32.totalorder %s24, 1
      %p131 = por %p129, %p130
      %p133 = scmp.ne.s32.totalorder %s118, %s132
      %p134 = scmp.eq.s32.totalorder %s24, 0
      %p135 = por %p133, %p134
      %s137 = sadd.s32 %s136, 1
      %p140 = scmp.eq.s32.totalorder %s18, 1
      %p141 = scmp.ne.s32.totalorder %s136, %s138
      %p142 = scmp.eq.s32.totalorder %s18, 0
      %p143 = por %p141, %p142
      %p144 = scmp.ne.s32.totalorder %s136, %s138
      %p145 = scmp.eq.s32.totalorder %s23, 1
      %p146 = por %p144, %p145
      %p147 = scmp.ne.s32.totalorder %s138, %s139
      %p148 = scmp.eq.s32.totalorder %s23, 0
      %p149 = por %p147, %p148
      %p150 = scmp.ne.s32.totalorder %s138, %s139
      %p151 = scmp.eq.s32.totalorder %s24, 1
      %p152 = por %p150, %p151
      %p154 = scmp.ne.s32.totalorder %s139, %s153
      %p155 = scmp.eq.s32.totalorder %s24, 0
      %p156 = por %p154, %p155
      %s158 = sadd.s32 %s157, 1
      %p161 = scmp.eq.s32.totalorder %s18, 1
      %p162 = scmp.ne.s32.totalorder %s157, %s159
      %p163 = scmp.eq.s32.totalorder %s18, 0
      %p164 = por %p162, %p163
      %p165 = scmp.ne.s32.totalorder %s157, %s159
      %p166 = scmp.eq.s32.totalorder %s23, 1
      %p167 = por %p165, %p166
      %p168 = scmp.ne.s32.totalorder %s159, %s160
      %p169 = scmp.eq.s32.totalorder %s23, 0
      %p170 = por %p168, %p169
      %p171 = scmp.ne.s32.totalorder %s159, %s160
      %p172 = scmp.eq.s32.totalorder %s24, 1
      %p173 = por %p171, %p172
      %p175 = scmp.ne.s32.totalorder %s160, %s174
      %p176 = scmp.eq.s32.totalorder %s24, 0
      %p177 = por %p175, %p176
      %s179 = sadd.s32 %s178, 1
      %p182 = scmp.eq.s32.totalorder %s18, 1
      %p183 = scmp.ne.s32.totalorder %s178, %s180
      %p184 = scmp.eq.s32.totalorder %s18, 0
      %p185 = por %p183, %p184
      %p186 = scmp.ne.s32.totalorder %s178, %s180
      %p187 = scmp.eq.s32.totalorder %s23, 1
      %p188 = por %p186, %p187
      %p189 = scmp.ne.s32.totalorder %s180, %s181
      %p190 = scmp.eq.s32.totalorder %s23, 0
      %p191 = por %p189, %p190
      %p192 = scmp.ne.s32.totalorder %s180, %s181
      %p193 = scmp.eq.s32.totalorder %s24, 1
      %p194 = por %p192, %p193
      %p196 = scmp.ne.s32.totalorder %s181, %s195
      %p197 = scmp.eq.s32.totalorder %s24, 0
      %p198 = por %p196, %p197
      %s200 = sadd.s32 %s199, 1
      %p203 = scmp.eq.s32.totalorder %s18, 1
      %p204 = scmp.ne.s32.totalorder %s199, %s201
      %p205 = scmp.eq.s32.totalorder %s18, 0
      %p206 = por %p204, %p205
      %p207 = scmp.ne.s32.totalorder %s199, %s201
      %p208 = scmp.eq.s32.totalorder %s23, 1
      %p209 = por %p207, %p208
      %p210 = scmp.ne.s32.totalorder %s201, %s202
      %p211 = scmp.eq.s32.totalorder %s23, 0
      %p212 = por %p210, %p211
      %p213 = scmp.ne.s32.totalorder %s201, %s202
      %p214 = scmp.eq.s32.totalorder %s24, 1
      %p215 = por %p213, %p214
      %p217 = scmp.ne.s32.totalorder %s202, %s216
      %p218 = scmp.eq.s32.totalorder %s24, 0
      %p219 = por %p217, %p218
      %s220 = ssub.s32 %s18, %s25
      %p221 = scmp.eq.s32.totalorder %s220, 0
      %s223 = sadd.s32 %s222, 1
      %s224 = scalar_select %p221, %s222, %s223
      %p227 = pneg %p221
      %p228 = scmp.eq.s32.totalorder %s18, 1
      %p229 = por %p227, %p228
      %p230 = scmp.ne.s32.totalorder %s222, %s225
      %p231 = scmp.eq.s32.totalorder %s18, 0
      %p232 = por %p230, %p231
      %p233 = scmp.ne.s32.totalorder %s222, %s225
      %p234 = scmp.eq.s32.totalorder %s23, 1
      %p235 = por %p233, %p234
      %p236 = scmp.ne.s32.totalorder %s225, %s226
      %p237 = scmp.eq.s32.totalorder %s23, 0
      %p238 = por %p236, %p237
      %p239 = scmp.ne.s32.totalorder %s225, %s226
      %p240 = scmp.eq.s32.totalorder %s24, 1
      %p241 = por %p239, %p240
      %p243 = scmp.ne.s32.totalorder %s226, %s242
      %p244 = scmp.eq.s32.totalorder %s24, 0
      %p245 = por %p243, %p244
      %p246 = scmp.le.s32.totalorder 1, %s18
      %p247 = scmp.lt.s32.totalorder %s18, 3
      %p248 = pnand %p246, %p247
      %p249 = pneg %p248
      // Predicated region
      $region9: #{bottleneck_forward.1} parent=5 // pred_check
        _
      $region10: #{bottleneck_forward.1} parent=5 // pred_check_branch
        %251 = sbr.rel (%p248) target = $region12
      $region11: #{bottleneck_forward.1} parent=5 // pred_region
        %s252 = ssub.s32 %s18, 1
        // Predicated region
        $region13: #{bottleneck_forward.1} parent=11 // pred_check
          %p253 = pneg %p65
        $region14: #{bottleneck_forward.1} parent=11 // pred_check_branch
          %255 = sbr.rel (%p253) target = $region16
        $region15: #{bottleneck_forward.1} parent=11 // pred_region
          _
        $region16: #{bottleneck_forward.1} parent=11 // pred_fallthru
          _
        // Predicated region
        $region17: #{bottleneck_forward.1} parent=11 // pred_check
          %p256 = pneg %p86
        $region18: #{bottleneck_forward.1} parent=11 // pred_check_branch
          %258 = sbr.rel (%p256) target = $region20
        $region19: #{bottleneck_forward.1} parent=11 // pred_region
          _
        $region20: #{bottleneck_forward.1} parent=11 // pred_fallthru
          _
        // Predicated region
        $region21: #{bottleneck_forward.1} parent=11 // pred_check
          %p259 = pneg %p107
        $region22: #{bottleneck_forward.1} parent=11 // pred_check_branch
          %261 = sbr.rel (%p259) target = $region24
        $region23: #{bottleneck_forward.1} parent=11 // pred_region
          _
        $region24: #{bottleneck_forward.1} parent=11 // pred_fallthru
          _
        // Predicated region
        $region25: #{bottleneck_forward.1} parent=11 // pred_check
          %p262 = pneg %p128
        $region26: #{bottleneck_forward.1} parent=11 // pred_check_branch
          %264 = sbr.rel (%p262) target = $region28
        $region27: #{bottleneck_forward.1} parent=11 // pred_region
          _
        $region28: #{bottleneck_forward.1} parent=11 // pred_fallthru
          _
        // Predicated region
        $region29: #{bottleneck_forward.1} parent=11 // pred_check
          %p265 = pneg %p149
        $region30: #{bottleneck_forward.1} parent=11 // pred_check_branch
          %267 = sbr.rel (%p265) target = $region32
        $region31: #{bottleneck_forward.1} parent=11 // pred_region
          _
        $region32: #{bottleneck_forward.1} parent=11 // pred_fallthru
          _
        // Predicated region
        $region33: #{bottleneck_forward.1} parent=11 // pred_check
          %p268 = pneg %p170
        $region34: #{bottleneck_forward.1} parent=11 // pred_check_branch
          %270 = sbr.rel (%p268) target = $region36
        $region35: #{bottleneck_forward.1} parent=11 // pred_region
          _
        $region36: #{bottleneck_forward.1} parent=11 // pred_fallthru
          _
        // Predicated region
        $region37: #{bottleneck_forward.1} parent=11 // pred_check
          %p271 = pneg %p191
        $region38: #{bottleneck_forward.1} parent=11 // pred_check_branch
          %273 = sbr.rel (%p271) target = $region40
        $region39: #{bottleneck_forward.1} parent=11 // pred_region
          _
        $region40: #{bottleneck_forward.1} parent=11 // pred_fallthru
          _
        // Predicated region
        $region41: #{bottleneck_forward.1} parent=11 // pred_check
          %p274 = pneg %p212
        $region42: #{bottleneck_forward.1} parent=11 // pred_check_branch
          %276 = sbr.rel (%p274) target = $region44
        $region43: #{bottleneck_forward.1} parent=11 // pred_region
          _
        $region44: #{bottleneck_forward.1} parent=11 // pred_fallthru
          _
      $region12: #{bottleneck_forward.1} parent=5 // pred_fallthru
        _
      %p277 = scmp.lt.s32.totalorder %s18, 2
      // Predicated region
      $region45: #{bottleneck_forward.1} parent=5 // pred_check
        %p278 = pneg %p277
      $region46: #{bottleneck_forward.1} parent=5 // pred_check_branch
        %280 = sbr.rel (%p278) target = $region48
      $region47: #{bottleneck_forward.1} parent=5 // pred_region
        // Predicated region
        $region49: #{bottleneck_forward.1} parent=47 // pred_check
          %p281 = pneg %p38
        $region50: #{bottleneck_forward.1} parent=47 // pred_check_branch
          %283 = sbr.rel (%p281) target = $region52
        $region51: #{bottleneck_forward.1} parent=47 // pred_region
          %p284 = scmp.lt.s32.totalorder %s18, 1
          %s285 = scalar_select %p284, %s18, 1
          %s286 = smul.addr %s285, 32
          %s287 = smul.addr %s286, 4
          %s288 = scalar_lea.vmem %s0, %s287
        $region52: #{bottleneck_forward.1} parent=47 // pred_fallthru
          _
      $region48: #{bottleneck_forward.1} parent=5 // pred_fallthru
        _
      %p289 = scmp.le.s32.totalorder 1, %s18
      %p290 = scmp.lt.s32.totalorder %s18, 3
      %p291 = pnand %p289, %p290
      %p292 = pneg %p291
      // Predicated region
      $region53: #{bottleneck_forward.1} parent=5 // pred_check
        _
      $region54: #{bottleneck_forward.1} parent=5 // pred_check_branch
        %294 = sbr.rel (%p291) target = $region56
      $region55: #{bottleneck_forward.1} parent=5 // pred_region
        %s295 = ssub.s32 %s18, 1
        %p296 = scmp.lt.s32.totalorder %s23, 1
        %s297 = scalar_select %p296, %s23, 1
        %s298 = smul.addr %s297, 32
        %s299 = smul.addr %s298, 4
        %s300 = scalar_lea.vmem %s0, %s299
        %p301 = pneg %p44
        %p302 = pneg %p41
        %p303 = pneg %p65
        %p304 = pneg %p62
        %p305 = pneg %p86
        %p306 = pneg %p83
        %p307 = pneg %p107
        %p308 = pneg %p104
        %p309 = pneg %p128
        %p310 = pneg %p125
        %p311 = pneg %p149
        %p312 = pneg %p146
        %p313 = pneg %p170
        %p314 = pneg %p167
        %p315 = pneg %p191
        %p316 = pneg %p188
        %p317 = pneg %p212
        %p318 = pneg %p209
        %p319 = pneg %p238
        %p320 = pneg %p235
        %s321 = sand.u32 %s225, 1
        %s322 = scalar_lea.sflag [#allocation5], %s321
        %s323 = sand.u32 %s225, 1
        %s324 = smul.addr %s323, 256
        %s325 = scalar_lea.vmem [#allocation4], %s324
        %p326 = scmp.lt.s32.totalorder %s23, 1
        %s327 = scalar_select %p326, %s23, 1
        %s328 = smul.addr %s327, 32
        %s329 = smul.addr %s328, 4
        %s330 = scalar_lea.vmem %s0, %s329
        %v332 = vld [vmem:[%s330] sm:$0xf]
        %v333 = vld [vmem:[%s330 + $0x4] sm:$0xf]
        %v334 = vld [vmem:[%s330 + $0x8] sm:$0xf]
        %v335 = vld [vmem:[%s330 + $0xc] sm:$0xf]
        %v336 = vld [vmem:[%s330 + $0x10] sm:$0xf]
        %v337 = vld [vmem:[%s330 + $0x14] sm:$0xf]
        %v338 = vld [vmem:[%s330 + $0x18] sm:$0xf]
        %v339 = vld [vmem:[%s330 + $0x1c] sm:$0xf]
        %v340 = vld [vmem:[%s330 + $0x20] sm:$0xf]
        %v341 = vld [vmem:[%s330 + $0x24] sm:$0xf]
        %v342 = vld [vmem:[%s330 + $0x28] sm:$0xf]
        %v343 = vld [vmem:[%s330 + $0x2c] sm:$0xf]
        %v344 = vld [vmem:[%s330 + $0x30] sm:$0xf]
        %v345 = vld [vmem:[%s330 + $0x34] sm:$0xf]
        %v346 = vld [vmem:[%s330 + $0x38] sm:$0xf]
        %v347 = vld [vmem:[%s330 + $0x3c] sm:$0xf]
        %v348 = vld [vmem:[%s330 + $0x40] sm:$0xf]
        %v349 = vld [vmem:[%s330 + $0x44] sm:$0xf]
        %v350 = vld [vmem:[%s330 + $0x48] sm:$0xf]
        %v351 = vld [vmem:[%s330 + $0x4c] sm:$0xf]
        %v352 = vld [vmem:[%s330 + $0x50] sm:$0xf]
        %v353 = vld [vmem:[%s330 + $0x54] sm:$0xf]
        %v354 = vld [vmem:[%s330 + $0x58] sm:$0xf]
        %v355 = vld [vmem:[%s330 + $0x5c] sm:$0xf]
        %v356 = vld [vmem:[%s330 + $0x60] sm:$0xf]
        %v357 = vld [vmem:[%s330 + $0x64] sm:$0xf]
        %v358 = vld [vmem:[%s330 + $0x68] sm:$0xf]
        %v359 = vld [vmem:[%s330 + $0x6c] sm:$0xf]
        %v360 = vld [vmem:[%s330 + $0x70] sm:$0xf]
        %v361 = vld [vmem:[%s330 + $0x74] sm:$0xf]
        %v362 = vld [vmem:[%s330 + $0x78] sm:$0xf]
        %v363 = vld [vmem:[%s330 + $0x7c] sm:$0xf]
        %v364 = vld [vmem:[%s1] sm:$0xf]
        %v365 = vld [vmem:[%s1 + $0x4] sm:$0xf]
        %v366 = vld [vmem:[%s2] sm:$0x1]
        %v368 = vlaneseq
        %v369 = vshrl.u32 %v368, 7
        %v370 = vsub.s32 0, %v369
        %v371 = vrot.slane %v366, %v370
        %v405 = vunpack.c.l.b16 %v332
        %v406 = vunpack.c.l.b16 %v333
        %v407 = vunpack.c.l.b16 %v334
        %v408 = vunpack.c.l.b16 %v335
        %v409 = vunpack.c.l.b16 %v336
        %v410 = vunpack.c.l.b16 %v337
        %v411 = vunpack.c.l.b16 %v338
        %v412 = vunpack.c.l.b16 %v339
        %v413 = vunpack.c.l.b16 %v340
        %v414 = vunpack.c.l.b16 %v341
        %v415 = vunpack.c.l.b16 %v342
        %v416 = vunpack.c.l.b16 %v343
        %v417 = vunpack.c.l.b16 %v344
        %v418 = vunpack.c.l.b16 %v345
        %v419 = vunpack.c.l.b16 %v346
        %v420 = vunpack.c.l.b16 %v347
        %v421 = vunpack.c.l.b16 %v348
        %v422 = vunpack.c.l.b16 %v349
        %v423 = vunpack.c.l.b16 %v350
        %v424 = vunpack.c.l.b16 %v351
        %v425 = vunpack.c.l.b16 %v352
        %v426 = vunpack.c.l.b16 %v353
        %v427 = vunpack.c.l.b16 %v354
        %v428 = vunpack.c.l.b16 %v355
        %v429 = vunpack.c.l.b16 %v356
        %v430 = vunpack.c.l.b16 %v357
        %v431 = vunpack.c.l.b16 %v358
        %v432 = vunpack.c.l.b16 %v359
        %v433 = vunpack.c.l.b16 %v360
        %v434 = vunpack.c.l.b16 %v361
        %v435 = vunpack.c.l.b16 %v362
        %v436 = vunpack.c.l.b16 %v363
        %v437 = vpack.c.b16 %v406, %v405
        %v438 = vpack.c.b16 %v408, %v407
        %v439 = vpack.c.b16 %v410, %v409
        %v440 = vpack.c.b16 %v412, %v411
        %v441 = vpack.c.b16 %v414, %v413
        %v442 = vpack.c.b16 %v416, %v415
        %v443 = vpack.c.b16 %v418, %v417
        %v444 = vpack.c.b16 %v420, %v419
        %v445 = vpack.c.b16 %v422, %v421
        %v446 = vpack.c.b16 %v424, %v423
        %v447 = vpack.c.b16 %v426, %v425
        %v448 = vpack.c.b16 %v428, %v427
        %v449 = vpack.c.b16 %v430, %v429
        %v450 = vpack.c.b16 %v432, %v431
        %v451 = vpack.c.b16 %v434, %v433
        %v452 = vpack.c.b16 %v436, %v435
        %v455 = vunpack.c.l.b16 %v364
        %v456 = vunpack.c.l.b16 %v365
        %v457 = vpack.c.b16 %v456, %v455
        %vm459 = vcmask 130048
        %v461 = vsel %vm459, %v437, 0
        %v464 = vsel %vm459, %v438, 0
        %v467 = vsel %vm459, %v439, 0
        %v470 = vsel %vm459, %v440, 0
        %v473 = vsel %vm459, %v441, 0
        %v476 = vsel %vm459, %v442, 0
        %v479 = vsel %vm459, %v443, 0
        %v482 = vsel %vm459, %v444, 0
        %v485 = vsel %vm459, %v445, 0
        %v488 = vsel %vm459, %v446, 0
        %v491 = vsel %vm459, %v447, 0
        %v494 = vsel %vm459, %v448, 0
        %v497 = vsel %vm459, %v449, 0
        %v500 = vsel %vm459, %v450, 0
        %v503 = vsel %vm459, %v451, 0
        %v506 = vsel %vm459, %v452, 0
        %508 = vmatprep.subr.bf16.mxu0 0
        %509 = vmatpush1.bf16.msra.mxu0 %v457
        %510 = vmatprep.subr.bf16.mxu0 0
        %511 = vmatpush1.bf16.msra.mxu0 0
        %512 = vmatprep.subr.bf16.mxu0 0
        %513 = vmatpush1.bf16.msra.mxu0 0
        %514 = vmatprep.subr.bf16.mxu0 0
        %515 = vmatpush1.bf16.msra.mxu0 0
        %516 = vmatprep.subr.bf16.mxu0 0
        %517 = vmatpush1.bf16.msra.mxu0 0
        %518 = vmatprep.subr.bf16.mxu0 0
        %519 = vmatpush1.bf16.msra.mxu0 0
        %520 = vmatprep.subr.bf16.mxu0 0
        %521 = vmatpush1.bf16.msra.mxu0 0
        %522 = vmatprep.subr.bf16.mxu0 0
        %523 = vmatpush1.bf16.msra.mxu0 0
        %524 = vmatprep.subr.bf16.mxu0 0
        %525 = vmatpush1.bf16.msra.mxu0 0
        %526 = vmatprep.subr.bf16.mxu0 0
        %527 = vmatpush1.bf16.msra.mxu0 0
        %528 = vmatprep.subr.bf16.mxu0 0
        %529 = vmatpush1.bf16.msra.mxu0 0
        %530 = vmatprep.subr.bf16.mxu0 0
        %531 = vmatpush1.bf16.msra.mxu0 0
        %532 = vmatprep.subr.bf16.mxu0 0
        %533 = vmatpush1.bf16.msra.mxu0 0
        %534 = vmatprep.subr.bf16.mxu0 0
        %535 = vmatpush1.bf16.msra.mxu0 0
        %536 = vmatprep.subr.bf16.mxu0 0
        %537 = vmatpush1.bf16.msra.mxu0 0
        %538 = vmatprep.subr.bf16.mxu0 0
        %539 = vmatpush1.bf16.msra.mxu0 0
        %540 = vmatprep.mubr.bf16.mxu0 0
        %541 = vmatmul.mubr.bf16.gmra.mrb[0].mxu0 %v461
        %v542 = vpop.f32.mrb[0].mxu0
        %v543 = vadd.f32 %v371, %v542
        %v544 = vpop.f32.mrb[0].mxu0
        %v545 = vpop.f32.mrb[0].mxu0
        %v546 = vadd.f32 %v371, %v545
        %v547 = vpop.f32.mrb[0].mxu0
        %548 = vmatprep.mubr.bf16.mxu0 0
        %549 = vmatmul.mubr.bf16.gmra.mrb[0].mxu0 %v464
        %v550 = vpop.f32.mrb[0].mxu0
        %v551 = vadd.f32 %v371, %v550
        %v552 = vpop.f32.mrb[0].mxu0
        %v553 = vpop.f32.mrb[0].mxu0
        %v554 = vadd.f32 %v371, %v553
        %v555 = vpop.f32.mrb[0].mxu0
        %556 = vmatprep.mubr.bf16.mxu0 0
        %557 = vmatmul.mubr.bf16.gmra.mrb[0].mxu0 %v467
        %v558 = vpop.f32.mrb[0].mxu0
        %v559 = vadd.f32 %v371, %v558
        %v560 = vpop.f32.mrb[0].mxu0
        %v561 = vpop.f32.mrb[0].mxu0
        %v562 = vadd.f32 %v371, %v561
        %v563 = vpop.f32.mrb[0].mxu0
        %564 = vmatprep.mubr.bf16.mxu0 0
        %565 = vmatmul.mubr.bf16.gmra.mrb[0].mxu0 %v470
        %v566 = vpop.f32.mrb[0].mxu0
        %v567 = vadd.f32 %v371, %v566
        %v568 = vpop.f32.mrb[0].mxu0
        %v569 = vpop.f32.mrb[0].mxu0
        %v570 = vadd.f32 %v371, %v569
        %v571 = vpop.f32.mrb[0].mxu0
        %572 = vmatprep.mubr.bf16.mxu0 0
        %573 = vmatmul.mubr.bf16.gmra.mrb[0].mxu0 %v473
        %v574 = vpop.f32.mrb[0].mxu0
        %v575 = vadd.f32 %v371, %v574
        %v576 = vpop.f32.mrb[0].mxu0
        %v577 = vpop.f32.mrb[0].mxu0
        %v578 = vadd.f32 %v371, %v577
        %v579 = vpop.f32.mrb[0].mxu0
        %580 = vmatprep.mubr.bf16.mxu0 0
        %581 = vmatmul.mubr.bf16.gmra.mrb[0].mxu0 %v476
        %v582 = vpop.f32.mrb[0].mxu0
        %v583 = vadd.f32 %v371, %v582
        %v584 = vpop.f32.mrb[0].mxu0
        %v585 = vpop.f32.mrb[0].mxu0
        %v586 = vadd.f32 %v371, %v585
        %v587 = vpop.f32.mrb[0].mxu0
        %588 = vmatprep.mubr.bf16.mxu0 0
        %589 = vmatmul.mubr.bf16.gmra.mrb[0].mxu0 %v479
        %v590 = vpop.f32.mrb[0].mxu0
        %v591 = vadd.f32 %v371, %v590
        %v592 = vpop.f32.mrb[0].mxu0
        %v593 = vpop.f32.mrb[0].mxu0
        %v594 = vadd.f32 %v371, %v593
        %v595 = vpop.f32.mrb[0].mxu0
        %596 = vmatprep.mubr.bf16.mxu0 0
        %597 = vmatmul.mubr.bf16.gmra.mrb[0].mxu0 %v482
        %v598 = vpop.f32.mrb[0].mxu0
        %v599 = vadd.f32 %v371, %v598
        %v600 = vpop.f32.mrb[0].mxu0
        %v601 = vpop.f32.mrb[0].mxu0
        %v602 = vadd.f32 %v371, %v601
        %v603 = vpop.f32.mrb[0].mxu0
        %604 = vmatprep.mubr.bf16.mxu0 0
        %605 = vmatmul.mubr.bf16.gmra.mrb[0].mxu0 %v485
        %v606 = vpop.f32.mrb[0].mxu0
        %v607 = vadd.f32 %v371, %v606
        %v608 = vpop.f32.mrb[0].mxu0
        %v609 = vpop.f32.mrb[0].mxu0
        %v610 = vadd.f32 %v371, %v609
        %v611 = vpop.f32.mrb[0].mxu0
        %612 = vmatprep.mubr.bf16.mxu0 0
        %613 = vmatmul.mubr.bf16.gmra.mrb[0].mxu0 %v488
        %v614 = vpop.f32.mrb[0].mxu0
        %v615 = vadd.f32 %v371, %v614
        %v616 = vpop.f32.mrb[0].mxu0
        %v617 = vpop.f32.mrb[0].mxu0
        %v618 = vadd.f32 %v371, %v617
        %v619 = vpop.f32.mrb[0].mxu0
        %620 = vmatprep.mubr.bf16.mxu0 0
        %621 = vmatmul.mubr.bf16.gmra.mrb[0].mxu0 %v491
        %v622 = vpop.f32.mrb[0].mxu0
        %v623 = vadd.f32 %v371, %v622
        %v624 = vpop.f32.mrb[0].mxu0
        %v625 = vpop.f32.mrb[0].mxu0
        %v626 = vadd.f32 %v371, %v625
        %v627 = vpop.f32.mrb[0].mxu0
        %628 = vmatprep.mubr.bf16.mxu0 0
        %629 = vmatmul.mubr.bf16.gmra.mrb[0].mxu0 %v494
        %v630 = vpop.f32.mrb[0].mxu0
        %v631 = vadd.f32 %v371, %v630
        %v632 = vpop.f32.mrb[0].mxu0
        %v633 = vpop.f32.mrb[0].mxu0
        %v634 = vadd.f32 %v371, %v633
        %v635 = vpop.f32.mrb[0].mxu0
        %636 = vmatprep.mubr.bf16.mxu0 0
        %637 = vmatmul.mubr.bf16.gmra.mrb[0].mxu0 %v497
        %v638 = vpop.f32.mrb[0].mxu0
        %v639 = vadd.f32 %v371, %v638
        %v640 = vpop.f32.mrb[0].mxu0
        %v641 = vpop.f32.mrb[0].mxu0
        %v642 = vadd.f32 %v371, %v641
        %v643 = vpop.f32.mrb[0].mxu0
        %644 = vmatprep.mubr.bf16.mxu0 0
        %645 = vmatmul.mubr.bf16.gmra.mrb[0].mxu0 %v500
        %v646 = vpop.f32.mrb[0].mxu0
        %v647 = vadd.f32 %v371, %v646
        %v648 = vpop.f32.mrb[0].mxu0
        %v649 = vpop.f32.mrb[0].mxu0
        %v650 = vadd.f32 %v371, %v649
        %v651 = vpop.f32.mrb[0].mxu0
        %652 = vmatprep.mubr.bf16.mxu0 0
        %653 = vmatmul.mubr.bf16.gmra.mrb[0].mxu0 %v503
        %v654 = vpop.f32.mrb[0].mxu0
        %v655 = vadd.f32 %v371, %v654
        %v656 = vpop.f32.mrb[0].mxu0
        %v657 = vpop.f32.mrb[0].mxu0
        %v658 = vadd.f32 %v371, %v657
        %v659 = vpop.f32.mrb[0].mxu0
        %660 = vmatprep.mubr.bf16.mxu0 0
        %661 = vmatmul.mubr.bf16.gmra.mrb[0].mxu0 %v506
        %v662 = vpop.f32.mrb[0].mxu0
        %v663 = vadd.f32 %v371, %v662
        %v664 = vpop.f32.mrb[0].mxu0
        %v665 = vpop.f32.mrb[0].mxu0
        %v666 = vadd.f32 %v371, %v665
        %v667 = vpop.f32.mrb[0].mxu0
        %668 = vdwg.mxu0
        %v669 = vmax.f32 %v543, 0.0
        %v670 = vmax.f32 %v546, 0.0
        %v671 = vmax.f32 %v551, 0.0
        %v672 = vmax.f32 %v554, 0.0
        %v673 = vmax.f32 %v559, 0.0
        %v674 = vmax.f32 %v562, 0.0
        %v675 = vmax.f32 %v567, 0.0
        %v676 = vmax.f32 %v570, 0.0
        %v677 = vmax.f32 %v575, 0.0
        %v678 = vmax.f32 %v578, 0.0
        %v679 = vmax.f32 %v583, 0.0
        %v680 = vmax.f32 %v586, 0.0
        %v681 = vmax.f32 %v591, 0.0
        %v682 = vmax.f32 %v594, 0.0
        %v683 = vmax.f32 %v599, 0.0
        %v684 = vmax.f32 %v602, 0.0
        %v685 = vmax.f32 %v607, 0.0
        %v686 = vmax.f32 %v610, 0.0
        %v687 = vmax.f32 %v615, 0.0
        %v688 = vmax.f32 %v618, 0.0
        %v689 = vmax.f32 %v623, 0.0
        %v690 = vmax.f32 %v626, 0.0
        %v691 = vmax.f32 %v631, 0.0
        %v692 = vmax.f32 %v634, 0.0
        %v693 = vmax.f32 %v639, 0.0
        %v694 = vmax.f32 %v642, 0.0
        %v695 = vmax.f32 %v647, 0.0
        %v696 = vmax.f32 %v650, 0.0
        %v697 = vmax.f32 %v655, 0.0
        %v698 = vmax.f32 %v658, 0.0
        %v699 = vmax.f32 %v663, 0.0
        %v700 = vmax.f32 %v666, 0.0
        %vm701 = vcmask 64512
        %702 = vst.msk [vmem:[#allocation2] sm:$0xff] %vm701, 0.0
        %703 = vst.msk [vmem:[#allocation2 + $0x8] sm:$0xff] %vm701, 0.0
        %vm704 = vcmask 58368
        %705 = vst.msk [vmem:[#allocation2 + $0x10] sm:$0x3] %vm704, 0.0
        %706 = vst.msk [vmem:[#allocation2 + $0x18] sm:$0xff] %vm701, 0.0
        %707 = vst.msk [vmem:[#allocation2 + $0x20] sm:$0xff] %vm701, 0.0
        %708 = vst.msk [vmem:[#allocation2 + $0x28] sm:$0x3] %vm704, 0.0
        %709 = vst.msk [vmem:[#allocation2 + $0x30] sm:$0xff] %vm701, 0.0
        %710 = vst.msk [vmem:[#allocation2 + $0x38] sm:$0xff] %vm701, 0.0
        %711 = vst.msk [vmem:[#allocation2 + $0x40] sm:$0x3] %vm704, 0.0
        %712 = vst.msk [vmem:[#allocation2 + $0x48] sm:$0xff] %vm701, 0.0
        %713 = vst.msk [vmem:[#allocation2 + $0x50] sm:$0xff] %vm701, 0.0
        %714 = vst.msk [vmem:[#allocation2 + $0x58] sm:$0x3] %vm704, 0.0
        %715 = vst.msk [vmem:[#allocation2 + $0x60] sm:$0xff] %vm701, 0.0
        %716 = vst.msk [vmem:[#allocation2 + $0x68] sm:$0xff] %vm701, 0.0
        %717 = vst.msk [vmem:[#allocation2 + $0x70] sm:$0x3] %vm704, 0.0
        %718 = vst.msk [vmem:[#allocation2 + $0x78] sm:$0xff] %vm701, 0.0
        %719 = vst.msk [vmem:[#allocation2 + $0x80] sm:$0xff] %vm701, 0.0
        %720 = vst.msk [vmem:[#allocation2 + $0x88] sm:$0x3] %vm704, 0.0
        %721 = vst.msk [vmem:[#allocation2 + $0x90] sm:$0xff] %vm701, 0.0
        %722 = vst.msk [vmem:[#allocation2 + $0x98] sm:$0xff] %vm701, 0.0
        %723 = vst.msk [vmem:[#allocation2 + $0xa0] sm:$0x3] %vm704, 0.0
        %724 = vst.msk [vmem:[#allocation2 + $0xa8] sm:$0xff] %vm701, 0.0
        %725 = vst.msk [vmem:[#allocation2 + $0xb0] sm:$0xff] %vm701, 0.0
        %726 = vst.msk [vmem:[#allocation2 + $0xb8] sm:$0x3] %vm704, 0.0
        %727 = vst.msk [vmem:[#allocation2 + $0xc0] sm:$0xff] %vm701, 0.0
        %728 = vst.msk [vmem:[#allocation2 + $0xc8] sm:$0xff] %vm701, 0.0
        %729 = vst.msk [vmem:[#allocation2 + $0xd0] sm:$0x3] %vm704, 0.0
        %730 = vst.msk [vmem:[#allocation2 + $0xd8] sm:$0xff] %vm701, 0.0
        %731 = vst.msk [vmem:[#allocation2 + $0xe0] sm:$0xff] %vm701, 0.0
        %732 = vst.msk [vmem:[#allocation2 + $0xe8] sm:$0x3] %vm704, 0.0
        %733 = vst.msk [vmem:[#allocation2 + $0xf0] sm:$0xff] %vm701, 0.0
        %734 = vst.msk [vmem:[#allocation2 + $0xf8] sm:$0xff] %vm701, 0.0
        %735 = vst.msk [vmem:[#allocation2 + $0x100] sm:$0x3] %vm704, 0.0
        %736 = vst.msk [vmem:[#allocation2 + $0x108] sm:$0xff] %vm701, 0.0
        %737 = vst.msk [vmem:[#allocation2 + $0x110] sm:$0xff] %vm701, 0.0
        %738 = vst.msk [vmem:[#allocation2 + $0x118] sm:$0x3] %vm704, 0.0
        %739 = vst.msk [vmem:[#allocation2 + $0x120] sm:$0xff] %vm701, 0.0
        %740 = vst.msk [vmem:[#allocation2 + $0x128] sm:$0xff] %vm701, 0.0
        %741 = vst.msk [vmem:[#allocation2 + $0x130] sm:$0x3] %vm704, 0.0
        %742 = vst.msk [vmem:[#allocation2 + $0x138] sm:$0xff] %vm701, 0.0
        %743 = vst.msk [vmem:[#allocation2 + $0x140] sm:$0xff] %vm701, 0.0
        %744 = vst.msk [vmem:[#allocation2 + $0x148] sm:$0x3] %vm704, 0.0
        %745 = vst.msk [vmem:[#allocation2 + $0x150] sm:$0xff] %vm701, 0.0
        %746 = vst.msk [vmem:[#allocation2 + $0x158] sm:$0xff] %vm701, 0.0
        %747 = vst.msk [vmem:[#allocation2 + $0x160] sm:$0x3] %vm704, 0.0
        %748 = vst.msk [vmem:[#allocation2 + $0x168] sm:$0xff] %vm701, 0.0
        %749 = vst.msk [vmem:[#allocation2 + $0x170] sm:$0xff] %vm701, 0.0
        %750 = vst.msk [vmem:[#allocation2 + $0x178] sm:$0x3] %vm704, 0.0
        %751 = vst.msk [vmem:[#allocation2 + $0x180] sm:$0xff] %vm701, 0.0
        %752 = vst.msk [vmem:[#allocation2 + $0x188] sm:$0xff] %vm701, 0.0
        %753 = vst.msk [vmem:[#allocation2 + $0x190] sm:$0x3] %vm704, 0.0
        %754 = vst.msk [vmem:[#allocation2 + $0x198] sm:$0xff] %vm701, 0.0
        %755 = vst.msk [vmem:[#allocation2 + $0x1a0] sm:$0xff] %vm701, 0.0
        %756 = vst.msk [vmem:[#allocation2 + $0x1a8] sm:$0x3] %vm704, 0.0
        %s757 = scalar_lea.vmem [#allocation2], 24
        %758 = vst.msk [vmem:[%s757 + $0x1] sm:$0xff] %vm701, %v669
        %759 = vst.msk [vmem:[%s757 + $0x9] sm:$0xff] %vm701, %v670
        %760 = vst.msk [vmem:[%s757 + $0x19] sm:$0xff] %vm701, %v671
        %761 = vst.msk [vmem:[%s757 + $0x21] sm:$0xff] %vm701, %v672
        %762 = vst.msk [vmem:[%s757 + $0x31] sm:$0xff] %vm701, %v673
        %763 = vst.msk [vmem:[%s757 + $0x39] sm:$0xff] %vm701, %v674
        %764 = vst.msk [vmem:[%s757 + $0x49] sm:$0xff] %vm701, %v675
        %765 = vst.msk [vmem:[%s757 + $0x51] sm:$0xff] %vm701, %v676
        %766 = vst.msk [vmem:[%s757 + $0x61] sm:$0xff] %vm701, %v677
        %767 = vst.msk [vmem:[%s757 + $0x69] sm:$0xff] %vm701, %v678
        %768 = vst.msk [vmem:[%s757 + $0x79] sm:$0xff] %vm701, %v679
        %769 = vst.msk [vmem:[%s757 + $0x81] sm:$0xff] %vm701, %v680
        %770 = vst.msk [vmem:[%s757 + $0x91] sm:$0xff] %vm701, %v681
        %771 = vst.msk [vmem:[%s757 + $0x99] sm:$0xff] %vm701, %v682
        %772 = vst.msk [vmem:[%s757 + $0xa9] sm:$0xff] %vm701, %v683
        %773 = vst.msk [vmem:[%s757 + $0xb1] sm:$0xff] %vm701, %v684
        %774 = vst.msk [vmem:[%s757 + $0xc1] sm:$0xff] %vm701, %v685
        %775 = vst.msk [vmem:[%s757 + $0xc9] sm:$0xff] %vm701, %v686
        %776 = vst.msk [vmem:[%s757 + $0xd9] sm:$0xff] %vm701, %v687
        %777 = vst.msk [vmem:[%s757 + $0xe1] sm:$0xff] %vm701, %v688
        %778 = vst.msk [vmem:[%s757 + $0xf1] sm:$0xff] %vm701, %v689
        %779 = vst.msk [vmem:[%s757 + $0xf9] sm:$0xff] %vm701, %v690
        %780 = vst.msk [vmem:[%s757 + $0x109] sm:$0xff] %vm701, %v691
        %781 = vst.msk [vmem:[%s757 + $0x111] sm:$0xff] %vm701, %v692
        %782 = vst.msk [vmem:[%s757 + $0x121] sm:$0xff] %vm701, %v693
        %783 = vst.msk [vmem:[%s757 + $0x129] sm:$0xff] %vm701, %v694
        %784 = vst.msk [vmem:[%s757 + $0x139] sm:$0xff] %vm701, %v695
        %785 = vst.msk [vmem:[%s757 + $0x141] sm:$0xff] %vm701, %v696
        %786 = vst.msk [vmem:[%s757 + $0x151] sm:$0xff] %vm701, %v697
        %787 = vst.msk [vmem:[%s757 + $0x159] sm:$0xff] %vm701, %v698
        %788 = vst.msk [vmem:[%s757 + $0x169] sm:$0xff] %vm701, %v699
        %789 = vst.msk [vmem:[%s757 + $0x171] sm:$0xff] %vm701, %v700
        %v790 = vld [vmem:[#allocation2] sm:$0xff]
        %v791 = vld [vmem:[#allocation2 + $0x8] sm:$0xff]
        %v792 = vld [vmem:[#allocation2 + $0x10] sm:$0x3]
        %v793 = vld [vmem:[#allocation2 + $0x18] sm:$0xff]
        %v794 = vld [vmem:[#allocation2 + $0x20] sm:$0xff]
        %v795 = vld [vmem:[#allocation2 + $0x28] sm:$0x3]
        %v796 = vld [vmem:[#allocation2 + $0x30] sm:$0xff]
        %v797 = vld [vmem:[#allocation2 + $0x38] sm:$0xff]
        %v798 = vld [vmem:[#allocation2 + $0x40] sm:$0x3]
        %v799 = vld [vmem:[#allocation2 + $0x48] sm:$0xff]
        %v800 = vld [vmem:[#allocation2 + $0x50] sm:$0xff]
        %v801 = vld [vmem:[#allocation2 + $0x58] sm:$0x3]
        %v802 = vld [vmem:[#allocation2 + $0x60] sm:$0xff]
        %v803 = vld [vmem:[#allocation2 + $0x68] sm:$0xff]
        %v804 = vld [vmem:[#allocation2 + $0x70] sm:$0x3]
        %v805 = vld [vmem:[#allocation2 + $0x78] sm:$0xff]
        %v806 = vld [vmem:[#allocation2 + $0x80] sm:$0xff]
        %v807 = vld [vmem:[#allocation2 + $0x88] sm:$0x3]
        %v808 = vld [vmem:[#allocation2 + $0x90] sm:$0xff]
        %v809 = vld [vmem:[#allocation2 + $0x98] sm:$0xff]
        %v810 = vld [vmem:[#allocation2 + $0xa0] sm:$0x3]
        %v811 = vld [vmem:[#allocation2 + $0xa8] sm:$0xff]
        %v812 = vld [vmem:[#allocation2 + $0xb0] sm:$0xff]
        %v813 = vld [vmem:[#allocation2 + $0xb8] sm:$0x3]
        %v814 = vld [vmem:[#allocation2 + $0xc0] sm:$0xff]
        %v815 = vld [vmem:[#allocation2 + $0xc8] sm:$0xff]
        %v816 = vld [vmem:[#allocation2 + $0xd0] sm:$0x3]
        %v817 = vld [vmem:[#allocation2 + $0xd8] sm:$0xff]
        %v818 = vld [vmem:[#allocation2 + $0xe0] sm:$0xff]
        %v819 = vld [vmem:[#allocation2 + $0xe8] sm:$0x3]
        %v820 = vld [vmem:[#allocation2 + $0xf0] sm:$0xff]
        %v821 = vld [vmem:[#allocation2 + $0xf8] sm:$0xff]
        %v822 = vld [vmem:[#allocation2 + $0x100] sm:$0x3]
        %v823 = vld [vmem:[#allocation2 + $0x108] sm:$0xff]
        %v824 = vld [vmem:[#allocation2 + $0x110] sm:$0xff]
        %v825 = vld [vmem:[#allocation2 + $0x118] sm:$0x3]
        %v826 = vld [vmem:[#allocation2 + $0x120] sm:$0xff]
        %v827 = vld [vmem:[#allocation2 + $0x128] sm:$0xff]
        %v828 = vld [vmem:[#allocation2 + $0x130] sm:$0x3]
        %v829 = vld [vmem:[#allocation2 + $0x138] sm:$0xff]
        %v830 = vld [vmem:[#allocation2 + $0x140] sm:$0xff]
        %v831 = vld [vmem:[#allocation2 + $0x148] sm:$0x3]
        %v832 = vld [vmem:[#allocation2 + $0x150] sm:$0xff]
        %v833 = vld [vmem:[#allocation2 + $0x158] sm:$0xff]
        %v834 = vld [vmem:[#allocation2 + $0x160] sm:$0x3]
        %v835 = vld [vmem:[#allocation2 + $0x168] sm:$0xff]
        %v836 = vld [vmem:[#allocation2 + $0x170] sm:$0xff]
        %v837 = vld [vmem:[#allocation2 + $0x178] sm:$0x3]
        %v838 = vld [vmem:[#allocation2 + $0x180] sm:$0xff]
        %v839 = vld [vmem:[#allocation2 + $0x188] sm:$0xff]
        %v840 = vld [vmem:[#allocation2 + $0x190] sm:$0x3]
        %v841 = vld [vmem:[#allocation2 + $0x198] sm:$0xff]
        %v842 = vld [vmem:[#allocation2 + $0x1a0] sm:$0xff]
        %v843 = vld [vmem:[#allocation2 + $0x1a8] sm:$0x3]
        %844 = vst.msk [vmem:[#allocation3] sm:$0xff] %vm701, 0.0
        %845 = vst.msk [vmem:[#allocation3 + $0x8] sm:$0xff] %vm701, 0.0
        %846 = vst.msk [vmem:[#allocation3 + $0x10] sm:$0xff] %vm701, 0.0
        %847 = vst.msk [vmem:[#allocation3 + $0x18] sm:$0xff] %vm701, 0.0
        %848 = vst.msk [vmem:[#allocation3 + $0x20] sm:$0xff] %vm701, 0.0
        %849 = vst.msk [vmem:[#allocation3 + $0x28] sm:$0xff] %vm701, 0.0
        %850 = vst.msk [vmem:[#allocation3 + $0x30] sm:$0xff] %vm701, 0.0
        %851 = vst.msk [vmem:[#allocation3 + $0x38] sm:$0xff] %vm701, 0.0
        %852 = vst.msk [vmem:[#allocation3 + $0x40] sm:$0xff] %vm701, 0.0
        %853 = vst.msk [vmem:[#allocation3 + $0x48] sm:$0xff] %vm701, 0.0
        %854 = vst.msk [vmem:[#allocation3 + $0x50] sm:$0xff] %vm701, 0.0
        %855 = vst.msk [vmem:[#allocation3 + $0x58] sm:$0xff] %vm701, 0.0
        %856 = vst.msk [vmem:[#allocation3 + $0x60] sm:$0xff] %vm701, 0.0
        %857 = vst.msk [vmem:[#allocation3 + $0x68] sm:$0xff] %vm701, 0.0
        %858 = vst.msk [vmem:[#allocation3 + $0x70] sm:$0xff] %vm701, 0.0
        %859 = vst.msk [vmem:[#allocation3 + $0x78] sm:$0xff] %vm701, 0.0
        %860 = vst.msk [vmem:[#allocation3 + $0x80] sm:$0xff] %vm701, 0.0
        %861 = vst.msk [vmem:[#allocation3 + $0x88] sm:$0xff] %vm701, 0.0
        %862 = vst.msk [vmem:[#allocation3 + $0x90] sm:$0xff] %vm701, 0.0
        %863 = vst.msk [vmem:[#allocation3 + $0x98] sm:$0xff] %vm701, 0.0
        %864 = vst.msk [vmem:[#allocation3 + $0xa0] sm:$0xff] %vm701, 0.0
        %865 = vst.msk [vmem:[#allocation3 + $0xa8] sm:$0xff] %vm701, 0.0
        %866 = vst.msk [vmem:[#allocation3 + $0xb0] sm:$0xff] %vm701, 0.0
        %867 = vst.msk [vmem:[#allocation3 + $0xb8] sm:$0xff] %vm701, 0.0
        %868 = vst.msk [vmem:[#allocation3 + $0xc0] sm:$0xff] %vm701, 0.0
        %869 = vst.msk [vmem:[#allocation3 + $0xc8] sm:$0xff] %vm701, 0.0
        %870 = vst.msk [vmem:[#allocation3 + $0xd0] sm:$0xff] %vm701, 0.0
        %871 = vst.msk [vmem:[#allocation3 + $0xd8] sm:$0xff] %vm701, 0.0
        %872 = vst.msk [vmem:[#allocation3 + $0xe0] sm:$0xff] %vm701, 0.0
        %873 = vst.msk [vmem:[#allocation3 + $0xe8] sm:$0xff] %vm701, 0.0
        %874 = vst.msk [vmem:[#allocation3 + $0xf0] sm:$0xff] %vm701, 0.0
        %875 = vst.msk [vmem:[#allocation3 + $0xf8] sm:$0xff] %vm701, 0.0
        %v876 = vpack.c.bf16 %v791, %v790
        %v877 = vpack.c.bf16 %v794, %v793
        %v878 = vpack.c.bf16 %v797, %v796
        %v879 = vpack.c.bf16 %v800, %v799
        %v880 = vpack.c.bf16 %v803, %v802
        %v881 = vpack.c.bf16 %v806, %v805
        %v882 = vpack.c.bf16 %v809, %v808
        %v883 = vpack.c.bf16 %v812, %v811
        %v884 = vpack.c.bf16 %v815, %v814
        %v885 = vpack.c.bf16 %v818, %v817
        %v886 = vpack.c.bf16 %v821, %v820
        %v887 = vpack.c.bf16 %v824, %v823
        %v888 = vpack.c.bf16 %v827, %v826
        %v889 = vpack.c.bf16 %v830, %v829
        %v890 = vpack.c.bf16 %v833, %v832
        %v891 = vpack.c.bf16 %v836, %v835
        %v892 = vld [vmem:[%s3] sm:$0xf]
        %v893 = vld [vmem:[#allocation3] sm:$0xff]
        %v894 = vld [vmem:[#allocation3 + $0x8] sm:$0xff]
        %v895 = vld [vmem:[#allocation3 + $0x10] sm:$0xff]
        %v896 = vld [vmem:[#allocation3 + $0x18] sm:$0xff]
        %v897 = vld [vmem:[#allocation3 + $0x20] sm:$0xff]
        %v898 = vld [vmem:[#allocation3 + $0x28] sm:$0xff]
        %v899 = vld [vmem:[#allocation3 + $0x30] sm:$0xff]
        %v900 = vld [vmem:[#allocation3 + $0x38] sm:$0xff]
        %v901 = vld [vmem:[#allocation3 + $0x40] sm:$0xff]
        %v902 = vld [vmem:[#allocation3 + $0x48] sm:$0xff]
        %v903 = vld [vmem:[#allocation3 + $0x50] sm:$0xff]
        %v904 = vld [vmem:[#allocation3 + $0x58] sm:$0xff]
        %v905 = vld [vmem:[#allocation3 + $0x60] sm:$0xff]
        %v906 = vld [vmem:[#allocation3 + $0x68] sm:$0xff]
        %v907 = vld [vmem:[#allocation3 + $0x70] sm:$0xff]
        %v908 = vld [vmem:[#allocation3 + $0x78] sm:$0xff]
        %v909 = vld [vmem:[#allocation3 + $0x80] sm:$0xff]
        %v910 = vld [vmem:[#allocation3 + $0x88] sm:$0xff]
        %v911 = vld [vmem:[#allocation3 + $0x90] sm:$0xff]
        %v912 = vld [vmem:[#allocation3 + $0x98] sm:$0xff]
        %v913 = vld [vmem:[#allocation3 + $0xa0] sm:$0xff]
        %v914 = vld [vmem:[#allocation3 + $0xa8] sm:$0xff]
        %v915 = vld [vmem:[#allocation3 + $0xb0] sm:$0xff]
        %v916 = vld [vmem:[#allocation3 + $0xb8] sm:$0xff]
        %v917 = vld [vmem:[#allocation3 + $0xc0] sm:$0xff]
        %v918 = vld [vmem:[#allocation3 + $0xc8] sm:$0xff]
        %v919 = vld [vmem:[#allocation3 + $0xd0] sm:$0xff]
        %v920 = vld [vmem:[#allocation3 + $0xd8] sm:$0xff]
        %v921 = vld [vmem:[#allocation3 + $0xe0] sm:$0xff]
        %v922 = vld [vmem:[#allocation3 + $0xe8] sm:$0xff]
        %v923 = vld [vmem:[#allocation3 + $0xf0] sm:$0xff]
        %v924 = vld [vmem:[#allocation3 + $0xf8] sm:$0xff]
        %v926 = vsel %vm701, %v876, 0
        %v929 = vsel %vm701, %v877, 0
        %v932 = vsel %vm701, %v878, 0
        %v935 = vsel %vm701, %v879, 0
        %v938 = vsel %vm701, %v880, 0
        %v941 = vsel %vm701, %v881, 0
        %v944 = vsel %vm701, %v882, 0
        %v947 = vsel %vm701, %v883, 0
        %v950 = vsel %vm701, %v884, 0
        %v953 = vsel %vm701, %v885, 0
        %v956 = vsel %vm701, %v886, 0
        %v959 = vsel %vm701, %v887, 0
        %v962 = vsel %vm701, %v888, 0
        %v965 = vsel %vm701, %v889, 0
        %v968 = vsel %vm701, %v890, 0
        %v971 = vsel %vm701, %v891, 0
        %vm973 = vcmask 1043456
        %v975 = vsel %vm973, %v892, 0
        %977 = vmatprep.subr.bf16.mxu0 0
        %978 = vmatpush1.bf16.msra.mxu0 %v975
        %979 = vmatprep.subr.bf16.mxu0 0
        %980 = vmatpush1.bf16.msra.mxu0 0
        %981 = vmatprep.subr.bf16.mxu0 0
        %982 = vmatpush1.bf16.msra.mxu0 0
        %983 = vmatprep.subr.bf16.mxu0 0
        %984 = vmatpush1.bf16.msra.mxu0 0
        %985 = vmatprep.subr.bf16.mxu0 0
        %986 = vmatpush1.bf16.msra.mxu0 0
        %987 = vmatprep.subr.bf16.mxu0 0
        %988 = vmatpush1.bf16.msra.mxu0 0
        %989 = vmatprep.subr.bf16.mxu0 0
        %990 = vmatpush1.bf16.msra.mxu0 0
        %991 = vmatprep.subr.bf16.mxu0 0
        %992 = vmatpush1.bf16.msra.mxu0 0
        %993 = vmatprep.subr.bf16.mxu0 0
        %994 = vmatpush1.bf16.msra.mxu0 0
        %995 = vmatprep.subr.bf16.mxu0 0
        %996 = vmatpush1.bf16.msra.mxu0 0
        %997 = vmatprep.subr.bf16.mxu0 0
        %998 = vmatpush1.bf16.msra.mxu0 0
        %999 = vmatprep.subr.bf16.mxu0 0
        %1000 = vmatpush1.bf16.msra.mxu0 0
        %1001 = vmatprep.subr.bf16.mxu0 0
        %1002 = vmatpush1.bf16.msra.mxu0 0
        %1003 = vmatprep.subr.bf16.mxu0 0
        %1004 = vmatpush1.bf16.msra.mxu0 0
        %1005 = vmatprep.subr.bf16.mxu0 0
        %1006 = vmatpush1.bf16.msra.mxu0 0
        %1007 = vmatprep.subr.bf16.mxu0 0
        %1008 = vmatpush1.bf16.msra.mxu0 0
        %1009 = vmatprep.mubr.bf16.mxu0 0
        %1010 = vmatmul.mubr.bf16.gmra.mrb[0].mxu0 %v926
        %v1011 = vpop.f32.mrb[0].mxu0
        %v1012 = vadd.f32 0.0, %v1011
        %v1013 = vpop.f32.mrb[0].mxu0
        %v1014 = vpop.f32.mrb[0].mxu0
        %v1015 = vadd.f32 0.0, %v1014
        %v1016 = vpop.f32.mrb[0].mxu0
        %1017 = vmatprep.mubr.bf16.mxu0 0
        %1018 = vmatmul.mubr.bf16.gmra.mrb[0].mxu0 %v929
        %v1019 = vpop.f32.mrb[0].mxu0
        %v1020 = vadd.f32 0.0, %v1019
        %v1021 = vpop.f32.mrb[0].mxu0
        %v1022 = vpop.f32.mrb[0].mxu0
        %v1023 = vadd.f32 0.0, %v1022
        %v1024 = vpop.f32.mrb[0].mxu0
        %1025 = vmatprep.mubr.bf16.mxu0 0
        %1026 = vmatmul.mubr.bf16.gmra.mrb[0].mxu0 %v932
        %v1027 = vpop.f32.mrb[0].mxu0
        %v1028 = vadd.f32 0.0, %v1027
        %v1029 = vpop.f32.mrb[0].mxu0
        %v1030 = vpop.f32.mrb[0].mxu0
        %v1031 = vadd.f32 0.0, %v1030
        %v1032 = vpop.f32.mrb[0].mxu0
        %1033 = vmatprep.mubr.bf16.mxu0 0
        %1034 = vmatmul.mubr.bf16.gmra.mrb[0].mxu0 %v935
        %v1035 = vpop.f32.mrb[0].mxu0
        %v1036 = vadd.f32 0.0, %v1035
        %v1037 = vpop.f32.mrb[0].mxu0
        %v1038 = vpop.f32.mrb[0].mxu0
        %v1039 = vadd.f32 0.0, %v1038
        %v1040 = vpop.f32.mrb[0].mxu0
        %1041 = vmatprep.mubr.bf16.mxu0 0
        %1042 = vmatmul.mubr.bf16.gmra.mrb[0].mxu0 %v938
        %v1043 = vpop.f32.mrb[0].mxu0
        %v1044 = vadd.f32 0.0, %v1043
        %v1045 = vpop.f32.mrb[0].mxu0
        %v1046 = vpop.f32.mrb[0].mxu0
        %v1047 = vadd.f32 0.0, %v1046
        %v1048 = vpop.f32.mrb[0].mxu0
        %1049 = vmatprep.mubr.bf16.mxu0 0
        %1050 = vmatmul.mubr.bf16.gmra.mrb[0].mxu0 %v941
        %v1051 = vpop.f32.mrb[0].mxu0
        %v1052 = vadd.f32 0.0, %v1051
        %v1053 = vpop.f32.mrb[0].mxu0
        %v1054 = vpop.f32.mrb[0].mxu0
        %v1055 = vadd.f32 0.0, %v1054
        %v1056 = vpop.f32.mrb[0].mxu0
        %1057 = vmatprep.mubr.bf16.mxu0 0
        %1058 = vmatmul.mubr.bf16.gmra.mrb[0].mxu0 %v944
        %v1059 = vpop.f32.mrb[0].mxu0
        %v1060 = vadd.f32 0.0, %v1059
        %v1061 = vpop.f32.mrb[0].mxu0
        %v1062 = vpop.f32.mrb[0].mxu0
        %v1063 = vadd.f32 0.0, %v1062
        %v1064 = vpop.f32.mrb[0].mxu0
        %1065 = vmatprep.mubr.bf16.mxu0 0
        %1066 = vmatmul.mubr.bf16.gmra.mrb[0].mxu0 %v947
        %v1067 = vpop.f32.mrb[0].mxu0
        %v1068 = vadd.f32 0.0, %v1067
        %v1069 = vpop.f32.mrb[0].mxu0
        %v1070 = vpop.f32.mrb[0].mxu0
        %v1071 = vadd.f32 0.0, %v1070
        %v1072 = vpop.f32.mrb[0].mxu0
        %1073 = vmatprep.mubr.bf16.mxu0 0
        %1074 = vmatmul.mubr.bf16.gmra.mrb[0].mxu0 %v950
        %v1075 = vpop.f32.mrb[0].mxu0
        %v1076 = vadd.f32 0.0, %v1075
        %v1077 = vpop.f32.mrb[0].mxu0
        %v1078 = vpop.f32.mrb[0].mxu0
        %v1079 = vadd.f32 0.0, %v1078
        %v1080 = vpop.f32.mrb[0].mxu0
        %1081 = vmatprep.mubr.bf16.mxu0 0
        %1082 = vmatmul.mubr.bf16.gmra.mrb[0].mxu0 %v953
        %v1083 = vpop.f32.mrb[0].mxu0
        %v1084 = vadd.f32 0.0, %v1083
        %v1085 = vpop.f32.mrb[0].mxu0
        %v1086 = vpop.f32.mrb[0].mxu0
        %v1087 = vadd.f32 0.0, %v1086
        %v1088 = vpop.f32.mrb[0].mxu0
        %1089 = vmatprep.mubr.bf16.mxu0 0
        %1090 = vmatmul.mubr.bf16.gmra.mrb[0].mxu0 %v956
        %v1091 = vpop.f32.mrb[0].mxu0
        %v1092 = vadd.f32 0.0, %v1091
        %v1093 = vpop.f32.mrb[0].mxu0
        %v1094 = vpop.f32.mrb[0].mxu0
        %v1095 = vadd.f32 0.0, %v1094
        %v1096 = vpop.f32.mrb[0].mxu0
        %1097 = vmatprep.mubr.bf16.mxu0 0
        %1098 = vmatmul.mubr.bf16.gmra.mrb[0].mxu0 %v959
        %v1099 = vpop.f32.mrb[0].mxu0
        %v1100 = vadd.f32 0.0, %v1099
        %v1101 = vpop.f32.mrb[0].mxu0
        %v1102 = vpop.f32.mrb[0].mxu0
        %v1103 = vadd.f32 0.0, %v1102
        %v1104 = vpop.f32.mrb[0].mxu0
        %1105 = vmatprep.mubr.bf16.mxu0 0
        %1106 = vmatmul.mubr.bf16.gmra.mrb[0].mxu0 %v962
        %v1107 = vpop.f32.mrb[0].mxu0
        %v1108 = vadd.f32 0.0, %v1107
        %v1109 = vpop.f32.mrb[0].mxu0
        %v1110 = vpop.f32.mrb[0].mxu0
        %v1111 = vadd.f32 0.0, %v1110
        %v1112 = vpop.f32.mrb[0].mxu0
        %1113 = vmatprep.mubr.bf16.mxu0 0
        %1114 = vmatmul.mubr.bf16.gmra.mrb[0].mxu0 %v965
        %v1115 = vpop.f32.mrb[0].mxu0
        %v1116 = vadd.f32 0.0, %v1115
        %v1117 = vpop.f32.mrb[0].mxu0
        %v1118 = vpop.f32.mrb[0].mxu0
        %v1119 = vadd.f32 0.0, %v1118
        %v1120 = vpop.f32.mrb[0].mxu0
        %1121 = vmatprep.mubr.bf16.mxu0 0
        %1122 = vmatmul.mubr.bf16.gmra.mrb[0].mxu0 %v968
        %v1123 = vpop.f32.mrb[0].mxu0
        %v1124 = vadd.f32 0.0, %v1123
        %v1125 = vpop.f32.mrb[0].mxu0
        %v1126 = vpop.f32.mrb[0].mxu0
        %v1127 = vadd.f32 0.0, %v1126
        %v1128 = vpop.f32.mrb[0].mxu0
        %1129 = vmatprep.mubr.bf16.mxu0 0
        %1130 = vmatmul.mubr.bf16.gmra.mrb[0].mxu0 %v971
        %v1131 = vpop.f32.mrb[0].mxu0
        %v1132 = vadd.f32 0.0, %v1131
        %v1133 = vpop.f32.mrb[0].mxu0
        %v1134 = vpop.f32.mrb[0].mxu0
        %v1135 = vadd.f32 0.0, %v1134
        %v1136 = vpop.f32.mrb[0].mxu0
        %1137 = vdwg.mxu0
        %v1138 = vadd.f32 %v893, %v1012
        %v1139 = vadd.f32 %v894, %v1015
        %v1140 = vadd.f32 %v895, %v1020
        %v1141 = vadd.f32 %v896, %v1023
        %v1142 = vadd.f32 %v897, %v1028
        %v1143 = vadd.f32 %v898, %v1031
        %v1144 = vadd.f32 %v899, %v1036
        %v1145 = vadd.f32 %v900, %v1039
        %v1146 = vadd.f32 %v901, %v1044
        %v1147 = vadd.f32 %v902, %v1047
        %v1148 = vadd.f32 %v903, %v1052
        %v1149 = vadd.f32 %v904, %v1055
        %v1150 = vadd.f32 %v905, %v1060
        %v1151 = vadd.f32 %v906, %v1063
        %v1152 = vadd.f32 %v907, %v1068
        %v1153 = vadd.f32 %v908, %v1071
        %v1154 = vadd.f32 %v909, %v1076
        %v1155 = vadd.f32 %v910, %v1079
        %v1156 = vadd.f32 %v911, %v1084
        %v1157 = vadd.f32 %v912, %v1087
        %v1158 = vadd.f32 %v913, %v1092
        %v1159 = vadd.f32 %v914, %v1095
        %v1160 = vadd.f32 %v915, %v1100
        %v1161 = vadd.f32 %v916, %v1103
        %v1162 = vadd.f32 %v917, %v1108
        %v1163 = vadd.f32 %v918, %v1111
        %v1164 = vadd.f32 %v919, %v1116
        %v1165 = vadd.f32 %v920, %v1119
        %v1166 = vadd.f32 %v921, %v1124
        %v1167 = vadd.f32 %v922, %v1127
        %v1168 = vadd.f32 %v923, %v1132
        %v1169 = vadd.f32 %v924, %v1135
        %1170 = vst.msk [vmem:[#allocation3] sm:$0xff] %vm701, %v1138
        %1171 = vst.msk [vmem:[#allocation3 + $0x8] sm:$0xff] %vm701, %v1139
        %1172 = vst.msk [vmem:[#allocation3 + $0x10] sm:$0xff] %vm701, %v1140
        %1173 = vst.msk [vmem:[#allocation3 + $0x18] sm:$0xff] %vm701, %v1141
        %1174 = vst.msk [vmem:[#allocation3 + $0x20] sm:$0xff] %vm701, %v1142
        %1175 = vst.msk [vmem:[#allocation3 + $0x28] sm:$0xff] %vm701, %v1143
        %1176 = vst.msk [vmem:[#allocation3 + $0x30] sm:$0xff] %vm701, %v1144
        %1177 = vst.msk [vmem:[#allocation3 + $0x38] sm:$0xff] %vm701, %v1145
        %1178 = vst.msk [vmem:[#allocation3 + $0x40] sm:$0xff] %vm701, %v1146
        %1179 = vst.msk [vmem:[#allocation3 + $0x48] sm:$0xff] %vm701, %v1147
        %1180 = vst.msk [vmem:[#allocation3 + $0x50] sm:$0xff] %vm701, %v1148
        %1181 = vst.msk [vmem:[#allocation3 + $0x58] sm:$0xff] %vm701, %v1149
        %1182 = vst.msk [vmem:[#allocation3 + $0x60] sm:$0xff] %vm701, %v1150
        %1183 = vst.msk [vmem:[#allocation3 + $0x68] sm:$0xff] %vm701, %v1151
        %1184 = vst.msk [vmem:[#allocation3 + $0x70] sm:$0xff] %vm701, %v1152
        %1185 = vst.msk [vmem:[#allocation3 + $0x78] sm:$0xff] %vm701, %v1153
        %1186 = vst.msk [vmem:[#allocation3 + $0x80] sm:$0xff] %vm701, %v1154
        %1187 = vst.msk [vmem:[#allocation3 + $0x88] sm:$0xff] %vm701, %v1155
        %1188 = vst.msk [vmem:[#allocation3 + $0x90] sm:$0xff] %vm701, %v1156
        %1189 = vst.msk [vmem:[#allocation3 + $0x98] sm:$0xff] %vm701, %v1157
        %1190 = vst.msk [vmem:[#allocation3 + $0xa0] sm:$0xff] %vm701, %v1158
        %1191 = vst.msk [vmem:[#allocation3 + $0xa8] sm:$0xff] %vm701, %v1159
        %1192 = vst.msk [vmem:[#allocation3 + $0xb0] sm:$0xff] %vm701, %v1160
        %1193 = vst.msk [vmem:[#allocation3 + $0xb8] sm:$0xff] %vm701, %v1161
        %1194 = vst.msk [vmem:[#allocation3 + $0xc0] sm:$0xff] %vm701, %v1162
        %1195 = vst.msk [vmem:[#allocation3 + $0xc8] sm:$0xff] %vm701, %v1163
        %1196 = vst.msk [vmem:[#allocation3 + $0xd0] sm:$0xff] %vm701, %v1164
        %1197 = vst.msk [vmem:[#allocation3 + $0xd8] sm:$0xff] %vm701, %v1165
        %1198 = vst.msk [vmem:[#allocation3 + $0xe0] sm:$0xff] %vm701, %v1166
        %1199 = vst.msk [vmem:[#allocation3 + $0xe8] sm:$0xff] %vm701, %v1167
        %1200 = vst.msk [vmem:[#allocation3 + $0xf0] sm:$0xff] %vm701, %v1168
        %1201 = vst.msk [vmem:[#allocation3 + $0xf8] sm:$0xff] %vm701, %v1169
        %vm1250 = vcmask 1046528
        %v1251 = vrot.slane %v790, 1
        %v1252 = vrot.slane %v791, 1
        %v1253 = vsel %vm1250, %v1251, %v1252
        %v1254 = vrot.slane %v792, 1
        %v1255 = vsel %vm1250, %v1252, %v1254
        %v1256 = vrot.slane %v793, 1
        %v1257 = vrot.slane %v794, 1
        %v1258 = vsel %vm1250, %v1256, %v1257
        %v1259 = vrot.slane %v795, 1
        %v1260 = vsel %vm1250, %v1257, %v1259
        %v1261 = vrot.slane %v796, 1
        %v1262 = vrot.slane %v797, 1
        %v1263 = vsel %vm1250, %v1261, %v1262
        %v1264 = vrot.slane %v798, 1
        %v1265 = vsel %vm1250, %v1262, %v1264
        %v1266 = vrot.slane %v799, 1
        %v1267 = vrot.slane %v800, 1
        %v1268 = vsel %vm1250, %v1266, %v1267
        %v1269 = vrot.slane %v801, 1
        %v1270 = vsel %vm1250, %v1267, %v1269
        %v1271 = vrot.slane %v802, 1
        %v1272 = vrot.slane %v803, 1
        %v1273 = vsel %vm1250, %v1271, %v1272
        %v1274 = vrot.slane %v804, 1
        %v1275 = vsel %vm1250, %v1272, %v1274
        %v1276 = vrot.slane %v805, 1
        %v1277 = vrot.slane %v806, 1
        %v1278 = vsel %vm1250, %v1276, %v1277
        %v1279 = vrot.slane %v807, 1
        %v1280 = vsel %vm1250, %v1277, %v1279
        %v1281 = vrot.slane %v808, 1
        %v1282 = vrot.slane %v809, 1
        %v1283 = vsel %vm1250, %v1281, %v1282
        %v1284 = vrot.slane %v810, 1
        %v1285 = vsel %vm1250, %v1282, %v1284
        %v1286 = vrot.slane %v811, 1
        %v1287 = vrot.slane %v812, 1
        %v1288 = vsel %vm1250, %v1286, %v1287
        %v1289 = vrot.slane %v813, 1
        %v1290 = vsel %vm1250, %v1287, %v1289
        %v1291 = vrot.slane %v814, 1
        %v1292 = vrot.slane %v815, 1
        %v1293 = vsel %vm1250, %v1291, %v1292
        %v1294 = vrot.slane %v816, 1
        %v1295 = vsel %vm1250, %v1292, %v1294
        %v1296 = vrot.slane %v817, 1
        %v1297 = vrot.slane %v818, 1
        %v1298 = vsel %vm1250, %v1296, %v1297
        %v1299 = vrot.slane %v819, 1
        %v1300 = vsel %vm1250, %v1297, %v1299
        %v1301 = vrot.slane %v820, 1
        %v1302 = vrot.slane %v821, 1
        %v1303 = vsel %vm1250, %v1301, %v1302
        %v1304 = vrot.slane %v822, 1
        %v1305 = vsel %vm1250, %v1302, %v1304
        %v1306 = vrot.slane %v823, 1
        %v1307 = vrot.slane %v824, 1
        %v1308 = vsel %vm1250, %v1306, %v1307
        %v1309 = vrot.slane %v825, 1
        %v1310 = vsel %vm1250, %v1307, %v1309
        %v1311 = vrot.slane %v826, 1
        %v1312 = vrot.slane %v827, 1
        %v1313 = vsel %vm1250, %v1311, %v1312
        %v1314 = vrot.slane %v828, 1
        %v1315 = vsel %vm1250, %v1312, %v1314
        %v1316 = vrot.slane %v829, 1
        %v1317 = vrot.slane %v830, 1
        %v1318 = vsel %vm1250, %v1316, %v1317
        %v1319 = vrot.slane %v831, 1
        %v1320 = vsel %vm1250, %v1317, %v1319
        %v1321 = vrot.slane %v832, 1
        %v1322 = vrot.slane %v833, 1
        %v1323 = vsel %vm1250, %v1321, %v1322
        %v1324 = vrot.slane %v834, 1
        %v1325 = vsel %vm1250, %v1322, %v1324
        %v1326 = vrot.slane %v835, 1
        %v1327 = vrot.slane %v836, 1
        %v1328 = vsel %vm1250, %v1326, %v1327
        %v1329 = vrot.slane %v837, 1
        %v1330 = vsel %vm1250, %v1327, %v1329
        %v1363 = vpack.c.bf16 %v1255, %v1253
        %v1364 = vpack.c.bf16 %v1260, %v1258
        %v1365 = vpack.c.bf16 %v1265, %v1263
        %v1366 = vpack.c.bf16 %v1270, %v1268
        %v1367 = vpack.c.bf16 %v1275, %v1273
        %v1368 = vpack.c.bf16 %v1280, %v1278
        %v1369 = vpack.c.bf16 %v1285, %v1283
        %v1370 = vpack.c.bf16 %v1290, %v1288
        %v1371 = vpack.c.bf16 %v1295, %v1293
        %v1372 = vpack.c.bf16 %v1300, %v1298
        %v1373 = vpack.c.bf16 %v1305, %v1303
        %v1374 = vpack.c.bf16 %v1310, %v1308
        %v1375 = vpack.c.bf16 %v1315, %v1313
        %v1376 = vpack.c.bf16 %v1320, %v1318
        %v1377 = vpack.c.bf16 %v1325, %v1323
        %v1378 = vpack.c.bf16 %v1330, %v1328
        %v1379 = vld [vmem:[%s3 + $0x4] sm:$0xf]
        %v1380 = vld [vmem:[#allocation3] sm:$0xff]
        %v1381 = vld [vmem:[#allocation3 + $0x8] sm:$0xff]
        %v1382 = vld [vmem:[#allocation3 + $0x10] sm:$0xff]
        %v1383 = vld [vmem:[#allocation3 + $0x18] sm:$0xff]
        %v1384 = vld [vmem:[#allocation3 + $0x20] sm:$0xff]
        %v1385 = vld [vmem:[#allocation3 + $0x28] sm:$0xff]
        %v1386 = vld [vmem:[#allocation3 + $0x30] sm:$0xff]
        %v1387 = vld [vmem:[#allocation3 + $0x38] sm:$0xff]
        %v1388 = vld [vmem:[#allocation3 + $0x40] sm:$0xff]
        %v1389 = vld [vmem:[#allocation3 + $0x48] sm:$0xff]
        %v1390 = vld [vmem:[#allocation3 + $0x50] sm:$0xff]
        %v1391 = vld [vmem:[#allocation3 + $0x58] sm:$0xff]
        %v1392 = vld [vmem:[#allocation3 + $0x60] sm:$0xff]
        %v1393 = vld [vmem:[#allocation3 + $0x68] sm:$0xff]
        %v1394 = vld [vmem:[#allocation3 + $0x70] sm:$0xff]
        %v1395 = vld [vmem:[#allocation3 + $0x78] sm:$0xff]
        %v1396 = vld [vmem:[#allocation3 + $0x80] sm:$0xff]
        %v1397 = vld [vmem:[#allocation3 + $0x88] sm:$0xff]
        %v1398 = vld [vmem:[#allocation3 + $0x90] sm:$0xff]
        %v1399 = vld [vmem:[#allocation3 + $0x98] sm:$0xff]
        %v1400 = vld [vmem:[#allocation3 + $0xa0] sm:$0xff]
        %v1401 = vld [vmem:[#allocation3 + $0xa8] sm:$0xff]
        %v1402 = vld [vmem:[#allocation3 + $0xb0] sm:$0xff]
        %v1403 = vld [vmem:[#allocation3 + $0xb8] sm:$0xff]
        %v1404 = vld [vmem:[#allocation3 + $0xc0] sm:$0xff]
        %v1405 = vld [vmem:[#allocation3 + $0xc8] sm:$0xff]
        %v1406 = vld [vmem:[#allocation3 + $0xd0] sm:$0xff]
        %v1407 = vld [vmem:[#allocation3 + $0xd8] sm:$0xff]
        %v1408 = vld [vmem:[#allocation3 + $0xe0] sm:$0xff]
        %v1409 = vld [vmem:[#allocation3 + $0xe8] sm:$0xff]
        %v1410 = vld [vmem:[#allocation3 + $0xf0] sm:$0xff]
        %v1411 = vld [vmem:[#allocation3 + $0xf8] sm:$0xff]
        %v1413 = vsel %vm701, %v1363, 0
        %v1416 = vsel %vm701, %v1364, 0
        %v1419 = vsel %vm701, %v1365, 0
        %v1422 = vsel %vm701, %v1366, 0
        %v1425 = vsel %vm701, %v1367, 0
        %v1428 = vsel %vm701, %v1368, 0
        %v1431 = vsel %vm701, %v1369, 0
        %v1434 = vsel %vm701, %v1370, 0
        %v1437 = vsel %vm701, %v1371, 0
        %v1440 = vsel %vm701, %v1372, 0
        %v1443 = vsel %vm701, %v1373, 0
        %v1446 = vsel %vm701, %v1374, 0
        %v1449 = vsel %vm701, %v1375, 0
        %v1452 = vsel %vm701, %v1376, 0
        %v1455 = vsel %vm701, %v1377, 0
        %v1458 = vsel %vm701, %v1378, 0
        %v1461 = vsel %vm973, %v1379, 0
        %1463 = vmatprep.subr.bf16.mxu0 0
        %1464 = vmatpush1.bf16.msra.mxu0 %v1461
        %1465 = vmatprep.subr.bf16.mxu0 0
        %1466 = vmatpush1.bf16.msra.mxu0 0
        %1467 = vmatprep.subr.bf16.mxu0 0
        %1468 = vmatpush1.bf16.msra.mxu0 0
        %1469 = vmatprep.subr.bf16.mxu0 0
        %1470 = vmatpush1.bf16.msra.mxu0 0
        %1471 = vmatprep.subr.bf16.mxu0 0
        %1472 = vmatpush1.bf16.msra.mxu0 0
        %1473 = vmatprep.subr.bf16.mxu0 0
        %1474 = vmatpush1.bf16.msra.mxu0 0
        %1475 = vmatprep.subr.bf16.mxu0 0
        %1476 = vmatpush1.bf16.msra.mxu0 0
        %1477 = vmatprep.subr.bf16.mxu0 0
        %1478 = vmatpush1.bf16.msra.mxu0 0
        %1479 = vmatprep.subr.bf16.mxu0 0
        %1480 = vmatpush1.bf16.msra.mxu0 0
        %1481 = vmatprep.subr.bf16.mxu0 0
        %1482 = vmatpush1.bf16.msra.mxu0 0
        %1483 = vmatprep.subr.bf16.mxu0 0
        %1484 = vmatpush1.bf16.msra.mxu0 0
        %1485 = vmatprep.subr.bf16.mxu0 0
        %1486 = vmatpush1.bf16.msra.mxu0 0
        %1487 = vmatprep.subr.bf16.mxu0 0
        %1488 = vmatpush1.bf16.msra.mxu0 0
        %1489 = vmatprep.subr.bf16.mxu0 0
        %1490 = vmatpush1.bf16.msra.mxu0 0
        %1491 = vmatprep.subr.bf16.mxu0 0
        %1492 = vmatpush1.bf16.msra.mxu0 0
        %1493 = vmatprep.subr.bf16.mxu0 0
        %1494 = vmatpush1.bf16.msra.mxu0 0
        %1495 = vmatprep.mubr.bf16.mxu0 0
        %1496 = vmatmul.mubr.bf16.gmra.mrb[0].mxu0 %v1413
        %v1497 = vpop.f32.mrb[0].mxu0
        %v1498 = vadd.f32 0.0, %v1497
        %v1499 = vpop.f32.mrb[0].mxu0
        %v1500 = vpop.f32.mrb[0].mxu0
        %v1501 = vadd.f32 0.0, %v1500
        %v1502 = vpop.f32.mrb[0].mxu0
        %1503 = vmatprep.mubr.bf16.mxu0 0
        %1504 = vmatmul.mubr.bf16.gmra.mrb[0].mxu0 %v1416
        %v1505 = vpop.f32.mrb[0].mxu0
        %v1506 = vadd.f32 0.0, %v1505
        %v1507 = vpop.f32.mrb[0].mxu0
        %v1508 = vpop.f32.mrb[0].mxu0
        %v1509 = vadd.f32 0.0, %v1508
        %v1510 = vpop.f32.mrb[0].mxu0
        %1511 = vmatprep.mubr.bf16.mxu0 0
        %1512 = vmatmul.mubr.bf16.gmra.mrb[0].mxu0 %v1419
        %v1513 = vpop.f32.mrb[0].mxu0
        %v1514 = vadd.f32 0.0, %v1513
        %v1515 = vpop.f32.mrb[0].mxu0
        %v1516 = vpop.f32.mrb[0].mxu0
        %v1517 = vadd.f32 0.0, %v1516
        %v1518 = vpop.f32.mrb[0].mxu0
        %1519 = vmatprep.mubr.bf16.mxu0 0
        %1520 = vmatmul.mubr.bf16.gmra.mrb[0].mxu0 %v1422
        %v1521 = vpop.f32.mrb[0].mxu0
        %v1522 = vadd.f32 0.0, %v1521
        %v1523 = vpop.f32.mrb[0].mxu0
        %v1524 = vpop.f32.mrb[0].mxu0
        %v1525 = vadd.f32 0.0, %v1524
        %v1526 = vpop.f32.mrb[0].mxu0
        %1527 = vmatprep.mubr.bf16.mxu0 0
        %1528 = vmatmul.mubr.bf16.gmra.mrb[0].mxu0 %v1425
        %v1529 = vpop.f32.mrb[0].mxu0
        %v1530 = vadd.f32 0.0, %v1529
        %v1531 = vpop.f32.mrb[0].mxu0
        %v1532 = vpop.f32.mrb[0].mxu0
        %v1533 = vadd.f32 0.0, %v1532
        %v1534 = vpop.f32.mrb[0].mxu0
        %1535 = vmatprep.mubr.bf16.mxu0 0
        %1536 = vmatmul.mubr.bf16.gmra.mrb[0].mxu0 %v1428
        %v1537 = vpop.f32.mrb[0].mxu0
        %v1538 = vadd.f32 0.0, %v1537
        %v1539 = vpop.f32.mrb[0].mxu0
        %v1540 = vpop.f32.mrb[0].mxu0
        %v1541 = vadd.f32 0.0, %v1540
        %v1542 = vpop.f32.mrb[0].mxu0
        %1543 = vmatprep.mubr.bf16.mxu0 0
        %1544 = vmatmul.mubr.bf16.gmra.mrb[0].mxu0 %v1431
        %v1545 = vpop.f32.mrb[0].mxu0
        %v1546 = vadd.f32 0.0, %v1545
        %v1547 = vpop.f32.mrb[0].mxu0
        %v1548 = vpop.f32.mrb[0].mxu0
        %v1549 = vadd.f32 0.0, %v1548
        %v1550 = vpop.f32.mrb[0].mxu0
        %1551 = vmatprep.mubr.bf16.mxu0 0
        %1552 = vmatmul.mubr.bf16.gmra.mrb[0].mxu0 %v1434
        %v1553 = vpop.f32.mrb[0].mxu0
        %v1554 = vadd.f32 0.0, %v1553
        %v1555 = vpop.f32.mrb[0].mxu0
        %v1556 = vpop.f32.mrb[0].mxu0
        %v1557 = vadd.f32 0.0, %v1556
        %v1558 = vpop.f32.mrb[0].mxu0
        %1559 = vmatprep.mubr.bf16.mxu0 0
        %1560 = vmatmul.mubr.bf16.gmra.mrb[0].mxu0 %v1437
        %v1561 = vpop.f32.mrb[0].mxu0
        %v1562 = vadd.f32 0.0, %v1561
        %v1563 = vpop.f32.mrb[0].mxu0
        %v1564 = vpop.f32.mrb[0].mxu0
        %v1565 = vadd.f32 0.0, %v1564
        %v1566 = vpop.f32.mrb[0].mxu0
        %1567 = vmatprep.mubr.bf16.mxu0 0
        %1568 = vmatmul.mubr.bf16.gmra.mrb[0].mxu0 %v1440
        %v1569 = vpop.f32.mrb[0].mxu0
        %v1570 = vadd.f32 0.0, %v1569
        %v1571 = vpop.f32.mrb[0].mxu0
        %v1572 = vpop.f32.mrb[0].mxu0
        %v1573 = vadd.f32 0.0, %v1572
        %v1574 = vpop.f32.mrb[0].mxu0
        %1575 = vmatprep.mubr.bf16.mxu0 0
        %1576 = vmatmul.mubr.bf16.gmra.mrb[0].mxu0 %v1443
        %v1577 = vpop.f32.mrb[0].mxu0
        %v1578 = vadd.f32 0.0, %v1577
        %v1579 = vpop.f32.mrb[0].mxu0
        %v1580 = vpop.f32.mrb[0].mxu0
        %v1581 = vadd.f32 0.0, %v1580
        %v1582 = vpop.f32.mrb[0].mxu0
        %1583 = vmatprep.mubr.bf16.mxu0 0
        %1584 = vmatmul.mubr.bf16.gmra.mrb[0].mxu0 %v1446
        %v1585 = vpop.f32.mrb[0].mxu0
        %v1586 = vadd.f32 0.0, %v1585
        %v1587 = vpop.f32.mrb[0].mxu0
        %v1588 = vpop.f32.mrb[0].mxu0
        %v1589 = vadd.f32 0.0, %v1588
        %v1590 = vpop.f32.mrb[0].mxu0
        %1591 = vmatprep.mubr.bf16.mxu0 0
        %1592 = vmatmul.mubr.bf16.gmra.mrb[0].mxu0 %v1449
        %v1593 = vpop.f32.mrb[0].mxu0
        %v1594 = vadd.f32 0.0, %v1593
        %v1595 = vpop.f32.mrb[0].mxu0
        %v1596 = vpop.f32.mrb[0].mxu0
        %v1597 = vadd.f32 0.0, %v1596
        %v1598 = vpop.f32.mrb[0].mxu0
        %1599 = vmatprep.mubr.bf16.mxu0 0
        %1600 = vmatmul.mubr.bf16.gmra.mrb[0].mxu0 %v1452
        %v1601 = vpop.f32.mrb[0].mxu0
        %v1602 = vadd.f32 0.0, %v1601
        %v1603 = vpop.f32.mrb[0].mxu0
        %v1604 = vpop.f32.mrb[0].mxu0
        %v1605 = vadd.f32 0.0, %v1604
        %v1606 = vpop.f32.mrb[0].mxu0
        %1607 = vmatprep.mubr.bf16.mxu0 0
        %1608 = vmatmul.mubr.bf16.gmra.mrb[0].mxu0 %v1455
        %v1609 = vpop.f32.mrb[0].mxu0
        %v1610 = vadd.f32 0.0, %v1609
        %v1611 = vpop.f32.mrb[0].mxu0
        %v1612 = vpop.f32.mrb[0].mxu0
        %v1613 = vadd.f32 0.0, %v1612
        %v1614 = vpop.f32.mrb[0].mxu0
        %1615 = vmatprep.mubr.bf16.mxu0 0
        %1616 = vmatmul.mubr.bf16.gmra.mrb[0].mxu0 %v1458
        %v1617 = vpop.f32.mrb[0].mxu0
        %v1618 = vadd.f32 0.0, %v1617
        %v1619 = vpop.f32.mrb[0].mxu0
        %v1620 = vpop.f32.mrb[0].mxu0
        %v1621 = vadd.f32 0.0, %v1620
        %v1622 = vpop.f32.mrb[0].mxu0
        %1623 = vdwg.mxu0
        %v1624 = vadd.f32 %v1380, %v1498
        %v1625 = vadd.f32 %v1381, %v1501
        %v1626 = vadd.f32 %v1382, %v1506
        %v1627 = vadd.f32 %v1383, %v1509
        %v1628 = vadd.f32 %v1384, %v1514
        %v1629 = vadd.f32 %v1385, %v1517
        %v1630 = vadd.f32 %v1386, %v1522
        %v1631 = vadd.f32 %v1387, %v1525
        %v1632 = vadd.f32 %v1388, %v1530
        %v1633 = vadd.f32 %v1389, %v1533
        %v1634 = vadd.f32 %v1390, %v1538
        %v1635 = vadd.f32 %v1391, %v1541
        %v1636 = vadd.f32 %v1392, %v1546
        %v1637 = vadd.f32 %v1393, %v1549
        %v1638 = vadd.f32 %v1394, %v1554
        %v1639 = vadd.f32 %v1395, %v1557
        %v1640 = vadd.f32 %v1396, %v1562
        %v1641 = vadd.f32 %v1397, %v1565
        %v1642 = vadd.f32 %v1398, %v1570
        %v1643 = vadd.f32 %v1399, %v1573
        %v1644 = vadd.f32 %v1400, %v1578
        %v1645 = vadd.f32 %v1401, %v1581
        %v1646 = vadd.f32 %v1402, %v1586
        %v1647 = vadd.f32 %v1403, %v1589
        %v1648 = vadd.f32 %v1404, %v1594
        %v1649 = vadd.f32 %v1405, %v1597
        %v1650 = vadd.f32 %v1406, %v1602
        %v1651 = vadd.f32 %v1407, %v1605
        %v1652 = vadd.f32 %v1408, %v1610
        %v1653 = vadd.f32 %v1409, %v1613
        %v1654 = vadd.f32 %v1410, %v1618
        %v1655 = vadd.f32 %v1411, %v1621
        %1656 = vst.msk [vmem:[#allocation3] sm:$0xff] %vm701, %v1624
        %1657 = vst.msk [vmem:[#allocation3 + $0x8] sm:$0xff] %vm701, %v1625
        %1658 = vst.msk [vmem:[#allocation3 + $0x10] sm:$0xff] %vm701, %v1626
        %1659 = vst.msk [vmem:[#allocation3 + $0x18] sm:$0xff] %vm701, %v1627
        %1660 = vst.msk [vmem:[#allocation3 + $0x20] sm:$0xff] %vm701, %v1628
        %1661 = vst.msk [vmem:[#allocation3 + $0x28] sm:$0xff] %vm701, %v1629
        %1662 = vst.msk [vmem:[#allocation3 + $0x30] sm:$0xff] %vm701, %v1630
        %1663 = vst.msk [vmem:[#allocation3 + $0x38] sm:$0xff] %vm701, %v1631
        %1664 = vst.msk [vmem:[#allocation3 + $0x40] sm:$0xff] %vm701, %v1632
        %1665 = vst.msk [vmem:[#allocation3 + $0x48] sm:$0xff] %vm701, %v1633
        %1666 = vst.msk [vmem:[#allocation3 + $0x50] sm:$0xff] %vm701, %v1634
        %1667 = vst.msk [vmem:[#allocation3 + $0x58] sm:$0xff] %vm701, %v1635
        %1668 = vst.msk [vmem:[#allocation3 + $0x60] sm:$0xff] %vm701, %v1636
        %1669 = vst.msk [vmem:[#allocation3 + $0x68] sm:$0xff] %vm701, %v1637
        %1670 = vst.msk [vmem:[#allocation3 + $0x70] sm:$0xff] %vm701, %v1638
        %1671 = vst.msk [vmem:[#allocation3 + $0x78] sm:$0xff] %vm701, %v1639
        %1672 = vst.msk [vmem:[#allocation3 + $0x80] sm:$0xff] %vm701, %v1640
        %1673 = vst.msk [vmem:[#allocation3 + $0x88] sm:$0xff] %vm701, %v1641
        %1674 = vst.msk [vmem:[#allocation3 + $0x90] sm:$0xff] %vm701, %v1642
        %1675 = vst.msk [vmem:[#allocation3 + $0x98] sm:$0xff] %vm701, %v1643
        %1676 = vst.msk [vmem:[#allocation3 + $0xa0] sm:$0xff] %vm701, %v1644
        %1677 = vst.msk [vmem:[#allocation3 + $0xa8] sm:$0xff] %vm701, %v1645
        %1678 = vst.msk [vmem:[#allocation3 + $0xb0] sm:$0xff] %vm701, %v1646
        %1679 = vst.msk [vmem:[#allocation3 + $0xb8] sm:$0xff] %vm701, %v1647
        %1680 = vst.msk [vmem:[#allocation3 + $0xc0] sm:$0xff] %vm701, %v1648
        %1681 = vst.msk [vmem:[#allocation3 + $0xc8] sm:$0xff] %vm701, %v1649
        %1682 = vst.msk [vmem:[#allocation3 + $0xd0] sm:$0xff] %vm701, %v1650
        %1683 = vst.msk [vmem:[#allocation3 + $0xd8] sm:$0xff] %vm701, %v1651
        %1684 = vst.msk [vmem:[#allocation3 + $0xe0] sm:$0xff] %vm701, %v1652
        %1685 = vst.msk [vmem:[#allocation3 + $0xe8] sm:$0xff] %vm701, %v1653
        %1686 = vst.msk [vmem:[#allocation3 + $0xf0] sm:$0xff] %vm701, %v1654
        %1687 = vst.msk [vmem:[#allocation3 + $0xf8] sm:$0xff] %vm701, %v1655
        %vm1688 = vcmask 1045504
        %v1689 = vrot.slane %v790, 2
        %v1690 = vrot.slane %v791, 2
        %v1691 = vsel %vm1688, %v1689, %v1690
        %v1692 = vrot.slane %v792, 2
        %v1693 = vsel %vm1688, %v1690, %v1692
        %v1694 = vrot.slane %v793, 2
        %v1695 = vrot.slane %v794, 2
        %v1696 = vsel %vm1688, %v1694, %v1695
        %v1697 = vrot.slane %v795, 2
        %v1698 = vsel %vm1688, %v1695, %v1697
        %v1699 = vrot.slane %v796, 2
        %v1700 = vrot.slane %v797, 2
        %v1701 = vsel %vm1688, %v1699, %v1700
        %v1702 = vrot.slane %v798, 2
        %v1703 = vsel %vm1688, %v1700, %v1702
        %v1704 = vrot.slane %v799, 2
        %v1705 = vrot.slane %v800, 2
        %v1706 = vsel %vm1688, %v1704, %v1705
        %v1707 = vrot.slane %v801, 2
        %v1708 = vsel %vm1688, %v1705, %v1707
        %v1709 = vrot.slane %v802, 2
        %v1710 = vrot.slane %v803, 2
        %v1711 = vsel %vm1688, %v1709, %v1710
        %v1712 = vrot.slane %v804, 2
        %v1713 = vsel %vm1688, %v1710, %v1712
        %v1714 = vrot.slane %v805, 2
        %v1715 = vrot.slane %v806, 2
        %v1716 = vsel %vm1688, %v1714, %v1715
        %v1717 = vrot.slane %v807, 2
        %v1718 = vsel %vm1688, %v1715, %v1717
        %v1719 = vrot.slane %v808, 2
        %v1720 = vrot.slane %v809, 2
        %v1721 = vsel %vm1688, %v1719, %v1720
        %v1722 = vrot.slane %v810, 2
        %v1723 = vsel %vm1688, %v1720, %v1722
        %v1724 = vrot.slane %v811, 2
        %v1725 = vrot.slane %v812, 2
        %v1726 = vsel %vm1688, %v1724, %v1725
        %v1727 = vrot.slane %v813, 2
        %v1728 = vsel %vm1688, %v1725, %v1727
        %v1729 = vrot.slane %v814, 2
        %v1730 = vrot.slane %v815, 2
        %v1731 = vsel %vm1688, %v1729, %v1730
        %v1732 = vrot.slane %v816, 2
        %v1733 = vsel %vm1688, %v1730, %v1732
        %v1734 = vrot.slane %v817, 2
        %v1735 = vrot.slane %v818, 2
        %v1736 = vsel %vm1688, %v1734, %v1735
        %v1737 = vrot.slane %v819, 2
        %v1738 = vsel %vm1688, %v1735, %v1737
        %v1739 = vrot.slane %v820, 2
        %v1740 = vrot.slane %v821, 2
        %v1741 = vsel %vm1688, %v1739, %v1740
        %v1742 = vrot.slane %v822, 2
        %v1743 = vsel %vm1688, %v1740, %v1742
        %v1744 = vrot.slane %v823, 2
        %v1745 = vrot.slane %v824, 2
        %v1746 = vsel %vm1688, %v1744, %v1745
        %v1747 = vrot.slane %v825, 2
        %v1748 = vsel %vm1688, %v1745, %v1747
        %v1749 = vrot.slane %v826, 2
        %v1750 = vrot.slane %v827, 2
        %v1751 = vsel %vm1688, %v1749, %v1750
        %v1752 = vrot.slane %v828, 2
        %v1753 = vsel %vm1688, %v1750, %v1752
        %v1754 = vrot.slane %v829, 2
        %v1755 = vrot.slane %v830, 2
        %v1756 = vsel %vm1688, %v1754, %v1755
        %v1757 = vrot.slane %v831, 2
        %v1758 = vsel %vm1688, %v1755, %v1757
        %v1759 = vrot.slane %v832, 2
        %v1760 = vrot.slane %v833, 2
        %v1761 = vsel %vm1688, %v1759, %v1760
        %v1762 = vrot.slane %v834, 2
        %v1763 = vsel %vm1688, %v1760, %v1762
        %v1764 = vrot.slane %v835, 2
        %v1765 = vrot.slane %v836, 2
        %v1766 = vsel %vm1688, %v1764, %v1765
        %v1767 = vrot.slane %v837, 2
        %v1768 = vsel %vm1688, %v1765, %v1767
        %v1801 = vpack.c.bf16 %v1693, %v1691
        %v1802 = vpack.c.bf16 %v1698, %v1696
        %v1803 = vpack.c.bf16 %v1703, %v1701
        %v1804 = vpack.c.bf16 %v1708, %v1706
        %v1805 = vpack.c.bf16 %v1713, %v1711
        %v1806 = vpack.c.bf16 %v1718, %v1716
        %v1807 = vpack.c.bf16 %v1723, %v1721
        %v1808 = vpack.c.bf16 %v1728, %v1726
        %v1809 = vpack.c.bf16 %v1733, %v1731
        %v1810 = vpack.c.bf16 %v1738, %v1736
        %v1811 = vpack.c.bf16 %v1743, %v1741
        %v1812 = vpack.c.bf16 %v1748, %v1746
        %v1813 = vpack.c.bf16 %v1753, %v1751
        %v1814 = vpack.c.bf16 %v1758, %v1756
        %v1815 = vpack.c.bf16 %v1763, %v1761
        %v1816 = vpack.c.bf16 %v1768, %v1766
        %v1817 = vld [vmem:[%s3 + $0x8] sm:$0xf]
        %v1818 = vld [vmem:[#allocation3] sm:$0xff]
        %v1819 = vld [vmem:[#allocation3 + $0x8] sm:$0xff]
        %v1820 = vld [vmem:[#allocation3 + $0x10] sm:$0xff]
        %v1821 = vld [vmem:[#allocation3 + $0x18] sm:$0xff]
        %v1822 = vld [vmem:[#allocation3 + $0x20] sm:$0xff]
        %v1823 = vld [vmem:[#allocation3 + $0x28] sm:$0xff]
        %v1824 = vld [vmem:[#allocation3 + $0x30] sm:$0xff]
        %v1825 = vld [vmem:[#allocation3 + $0x38] sm:$0xff]
        %v1826 = vld [vmem:[#allocation3 + $0x40] sm:$0xff]
        %v1827 = vld [vmem:[#allocation3 + $0x48] sm:$0xff]
        %v1828 = vld [vmem:[#allocation3 + $0x50] sm:$0xff]
        %v1829 = vld [vmem:[#allocation3 + $0x58] sm:$0xff]
        %v1830 = vld [vmem:[#allocation3 + $0x60] sm:$0xff]
        %v1831 = vld [vmem:[#allocation3 + $0x68] sm:$0xff]
        %v1832 = vld [vmem:[#allocation3 + $0x70] sm:$0xff]
        %v1833 = vld [vmem:[#allocation3 + $0x78] sm:$0xff]
        %v1834 = vld [vmem:[#allocation3 + $0x80] sm:$0xff]
        %v1835 = vld [vmem:[#allocation3 + $0x88] sm:$0xff]
        %v1836 = vld [vmem:[#allocation3 + $0x90] sm:$0xff]
        %v1837 = vld [vmem:[#allocation3 + $0x98] sm:$0xff]
        %v1838 = vld [vmem:[#allocation3 + $0xa0] sm:$0xff]
        %v1839 = vld [vmem:[#allocation3 + $0xa8] sm:$0xff]
        %v1840 = vld [vmem:[#allocation3 + $0xb0] sm:$0xff]
        %v1841 = vld [vmem:[#allocation3 + $0xb8] sm:$0xff]
        %v1842 = vld [vmem:[#allocation3 + $0xc0] sm:$0xff]
        %v1843 = vld [vmem:[#allocation3 + $0xc8] sm:$0xff]
        %v1844 = vld [vmem:[#allocation3 + $0xd0] sm:$0xff]
        %v1845 = vld [vmem:[#allocation3 + $0xd8] sm:$0xff]
        %v1846 = vld [vmem:[#allocation3 + $0xe0] sm:$0xff]
        %v1847 = vld [vmem:[#allocation3 + $0xe8] sm:$0xff]
        %v1848 = vld [vmem:[#allocation3 + $0xf0] sm:$0xff]
        %v1849 = vld [vmem:[#allocation3 + $0xf8] sm:$0xff]
        %v1851 = vsel %vm701, %v1801, 0
        %v1854 = vsel %vm701, %v1802, 0
        %v1857 = vsel %vm701, %v1803, 0
        %v1860 = vsel %vm701, %v1804, 0
        %v1863 = vsel %vm701, %v1805, 0
        %v1866 = vsel %vm701, %v1806, 0
        %v1869 = vsel %vm701, %v1807, 0
        %v1872 = vsel %vm701, %v1808, 0
        %v1875 = vsel %vm701, %v1809, 0
        %v1878 = vsel %vm701, %v1810, 0
        %v1881 = vsel %vm701, %v1811, 0
        %v1884 = vsel %vm701, %v1812, 0
        %v1887 = vsel %vm701, %v1813, 0
        %v1890 = vsel %vm701, %v1814, 0
        %v1893 = vsel %vm701, %v1815, 0
        %v1896 = vsel %vm701, %v1816, 0
        %v1899 = vsel %vm973, %v1817, 0
        %1901 = vmatprep.subr.bf16.mxu0 0
        %1902 = vmatpush1.bf16.msra.mxu0 %v1899
        %1903 = vmatprep.subr.bf16.mxu0 0
        %1904 = vmatpush1.bf16.msra.mxu0 0
        %1905 = vmatprep.subr.bf16.mxu0 0
        %1906 = vmatpush1.bf16.msra.mxu0 0
        %1907 = vmatprep.subr.bf16.mxu0 0
        %1908 = vmatpush1.bf16.msra.mxu0 0
        %1909 = vmatprep.subr.bf16.mxu0 0
        %1910 = vmatpush1.bf16.msra.mxu0 0
        %1911 = vmatprep.subr.bf16.mxu0 0
        %1912 = vmatpush1.bf16.msra.mxu0 0
        %1913 = vmatprep.subr.bf16.mxu0 0
        %1914 = vmatpush1.bf16.msra.mxu0 0
        %1915 = vmatprep.subr.bf16.mxu0 0
        %1916 = vmatpush1.bf16.msra.mxu0 0
        %1917 = vmatprep.subr.bf16.mxu0 0
        %1918 = vmatpush1.bf16.msra.mxu0 0
        %1919 = vmatprep.subr.bf16.mxu0 0
        %1920 = vmatpush1.bf16.msra.mxu0 0
        %1921 = vmatprep.subr.bf16.mxu0 0
        %1922 = vmatpush1.bf16.msra.mxu0 0
        %1923 = vmatprep.subr.bf16.mxu0 0
        %1924 = vmatpush1.bf16.msra.mxu0 0
        %1925 = vmatprep.subr.bf16.mxu0 0
        %1926 = vmatpush1.bf16.msra.mxu0 0
        %1927 = vmatprep.subr.bf16.mxu0 0
        %1928 = vmatpush1.bf16.msra.mxu0 0
        %1929 = vmatprep.subr.bf16.mxu0 0
        %1930 = vmatpush1.bf16.msra.mxu0 0
        %1931 = vmatprep.subr.bf16.mxu0 0
        %1932 = vmatpush1.bf16.msra.mxu0 0
        %1933 = vmatprep.mubr.bf16.mxu0 0
        %1934 = vmatmul.mubr.bf16.gmra.mrb[0].mxu0 %v1851
        %v1935 = vpop.f32.mrb[0].mxu0
        %v1936 = vadd.f32 0.0, %v1935
        %v1937 = vpop.f32.mrb[0].mxu0
        %v1938 = vpop.f32.mrb[0].mxu0
        %v1939 = vadd.f32 0.0, %v1938
        %v1940 = vpop.f32.mrb[0].mxu0
        %1941 = vmatprep.mubr.bf16.mxu0 0
        %1942 = vmatmul.mubr.bf16.gmra.mrb[0].mxu0 %v1854
        %v1943 = vpop.f32.mrb[0].mxu0
        %v1944 = vadd.f32 0.0, %v1943
        %v1945 = vpop.f32.mrb[0].mxu0
        %v1946 = vpop.f32.mrb[0].mxu0
        %v1947 = vadd.f32 0.0, %v1946
        %v1948 = vpop.f32.mrb[0].mxu0
        %1949 = vmatprep.mubr.bf16.mxu0 0
        %1950 = vmatmul.mubr.bf16.gmra.mrb[0].mxu0 %v1857
        %v1951 = vpop.f32.mrb[0].mxu0
        %v1952 = vadd.f32 0.0, %v1951
        %v1953 = vpop.f32.mrb[0].mxu0
        %v1954 = vpop.f32.mrb[0].mxu0
        %v1955 = vadd.f32 0.0, %v1954
        %v1956 = vpop.f32.mrb[0].mxu0
        %1957 = vmatprep.mubr.bf16.mxu0 0
        %1958 = vmatmul.mubr.bf16.gmra.mrb[0].mxu0 %v1860
        %v1959 = vpop.f32.mrb[0].mxu0
        %v1960 = vadd.f32 0.0, %v1959
        %v1961 = vpop.f32.mrb[0].mxu0
        %v1962 = vpop.f32.mrb[0].mxu0
        %v1963 = vadd.f32 0.0, %v1962
        %v1964 = vpop.f32.mrb[0].mxu0
        %1965 = vmatprep.mubr.bf16.mxu0 0
        %1966 = vmatmul.mubr.bf16.gmra.mrb[0].mxu0 %v1863
        %v1967 = vpop.f32.mrb[0].mxu0
        %v1968 = vadd.f32 0.0, %v1967
        %v1969 = vpop.f32.mrb[0].mxu0
        %v1970 = vpop.f32.mrb[0].mxu0
        %v1971 = vadd.f32 0.0, %v1970
        %v1972 = vpop.f32.mrb[0].mxu0
        %1973 = vmatprep.mubr.bf16.mxu0 0
        %1974 = vmatmul.mubr.bf16.gmra.mrb[0].mxu0 %v1866
        %v1975 = vpop.f32.mrb[0].mxu0
        %v1976 = vadd.f32 0.0, %v1975
        %v1977 = vpop.f32.mrb[0].mxu0
        %v1978 = vpop.f32.mrb[0].mxu0
        %v1979 = vadd.f32 0.0, %v1978
        %v1980 = vpop.f32.mrb[0].mxu0
        %1981 = vmatprep.mubr.bf16.mxu0 0
        %1982 = vmatmul.mubr.bf16.gmra.mrb[0].mxu0 %v1869
        %v1983 = vpop.f32.mrb[0].mxu0
        %v1984 = vadd.f32 0.0, %v1983
        %v1985 = vpop.f32.mrb[0].mxu0
        %v1986 = vpop.f32.mrb[0].mxu0
        %v1987 = vadd.f32 0.0, %v1986
        %v1988 = vpop.f32.mrb[0].mxu0
        %1989 = vmatprep.mubr.bf16.mxu0 0
        %1990 = vmatmul.mubr.bf16.gmra.mrb[0].mxu0 %v1872
        %v1991 = vpop.f32.mrb[0].mxu0
        %v1992 = vadd.f32 0.0, %v1991
        %v1993 = vpop.f32.mrb[0].mxu0
        %v1994 = vpop.f32.mrb[0].mxu0
        %v1995 = vadd.f32 0.0, %v1994
        %v1996 = vpop.f32.mrb[0].mxu0
        %1997 = vmatprep.mubr.bf16.mxu0 0
        %1998 = vmatmul.mubr.bf16.gmra.mrb[0].mxu0 %v1875
        %v1999 = vpop.f32.mrb[0].mxu0
        %v2000 = vadd.f32 0.0, %v1999
        %v2001 = vpop.f32.mrb[0].mxu0
        %v2002 = vpop.f32.mrb[0].mxu0
        %v2003 = vadd.f32 0.0, %v2002
        %v2004 = vpop.f32.mrb[0].mxu0
        %2005 = vmatprep.mubr.bf16.mxu0 0
        %2006 = vmatmul.mubr.bf16.gmra.mrb[0].mxu0 %v1878
        %v2007 = vpop.f32.mrb[0].mxu0
        %v2008 = vadd.f32 0.0, %v2007
        %v2009 = vpop.f32.mrb[0].mxu0
        %v2010 = vpop.f32.mrb[0].mxu0
        %v2011 = vadd.f32 0.0, %v2010
        %v2012 = vpop.f32.mrb[0].mxu0
        %2013 = vmatprep.mubr.bf16.mxu0 0
        %2014 = vmatmul.mubr.bf16.gmra.mrb[0].mxu0 %v1881
        %v2015 = vpop.f32.mrb[0].mxu0
        %v2016 = vadd.f32 0.0, %v2015
        %v2017 = vpop.f32.mrb[0].mxu0
        %v2018 = vpop.f32.mrb[0].mxu0
        %v2019 = vadd.f32 0.0, %v2018
        %v2020 = vpop.f32.mrb[0].mxu0
        %2021 = vmatprep.mubr.bf16.mxu0 0
        %2022 = vmatmul.mubr.bf16.gmra.mrb[0].mxu0 %v1884
        %v2023 = vpop.f32.mrb[0].mxu0
        %v2024 = vadd.f32 0.0, %v2023
        %v2025 = vpop.f32.mrb[0].mxu0
        %v2026 = vpop.f32.mrb[0].mxu0
        %v2027 = vadd.f32 0.0, %v2026
        %v2028 = vpop.f32.mrb[0].mxu0
        %2029 = vmatprep.mubr.bf16.mxu0 0
        %2030 = vmatmul.mubr.bf16.gmra.mrb[0].mxu0 %v1887
        %v2031 = vpop.f32.mrb[0].mxu0
        %v2032 = vadd.f32 0.0, %v2031
        %v2033 = vpop.f32.mrb[0].mxu0
        %v2034 = vpop.f32.mrb[0].mxu0
        %v2035 = vadd.f32 0.0, %v2034
        %v2036 = vpop.f32.mrb[0].mxu0
        %2037 = vmatprep.mubr.bf16.mxu0 0
        %2038 = vmatmul.mubr.bf16.gmra.mrb[0].mxu0 %v1890
        %v2039 = vpop.f32.mrb[0].mxu0
        %v2040 = vadd.f32 0.0, %v2039
        %v2041 = vpop.f32.mrb[0].mxu0
        %v2042 = vpop.f32.mrb[0].mxu0
        %v2043 = vadd.f32 0.0, %v2042
        %v2044 = vpop.f32.mrb[0].mxu0
        %2045 = vmatprep.mubr.bf16.mxu0 0
        %2046 = vmatmul.mubr.bf16.gmra.mrb[0].mxu0 %v1893
        %v2047 = vpop.f32.mrb[0].mxu0
        %v2048 = vadd.f32 0.0, %v2047
        %v2049 = vpop.f32.mrb[0].mxu0
        %v2050 = vpop.f32.mrb[0].mxu0
        %v2051 = vadd.f32 0.0, %v2050
        %v2052 = vpop.f32.mrb[0].mxu0
        %2053 = vmatprep.mubr.bf16.mxu0 0
        %2054 = vmatmul.mubr.bf16.gmra.mrb[0].mxu0 %v1896
        %v2055 = vpop.f32.mrb[0].mxu0
        %v2056 = vadd.f32 0.0, %v2055
        %v2057 = vpop.f32.mrb[0].mxu0
        %v2058 = vpop.f32.mrb[0].mxu0
        %v2059 = vadd.f32 0.0, %v2058
        %v2060 = vpop.f32.mrb[0].mxu0
        %2061 = vdwg.mxu0
        %v2062 = vadd.f32 %v1818, %v1936
        %v2063 = vadd.f32 %v1819, %v1939
        %v2064 = vadd.f32 %v1820, %v1944
        %v2065 = vadd.f32 %v1821, %v1947
        %v2066 = vadd.f32 %v1822, %v1952
        %v2067 = vadd.f32 %v1823, %v1955
        %v2068 = vadd.f32 %v1824, %v1960
        %v2069 = vadd.f32 %v1825, %v1963
        %v2070 = vadd.f32 %v1826, %v1968
        %v2071 = vadd.f32 %v1827, %v1971
        %v2072 = vadd.f32 %v1828, %v1976
        %v2073 = vadd.f32 %v1829, %v1979
        %v2074 = vadd.f32 %v1830, %v1984
        %v2075 = vadd.f32 %v1831, %v1987
        %v2076 = vadd.f32 %v1832, %v1992
        %v2077 = vadd.f32 %v1833, %v1995
        %v2078 = vadd.f32 %v1834, %v2000
        %v2079 = vadd.f32 %v1835, %v2003
        %v2080 = vadd.f32 %v1836, %v2008
        %v2081 = vadd.f32 %v1837, %v2011
        %v2082 = vadd.f32 %v1838, %v2016
        %v2083 = vadd.f32 %v1839, %v2019
        %v2084 = vadd.f32 %v1840, %v2024
        %v2085 = vadd.f32 %v1841, %v2027
        %v2086 = vadd.f32 %v1842, %v2032
        %v2087 = vadd.f32 %v1843, %v2035
        %v2088 = vadd.f32 %v1844, %v2040
        %v2089 = vadd.f32 %v1845, %v2043
        %v2090 = vadd.f32 %v1846, %v2048
        %v2091 = vadd.f32 %v1847, %v2051
        %v2092 = vadd.f32 %v1848, %v2056
        %v2093 = vadd.f32 %v1849, %v2059
        %2094 = vst.msk [vmem:[#allocation3] sm:$0xff] %vm701, %v2062
        %2095 = vst.msk [vmem:[#allocation3 + $0x8] sm:$0xff] %vm701, %v2063
        %2096 = vst.msk [vmem:[#allocation3 + $0x10] sm:$0xff] %vm701, %v2064
        %2097 = vst.msk [vmem:[#allocation3 + $0x18] sm:$0xff] %vm701, %v2065
        %2098 = vst.msk [vmem:[#allocation3 + $0x20] sm:$0xff] %vm701, %v2066
        %2099 = vst.msk [vmem:[#allocation3 + $0x28] sm:$0xff] %vm701, %v2067
        %2100 = vst.msk [vmem:[#allocation3 + $0x30] sm:$0xff] %vm701, %v2068
        %2101 = vst.msk [vmem:[#allocation3 + $0x38] sm:$0xff] %vm701, %v2069
        %2102 = vst.msk [vmem:[#allocation3 + $0x40] sm:$0xff] %vm701, %v2070
        %2103 = vst.msk [vmem:[#allocation3 + $0x48] sm:$0xff] %vm701, %v2071
        %2104 = vst.msk [vmem:[#allocation3 + $0x50] sm:$0xff] %vm701, %v2072
        %2105 = vst.msk [vmem:[#allocation3 + $0x58] sm:$0xff] %vm701, %v2073
        %2106 = vst.msk [vmem:[#allocation3 + $0x60] sm:$0xff] %vm701, %v2074
        %2107 = vst.msk [vmem:[#allocation3 + $0x68] sm:$0xff] %vm701, %v2075
        %2108 = vst.msk [vmem:[#allocation3 + $0x70] sm:$0xff] %vm701, %v2076
        %2109 = vst.msk [vmem:[#allocation3 + $0x78] sm:$0xff] %vm701, %v2077
        %2110 = vst.msk [vmem:[#allocation3 + $0x80] sm:$0xff] %vm701, %v2078
        %2111 = vst.msk [vmem:[#allocation3 + $0x88] sm:$0xff] %vm701, %v2079
        %2112 = vst.msk [vmem:[#allocation3 + $0x90] sm:$0xff] %vm701, %v2080
        %2113 = vst.msk [vmem:[#allocation3 + $0x98] sm:$0xff] %vm701, %v2081
        %2114 = vst.msk [vmem:[#allocation3 + $0xa0] sm:$0xff] %vm701, %v2082
        %2115 = vst.msk [vmem:[#allocation3 + $0xa8] sm:$0xff] %vm701, %v2083
        %2116 = vst.msk [vmem:[#allocation3 + $0xb0] sm:$0xff] %vm701, %v2084
        %2117 = vst.msk [vmem:[#allocation3 + $0xb8] sm:$0xff] %vm701, %v2085
        %2118 = vst.msk [vmem:[#allocation3 + $0xc0] sm:$0xff] %vm701, %v2086
        %2119 = vst.msk [vmem:[#allocation3 + $0xc8] sm:$0xff] %vm701, %v2087
        %2120 = vst.msk [vmem:[#allocation3 + $0xd0] sm:$0xff] %vm701, %v2088
        %2121 = vst.msk [vmem:[#allocation3 + $0xd8] sm:$0xff] %vm701, %v2089
        %2122 = vst.msk [vmem:[#allocation3 + $0xe0] sm:$0xff] %vm701, %v2090
        %2123 = vst.msk [vmem:[#allocation3 + $0xe8] sm:$0xff] %vm701, %v2091
        %2124 = vst.msk [vmem:[#allocation3 + $0xf0] sm:$0xff] %vm701, %v2092
        %2125 = vst.msk [vmem:[#allocation3 + $0xf8] sm:$0xff] %vm701, %v2093
        %v2126 = vpack.c.bf16 %v839, %v838
        %v2127 = vld [vmem:[%s3 + $0xc] sm:$0xf]
        %v2128 = vld [vmem:[#allocation3] sm:$0xff]
        %v2129 = vld [vmem:[#allocation3 + $0x8] sm:$0xff]
        %v2130 = vld [vmem:[#allocation3 + $0x10] sm:$0xff]
        %v2131 = vld [vmem:[#allocation3 + $0x18] sm:$0xff]
        %v2132 = vld [vmem:[#allocation3 + $0x20] sm:$0xff]
        %v2133 = vld [vmem:[#allocation3 + $0x28] sm:$0xff]
        %v2134 = vld [vmem:[#allocation3 + $0x30] sm:$0xff]
        %v2135 = vld [vmem:[#allocation3 + $0x38] sm:$0xff]
        %v2136 = vld [vmem:[#allocation3 + $0x40] sm:$0xff]
        %v2137 = vld [vmem:[#allocation3 + $0x48] sm:$0xff]
        %v2138 = vld [vmem:[#allocation3 + $0x50] sm:$0xff]
        %v2139 = vld [vmem:[#allocation3 + $0x58] sm:$0xff]
        %v2140 = vld [vmem:[#allocation3 + $0x60] sm:$0xff]
        %v2141 = vld [vmem:[#allocation3 + $0x68] sm:$0xff]
        %v2142 = vld [vmem:[#allocation3 + $0x70] sm:$0xff]
        %v2143 = vld [vmem:[#allocation3 + $0x78] sm:$0xff]
        %v2144 = vld [vmem:[#allocation3 + $0x80] sm:$0xff]
        %v2145 = vld [vmem:[#allocation3 + $0x88] sm:$0xff]
        %v2146 = vld [vmem:[#allocation3 + $0x90] sm:$0xff]
        %v2147 = vld [vmem:[#allocation3 + $0x98] sm:$0xff]
        %v2148 = vld [vmem:[#allocation3 + $0xa0] sm:$0xff]
        %v2149 = vld [vmem:[#allocation3 + $0xa8] sm:$0xff]
        %v2150 = vld [vmem:[#allocation3 + $0xb0] sm:$0xff]
        %v2151 = vld [vmem:[#allocation3 + $0xb8] sm:$0xff]
        %v2152 = vld [vmem:[#allocation3 + $0xc0] sm:$0xff]
        %v2153 = vld [vmem:[#allocation3 + $0xc8] sm:$0xff]
        %v2154 = vld [vmem:[#allocation3 + $0xd0] sm:$0xff]
        %v2155 = vld [vmem:[#allocation3 + $0xd8] sm:$0xff]
        %v2156 = vld [vmem:[#allocation3 + $0xe0] sm:$0xff]
        %v2157 = vld [vmem:[#allocation3 + $0xe8] sm:$0xff]
        %v2158 = vld [vmem:[#allocation3 + $0xf0] sm:$0xff]
        %v2159 = vld [vmem:[#allocation3 + $0xf8] sm:$0xff]
        %v2161 = vsel %vm701, %v2126, 0
        %v2164 = vsel %vm973, %v2127, 0
        %2166 = vmatprep.subr.bf16.mxu0 0
        %2167 = vmatpush1.bf16.msra.mxu0 %v2164
        %2168 = vmatprep.subr.bf16.mxu0 0
        %2169 = vmatpush1.bf16.msra.mxu0 0
        %2170 = vmatprep.subr.bf16.mxu0 0
        %2171 = vmatpush1.bf16.msra.mxu0 0
        %2172 = vmatprep.subr.bf16.mxu0 0
        %2173 = vmatpush1.bf16.msra.mxu0 0
        %2174 = vmatprep.subr.bf16.mxu0 0
        %2175 = vmatpush1.bf16.msra.mxu0 0
        %2176 = vmatprep.subr.bf16.mxu0 0
        %2177 = vmatpush1.bf16.msra.mxu0 0
        %2178 = vmatprep.subr.bf16.mxu0 0
        %2179 = vmatpush1.bf16.msra.mxu0 0
        %2180 = vmatprep.subr.bf16.mxu0 0
        %2181 = vmatpush1.bf16.msra.mxu0 0
        %2182 = vmatprep.subr.bf16.mxu0 0
        %2183 = vmatpush1.bf16.msra.mxu0 0
        %2184 = vmatprep.subr.bf16.mxu0 0
        %2185 = vmatpush1.bf16.msra.mxu0 0
        %2186 = vmatprep.subr.bf16.mxu0 0
        %2187 = vmatpush1.bf16.msra.mxu0 0
        %2188 = vmatprep.subr.bf16.mxu0 0
        %2189 = vmatpush1.bf16.msra.mxu0 0
        %2190 = vmatprep.subr.bf16.mxu0 0
        %2191 = vmatpush1.bf16.msra.mxu0 0
        %2192 = vmatprep.subr.bf16.mxu0 0
        %2193 = vmatpush1.bf16.msra.mxu0 0
        %2194 = vmatprep.subr.bf16.mxu0 0
        %2195 = vmatpush1.bf16.msra.mxu0 0
        %2196 = vmatprep.subr.bf16.mxu0 0
        %2197 = vmatpush1.bf16.msra.mxu0 0
        %2198 = vmatprep.mubr.bf16.mxu0 0
        %2199 = vmatmul.mubr.bf16.gmra.mrb[0].mxu0 %v929
        %v2200 = vpop.f32.mrb[0].mxu0
        %v2201 = vadd.f32 0.0, %v2200
        %v2202 = vpop.f32.mrb[0].mxu0
        %v2203 = vpop.f32.mrb[0].mxu0
        %v2204 = vadd.f32 0.0, %v2203
        %v2205 = vpop.f32.mrb[0].mxu0
        %2206 = vmatprep.mubr.bf16.mxu0 0
        %2207 = vmatmul.mubr.bf16.gmra.mrb[0].mxu0 %v932
        %v2208 = vpop.f32.mrb[0].mxu0
        %v2209 = vadd.f32 0.0, %v2208
        %v2210 = vpop.f32.mrb[0].mxu0
        %v2211 = vpop.f32.mrb[0].mxu0
        %v2212 = vadd.f32 0.0, %v2211
        %v2213 = vpop.f32.mrb[0].mxu0
        %2214 = vmatprep.mubr.bf16.mxu0 0
        %2215 = vmatmul.mubr.bf16.gmra.mrb[0].mxu0 %v935
        %v2216 = vpop.f32.mrb[0].mxu0
        %v2217 = vadd.f32 0.0, %v2216
        %v2218 = vpop.f32.mrb[0].mxu0
        %v2219 = vpop.f32.mrb[0].mxu0
        %v2220 = vadd.f32 0.0, %v2219
        %v2221 = vpop.f32.mrb[0].mxu0
        %2222 = vmatprep.mubr.bf16.mxu0 0
        %2223 = vmatmul.mubr.bf16.gmra.mrb[0].mxu0 %v938
        %v2224 = vpop.f32.mrb[0].mxu0
        %v2225 = vadd.f32 0.0, %v2224
        %v2226 = vpop.f32.mrb[0].mxu0
        %v2227 = vpop.f32.mrb[0].mxu0
        %v2228 = vadd.f32 0.0, %v2227
        %v2229 = vpop.f32.mrb[0].mxu0
        %2230 = vmatprep.mubr.bf16.mxu0 0
        %2231 = vmatmul.mubr.bf16.gmra.mrb[0].mxu0 %v941
        %v2232 = vpop.f32.mrb[0].mxu0
        %v2233 = vadd.f32 0.0, %v2232
        %v2234 = vpop.f32.mrb[0].mxu0
        %v2235 = vpop.f32.mrb[0].mxu0
        %v2236 = vadd.f32 0.0, %v2235
        %v2237 = vpop.f32.mrb[0].mxu0
        %2238 = vmatprep.mubr.bf16.mxu0 0
        %2239 = vmatmul.mubr.bf16.gmra.mrb[0].mxu0 %v944
        %v2240 = vpop.f32.mrb[0].mxu0
        %v2241 = vadd.f32 0.0, %v2240
        %v2242 = vpop.f32.mrb[0].mxu0
        %v2243 = vpop.f32.mrb[0].mxu0
        %v2244 = vadd.f32 0.0, %v2243
        %v2245 = vpop.f32.mrb[0].mxu0
        %2246 = vmatprep.mubr.bf16.mxu0 0
        %2247 = vmatmul.mubr.bf16.gmra.mrb[0].mxu0 %v947
        %v2248 = vpop.f32.mrb[0].mxu0
        %v2249 = vadd.f32 0.0, %v2248
        %v2250 = vpop.f32.mrb[0].mxu0
        %v2251 = vpop.f32.mrb[0].mxu0
        %v2252 = vadd.f32 0.0, %v2251
        %v2253 = vpop.f32.mrb[0].mxu0
        %2254 = vmatprep.mubr.bf16.mxu0 0
        %2255 = vmatmul.mubr.bf16.gmra.mrb[0].mxu0 %v950
        %v2256 = vpop.f32.mrb[0].mxu0
        %v2257 = vadd.f32 0.0, %v2256
        %v2258 = vpop.f32.mrb[0].mxu0
        %v2259 = vpop.f32.mrb[0].mxu0
        %v2260 = vadd.f32 0.0, %v2259
        %v2261 = vpop.f32.mrb[0].mxu0
        %2262 = vmatprep.mubr.bf16.mxu0 0
        %2263 = vmatmul.mubr.bf16.gmra.mrb[0].mxu0 %v953
        %v2264 = vpop.f32.mrb[0].mxu0
        %v2265 = vadd.f32 0.0, %v2264
        %v2266 = vpop.f32.mrb[0].mxu0
        %v2267 = vpop.f32.mrb[0].mxu0
        %v2268 = vadd.f32 0.0, %v2267
        %v2269 = vpop.f32.mrb[0].mxu0
        %2270 = vmatprep.mubr.bf16.mxu0 0
        %2271 = vmatmul.mubr.bf16.gmra.mrb[0].mxu0 %v956
        %v2272 = vpop.f32.mrb[0].mxu0
        %v2273 = vadd.f32 0.0, %v2272
        %v2274 = vpop.f32.mrb[0].mxu0
        %v2275 = vpop.f32.mrb[0].mxu0
        %v2276 = vadd.f32 0.0, %v2275
        %v2277 = vpop.f32.mrb[0].mxu0
        %2278 = vmatprep.mubr.bf16.mxu0 0
        %2279 = vmatmul.mubr.bf16.gmra.mrb[0].mxu0 %v959
        %v2280 = vpop.f32.mrb[0].mxu0
        %v2281 = vadd.f32 0.0, %v2280
        %v2282 = vpop.f32.mrb[0].mxu0
        %v2283 = vpop.f32.mrb[0].mxu0
        %v2284 = vadd.f32 0.0, %v2283
        %v2285 = vpop.f32.mrb[0].mxu0
        %2286 = vmatprep.mubr.bf16.mxu0 0
        %2287 = vmatmul.mubr.bf16.gmra.mrb[0].mxu0 %v962
        %v2288 = vpop.f32.mrb[0].mxu0
        %v2289 = vadd.f32 0.0, %v2288
        %v2290 = vpop.f32.mrb[0].mxu0
        %v2291 = vpop.f32.mrb[0].mxu0
        %v2292 = vadd.f32 0.0, %v2291
        %v2293 = vpop.f32.mrb[0].mxu0
        %2294 = vmatprep.mubr.bf16.mxu0 0
        %2295 = vmatmul.mubr.bf16.gmra.mrb[0].mxu0 %v965
        %v2296 = vpop.f32.mrb[0].mxu0
        %v2297 = vadd.f32 0.0, %v2296
        %v2298 = vpop.f32.mrb[0].mxu0
        %v2299 = vpop.f32.mrb[0].mxu0
        %v2300 = vadd.f32 0.0, %v2299
        %v2301 = vpop.f32.mrb[0].mxu0
        %2302 = vmatprep.mubr.bf16.mxu0 0
        %2303 = vmatmul.mubr.bf16.gmra.mrb[0].mxu0 %v968
        %v2304 = vpop.f32.mrb[0].mxu0
        %v2305 = vadd.f32 0.0, %v2304
        %v2306 = vpop.f32.mrb[0].mxu0
        %v2307 = vpop.f32.mrb[0].mxu0
        %v2308 = vadd.f32 0.0, %v2307
        %v2309 = vpop.f32.mrb[0].mxu0
        %2310 = vmatprep.mubr.bf16.mxu0 0
        %2311 = vmatmul.mubr.bf16.gmra.mrb[0].mxu0 %v971
        %v2312 = vpop.f32.mrb[0].mxu0
        %v2313 = vadd.f32 0.0, %v2312
        %v2314 = vpop.f32.mrb[0].mxu0
        %v2315 = vpop.f32.mrb[0].mxu0
        %v2316 = vadd.f32 0.0, %v2315
        %v2317 = vpop.f32.mrb[0].mxu0
        %2318 = vmatprep.mubr.bf16.mxu0 0
        %2319 = vmatmul.mubr.bf16.gmra.mrb[0].mxu0 %v2161
        %v2320 = vpop.f32.mrb[0].mxu0
        %v2321 = vadd.f32 0.0, %v2320
        %v2322 = vpop.f32.mrb[0].mxu0
        %v2323 = vpop.f32.mrb[0].mxu0
        %v2324 = vadd.f32 0.0, %v2323
        %v2325 = vpop.f32.mrb[0].mxu0
        %2326 = vdwg.mxu0
        %v2327 = vadd.f32 %v2128, %v2201
        %v2328 = vadd.f32 %v2129, %v2204
        %v2329 = vadd.f32 %v2130, %v2209
        %v2330 = vadd.f32 %v2131, %v2212
        %v2331 = vadd.f32 %v2132, %v2217
        %v2332 = vadd.f32 %v2133, %v2220
        %v2333 = vadd.f32 %v2134, %v2225
        %v2334 = vadd.f32 %v2135, %v2228
        %v2335 = vadd.f32 %v2136, %v2233
        %v2336 = vadd.f32 %v2137, %v2236
        %v2337 = vadd.f32 %v2138, %v2241
        %v2338 = vadd.f32 %v2139, %v2244
        %v2339 = vadd.f32 %v2140, %v2249
        %v2340 = vadd.f32 %v2141, %v2252
        %v2341 = vadd.f32 %v2142, %v2257
        %v2342 = vadd.f32 %v2143, %v2260
        %v2343 = vadd.f32 %v2144, %v2265
        %v2344 = vadd.f32 %v2145, %v2268
        %v2345 = vadd.f32 %v2146, %v2273
        %v2346 = vadd.f32 %v2147, %v2276
        %v2347 = vadd.f32 %v2148, %v2281
        %v2348 = vadd.f32 %v2149, %v2284
        %v2349 = vadd.f32 %v2150, %v2289
        %v2350 = vadd.f32 %v2151, %v2292
        %v2351 = vadd.f32 %v2152, %v2297
        %v2352 = vadd.f32 %v2153, %v2300
        %v2353 = vadd.f32 %v2154, %v2305
        %v2354 = vadd.f32 %v2155, %v2308
        %v2355 = vadd.f32 %v2156, %v2313
        %v2356 = vadd.f32 %v2157, %v2316
        %v2357 = vadd.f32 %v2158, %v2321
        %v2358 = vadd.f32 %v2159, %v2324
        %2359 = vst.msk [vmem:[#allocation3] sm:$0xff] %vm701, %v2327
        %2360 = vst.msk [vmem:[#allocation3 + $0x8] sm:$0xff] %vm701, %v2328
        %2361 = vst.msk [vmem:[#allocation3 + $0x10] sm:$0xff] %vm701, %v2329
        %2362 = vst.msk [vmem:[#allocation3 + $0x18] sm:$0xff] %vm701, %v2330
        %2363 = vst.msk [vmem:[#allocation3 + $0x20] sm:$0xff] %vm701, %v2331
        %2364 = vst.msk [vmem:[#allocation3 + $0x28] sm:$0xff] %vm701, %v2332
        %2365 = vst.msk [vmem:[#allocation3 + $0x30] sm:$0xff] %vm701, %v2333
        %2366 = vst.msk [vmem:[#allocation3 + $0x38] sm:$0xff] %vm701, %v2334
        %2367 = vst.msk [vmem:[#allocation3 + $0x40] sm:$0xff] %vm701, %v2335
        %2368 = vst.msk [vmem:[#allocation3 + $0x48] sm:$0xff] %vm701, %v2336
        %2369 = vst.msk [vmem:[#allocation3 + $0x50] sm:$0xff] %vm701, %v2337
        %2370 = vst.msk [vmem:[#allocation3 + $0x58] sm:$0xff] %vm701, %v2338
        %2371 = vst.msk [vmem:[#allocation3 + $0x60] sm:$0xff] %vm701, %v2339
        %2372 = vst.msk [vmem:[#allocation3 + $0x68] sm:$0xff] %vm701, %v2340
        %2373 = vst.msk [vmem:[#allocation3 + $0x70] sm:$0xff] %vm701, %v2341
        %2374 = vst.msk [vmem:[#allocation3 + $0x78] sm:$0xff] %vm701, %v2342
        %2375 = vst.msk [vmem:[#allocation3 + $0x80] sm:$0xff] %vm701, %v2343
        %2376 = vst.msk [vmem:[#allocation3 + $0x88] sm:$0xff] %vm701, %v2344
        %2377 = vst.msk [vmem:[#allocation3 + $0x90] sm:$0xff] %vm701, %v2345
        %2378 = vst.msk [vmem:[#allocation3 + $0x98] sm:$0xff] %vm701, %v2346
        %2379 = vst.msk [vmem:[#allocation3 + $0xa0] sm:$0xff] %vm701, %v2347
        %2380 = vst.msk [vmem:[#allocation3 + $0xa8] sm:$0xff] %vm701, %v2348
        %2381 = vst.msk [vmem:[#allocation3 + $0xb0] sm:$0xff] %vm701, %v2349
        %2382 = vst.msk [vmem:[#allocation3 + $0xb8] sm:$0xff] %vm701, %v2350
        %2383 = vst.msk [vmem:[#allocation3 + $0xc0] sm:$0xff] %vm701, %v2351
        %2384 = vst.msk [vmem:[#allocation3 + $0xc8] sm:$0xff] %vm701, %v2352
        %2385 = vst.msk [vmem:[#allocation3 + $0xd0] sm:$0xff] %vm701, %v2353
        %2386 = vst.msk [vmem:[#allocation3 + $0xd8] sm:$0xff] %vm701, %v2354
        %2387 = vst.msk [vmem:[#allocation3 + $0xe0] sm:$0xff] %vm701, %v2355
        %2388 = vst.msk [vmem:[#allocation3 + $0xe8] sm:$0xff] %vm701, %v2356
        %2389 = vst.msk [vmem:[#allocation3 + $0xf0] sm:$0xff] %vm701, %v2357
        %2390 = vst.msk [vmem:[#allocation3 + $0xf8] sm:$0xff] %vm701, %v2358
        %v2394 = vrot.slane %v838, 1
        %v2395 = vrot.slane %v839, 1
        %v2396 = vsel %vm1250, %v2394, %v2395
        %v2397 = vrot.slane %v840, 1
        %v2398 = vsel %vm1250, %v2395, %v2397
        %v2401 = vpack.c.bf16 %v2398, %v2396
        %v2402 = vld [vmem:[%s3 + $0x10] sm:$0xf]
        %v2403 = vld [vmem:[#allocation3] sm:$0xff]
        %v2404 = vld [vmem:[#allocation3 + $0x8] sm:$0xff]
        %v2405 = vld [vmem:[#allocation3 + $0x10] sm:$0xff]
        %v2406 = vld [vmem:[#allocation3 + $0x18] sm:$0xff]
        %v2407 = vld [vmem:[#allocation3 + $0x20] sm:$0xff]
        %v2408 = vld [vmem:[#allocation3 + $0x28] sm:$0xff]
        %v2409 = vld [vmem:[#allocation3 + $0x30] sm:$0xff]
        %v2410 = vld [vmem:[#allocation3 + $0x38] sm:$0xff]
        %v2411 = vld [vmem:[#allocation3 + $0x40] sm:$0xff]
        %v2412 = vld [vmem:[#allocation3 + $0x48] sm:$0xff]
        %v2413 = vld [vmem:[#allocation3 + $0x50] sm:$0xff]
        %v2414 = vld [vmem:[#allocation3 + $0x58] sm:$0xff]
        %v2415 = vld [vmem:[#allocation3 + $0x60] sm:$0xff]
        %v2416 = vld [vmem:[#allocation3 + $0x68] sm:$0xff]
        %v2417 = vld [vmem:[#allocation3 + $0x70] sm:$0xff]
        %v2418 = vld [vmem:[#allocation3 + $0x78] sm:$0xff]
        %v2419 = vld [vmem:[#allocation3 + $0x80] sm:$0xff]
        %v2420 = vld [vmem:[#allocation3 + $0x88] sm:$0xff]
        %v2421 = vld [vmem:[#allocation3 + $0x90] sm:$0xff]
        %v2422 = vld [vmem:[#allocation3 + $0x98] sm:$0xff]
        %v2423 = vld [vmem:[#allocation3 + $0xa0] sm:$0xff]
        %v2424 = vld [vmem:[#allocation3 + $0xa8] sm:$0xff]
        %v2425 = vld [vmem:[#allocation3 + $0xb0] sm:$0xff]
        %v2426 = vld [vmem:[#allocation3 + $0xb8] sm:$0xff]
        %v2427 = vld [vmem:[#allocation3 + $0xc0] sm:$0xff]
        %v2428 = vld [vmem:[#allocation3 + $0xc8] sm:$0xff]
        %v2429 = vld [vmem:[#allocation3 + $0xd0] sm:$0xff]
        %v2430 = vld [vmem:[#allocation3 + $0xd8] sm:$0xff]
        %v2431 = vld [vmem:[#allocation3 + $0xe0] sm:$0xff]
        %v2432 = vld [vmem:[#allocation3 + $0xe8] sm:$0xff]
        %v2433 = vld [vmem:[#allocation3 + $0xf0] sm:$0xff]
        %v2434 = vld [vmem:[#allocation3 + $0xf8] sm:$0xff]
        %v2436 = vsel %vm701, %v2401, 0
        %v2439 = vsel %vm973, %v2402, 0
        %2441 = vmatprep.subr.bf16.mxu0 0
        %2442 = vmatpush1.bf16.msra.mxu0 %v2439
        %2443 = vmatprep.subr.bf16.mxu0 0
        %2444 = vmatpush1.bf16.msra.mxu0 0
        %2445 = vmatprep.subr.bf16.mxu0 0
        %2446 = vmatpush1.bf16.msra.mxu0 0
        %2447 = vmatprep.subr.bf16.mxu0 0
        %2448 = vmatpush1.bf16.msra.mxu0 0
        %2449 = vmatprep.subr.bf16.mxu0 0
        %2450 = vmatpush1.bf16.msra.mxu0 0
        %2451 = vmatprep.subr.bf16.mxu0 0
        %2452 = vmatpush1.bf16.msra.mxu0 0
        %2453 = vmatprep.subr.bf16.mxu0 0
        %2454 = vmatpush1.bf16.msra.mxu0 0
        %2455 = vmatprep.subr.bf16.mxu0 0
        %2456 = vmatpush1.bf16.msra.mxu0 0
        %2457 = vmatprep.subr.bf16.mxu0 0
        %2458 = vmatpush1.bf16.msra.mxu0 0
        %2459 = vmatprep.subr.bf16.mxu0 0
        %2460 = vmatpush1.bf16.msra.mxu0 0
        %2461 = vmatprep.subr.bf16.mxu0 0
        %2462 = vmatpush1.bf16.msra.mxu0 0
        %2463 = vmatprep.subr.bf16.mxu0 0
        %2464 = vmatpush1.bf16.msra.mxu0 0
        %2465 = vmatprep.subr.bf16.mxu0 0
        %2466 = vmatpush1.bf16.msra.mxu0 0
        %2467 = vmatprep.subr.bf16.mxu0 0
        %2468 = vmatpush1.bf16.msra.mxu0 0
        %2469 = vmatprep.subr.bf16.mxu0 0
        %2470 = vmatpush1.bf16.msra.mxu0 0
        %2471 = vmatprep.subr.bf16.mxu0 0
        %2472 = vmatpush1.bf16.msra.mxu0 0
        %2473 = vmatprep.mubr.bf16.mxu0 0
        %2474 = vmatmul.mubr.bf16.gmra.mrb[0].mxu0 %v1416
        %v2475 = vpop.f32.mrb[0].mxu0
        %v2476 = vadd.f32 0.0, %v2475
        %v2477 = vpop.f32.mrb[0].mxu0
        %v2478 = vpop.f32.mrb[0].mxu0
        %v2479 = vadd.f32 0.0, %v2478
        %v2480 = vpop.f32.mrb[0].mxu0
        %2481 = vmatprep.mubr.bf16.mxu0 0
        %2482 = vmatmul.mubr.bf16.gmra.mrb[0].mxu0 %v1419
        %v2483 = vpop.f32.mrb[0].mxu0
        %v2484 = vadd.f32 0.0, %v2483
        %v2485 = vpop.f32.mrb[0].mxu0
        %v2486 = vpop.f32.mrb[0].mxu0
        %v2487 = vadd.f32 0.0, %v2486
        %v2488 = vpop.f32.mrb[0].mxu0
        %2489 = vmatprep.mubr.bf16.mxu0 0
        %2490 = vmatmul.mubr.bf16.gmra.mrb[0].mxu0 %v1422
        %v2491 = vpop.f32.mrb[0].mxu0
        %v2492 = vadd.f32 0.0, %v2491
        %v2493 = vpop.f32.mrb[0].mxu0
        %v2494 = vpop.f32.mrb[0].mxu0
        %v2495 = vadd.f32 0.0, %v2494
        %v2496 = vpop.f32.mrb[0].mxu0
        %2497 = vmatprep.mubr.bf16.mxu0 0
        %2498 = vmatmul.mubr.bf16.gmra.mrb[0].mxu0 %v1425
        %v2499 = vpop.f32.mrb[0].mxu0
        %v2500 = vadd.f32 0.0, %v2499
        %v2501 = vpop.f32.mrb[0].mxu0
        %v2502 = vpop.f32.mrb[0].mxu0
        %v2503 = vadd.f32 0.0, %v2502
        %v2504 = vpop.f32.mrb[0].mxu0
        %2505 = vmatprep.mubr.bf16.mxu0 0
        %2506 = vmatmul.mubr.bf16.gmra.mrb[0].mxu0 %v1428
        %v2507 = vpop.f32.mrb[0].mxu0
        %v2508 = vadd.f32 0.0, %v2507
        %v2509 = vpop.f32.mrb[0].mxu0
        %v2510 = vpop.f32.mrb[0].mxu0
        %v2511 = vadd.f32 0.0, %v2510
        %v2512 = vpop.f32.mrb[0].mxu0
        %2513 = vmatprep.mubr.bf16.mxu0 0
        %2514 = vmatmul.mubr.bf16.gmra.mrb[0].mxu0 %v1431
        %v2515 = vpop.f32.mrb[0].mxu0
        %v2516 = vadd.f32 0.0, %v2515
        %v2517 = vpop.f32.mrb[0].mxu0
        %v2518 = vpop.f32.mrb[0].mxu0
        %v2519 = vadd.f32 0.0, %v2518
        %v2520 = vpop.f32.mrb[0].mxu0
        %2521 = vmatprep.mubr.bf16.mxu0 0
        %2522 = vmatmul.mubr.bf16.gmra.mrb[0].mxu0 %v1434
        %v2523 = vpop.f32.mrb[0].mxu0
        %v2524 = vadd.f32 0.0, %v2523
        %v2525 = vpop.f32.mrb[0].mxu0
        %v2526 = vpop.f32.mrb[0].mxu0
        %v2527 = vadd.f32 0.0, %v2526
        %v2528 = vpop.f32.mrb[0].mxu0
        %2529 = vmatprep.mubr.bf16.mxu0 0
        %2530 = vmatmul.mubr.bf16.gmra.mrb[0].mxu0 %v1437
        %v2531 = vpop.f32.mrb[0].mxu0
        %v2532 = vadd.f32 0.0, %v2531
        %v2533 = vpop.f32.mrb[0].mxu0
        %v2534 = vpop.f32.mrb[0].mxu0
        %v2535 = vadd.f32 0.0, %v2534
        %v2536 = vpop.f32.mrb[0].mxu0
        %2537 = vmatprep.mubr.bf16.mxu0 0
        %2538 = vmatmul.mubr.bf16.gmra.mrb[0].mxu0 %v1440
        %v2539 = vpop.f32.mrb[0].mxu0
        %v2540 = vadd.f32 0.0, %v2539
        %v2541 = vpop.f32.mrb[0].mxu0
        %v2542 = vpop.f32.mrb[0].mxu0
        %v2543 = vadd.f32 0.0, %v2542
        %v2544 = vpop.f32.mrb[0].mxu0
        %2545 = vmatprep.mubr.bf16.mxu0 0
        %2546 = vmatmul.mubr.bf16.gmra.mrb[0].mxu0 %v1443
        %v2547 = vpop.f32.mrb[0].mxu0
        %v2548 = vadd.f32 0.0, %v2547
        %v2549 = vpop.f32.mrb[0].mxu0
        %v2550 = vpop.f32.mrb[0].mxu0
        %v2551 = vadd.f32 0.0, %v2550
        %v2552 = vpop.f32.mrb[0].mxu0
        %2553 = vmatprep.mubr.bf16.mxu0 0
        %2554 = vmatmul.mubr.bf16.gmra.mrb[0].mxu0 %v1446
        %v2555 = vpop.f32.mrb[0].mxu0
        %v2556 = vadd.f32 0.0, %v2555
        %v2557 = vpop.f32.mrb[0].mxu0
        %v2558 = vpop.f32.mrb[0].mxu0
        %v2559 = vadd.f32 0.0, %v2558
        %v2560 = vpop.f32.mrb[0].mxu0
        %2561 = vmatprep.mubr.bf16.mxu0 0
        %2562 = vmatmul.mubr.bf16.gmra.mrb[0].mxu0 %v1449
        %v2563 = vpop.f32.mrb[0].mxu0
        %v2564 = vadd.f32 0.0, %v2563
        %v2565 = vpop.f32.mrb[0].mxu0
        %v2566 = vpop.f32.mrb[0].mxu0
        %v2567 = vadd.f32 0.0, %v2566
        %v2568 = vpop.f32.mrb[0].mxu0
        %2569 = vmatprep.mubr.bf16.mxu0 0
        %2570 = vmatmul.mubr.bf16.gmra.mrb[0].mxu0 %v1452
        %v2571 = vpop.f32.mrb[0].mxu0
        %v2572 = vadd.f32 0.0, %v2571
        %v2573 = vpop.f32.mrb[0].mxu0
        %v2574 = vpop.f32.mrb[0].mxu0
        %v2575 = vadd.f32 0.0, %v2574
        %v2576 = vpop.f32.mrb[0].mxu0
        %2577 = vmatprep.mubr.bf16.mxu0 0
        %2578 = vmatmul.mubr.bf16.gmra.mrb[0].mxu0 %v1455
        %v2579 = vpop.f32.mrb[0].mxu0
        %v2580 = vadd.f32 0.0, %v2579
        %v2581 = vpop.f32.mrb[0].mxu0
        %v2582 = vpop.f32.mrb[0].mxu0
        %v2583 = vadd.f32 0.0, %v2582
        %v2584 = vpop.f32.mrb[0].mxu0
        %2585 = vmatprep.mubr.bf16.mxu0 0
        %2586 = vmatmul.mubr.bf16.gmra.mrb[0].mxu0 %v1458
        %v2587 = vpop.f32.mrb[0].mxu0
        %v2588 = vadd.f32 0.0, %v2587
        %v2589 = vpop.f32.mrb[0].mxu0
        %v2590 = vpop.f32.mrb[0].mxu0
        %v2591 = vadd.f32 0.0, %v2590
        %v2592 = vpop.f32.mrb[0].mxu0
        %2593 = vmatprep.mubr.bf16.mxu0 0
        %2594 = vmatmul.mubr.bf16.gmra.mrb[0].mxu0 %v2436
        %v2595 = vpop.f32.mrb[0].mxu0
        %v2596 = vadd.f32 0.0, %v2595
        %v2597 = vpop.f32.mrb[0].mxu0
        %v2598 = vpop.f32.mrb[0].mxu0
        %v2599 = vadd.f32 0.0, %v2598
        %v2600 = vpop.f32.mrb[0].mxu0
        %2601 = vdwg.mxu0
        %v2602 = vadd.f32 %v2403, %v2476
        %v2603 = vadd.f32 %v2404, %v2479
        %v2604 = vadd.f32 %v2405, %v2484
        %v2605 = vadd.f32 %v2406, %v2487
        %v2606 = vadd.f32 %v2407, %v2492
        %v2607 = vadd.f32 %v2408, %v2495
        %v2608 = vadd.f32 %v2409, %v2500
        %v2609 = vadd.f32 %v2410, %v2503
        %v2610 = vadd.f32 %v2411, %v2508
        %v2611 = vadd.f32 %v2412, %v2511
        %v2612 = vadd.f32 %v2413, %v2516
        %v2613 = vadd.f32 %v2414, %v2519
        %v2614 = vadd.f32 %v2415, %v2524
        %v2615 = vadd.f32 %v2416, %v2527
        %v2616 = vadd.f32 %v2417, %v2532
        %v2617 = vadd.f32 %v2418, %v2535
        %v2618 = vadd.f32 %v2419, %v2540
        %v2619 = vadd.f32 %v2420, %v2543
        %v2620 = vadd.f32 %v2421, %v2548
        %v2621 = vadd.f32 %v2422, %v2551
        %v2622 = vadd.f32 %v2423, %v2556
        %v2623 = vadd.f32 %v2424, %v2559
        %v2624 = vadd.f32 %v2425, %v2564
        %v2625 = vadd.f32 %v2426, %v2567
        %v2626 = vadd.f32 %v2427, %v2572
        %v2627 = vadd.f32 %v2428, %v2575
        %v2628 = vadd.f32 %v2429, %v2580
        %v2629 = vadd.f32 %v2430, %v2583
        %v2630 = vadd.f32 %v2431, %v2588
        %v2631 = vadd.f32 %v2432, %v2591
        %v2632 = vadd.f32 %v2433, %v2596
        %v2633 = vadd.f32 %v2434, %v2599
        %2634 = vst.msk [vmem:[#allocation3] sm:$0xff] %vm701, %v2602
        %2635 = vst.msk [vmem:[#allocation3 + $0x8] sm:$0xff] %vm701, %v2603
        %2636 = vst.msk [vmem:[#allocation3 + $0x10] sm:$0xff] %vm701, %v2604
        %2637 = vst.msk [vmem:[#allocation3 + $0x18] sm:$0xff] %vm701, %v2605
        %2638 = vst.msk [vmem:[#allocation3 + $0x20] sm:$0xff] %vm701, %v2606
        %2639 = vst.msk [vmem:[#allocation3 + $0x28] sm:$0xff] %vm701, %v2607
        %2640 = vst.msk [vmem:[#allocation3 + $0x30] sm:$0xff] %vm701, %v2608
        %2641 = vst.msk [vmem:[#allocation3 + $0x38] sm:$0xff] %vm701, %v2609
        %2642 = vst.msk [vmem:[#allocation3 + $0x40] sm:$0xff] %vm701, %v2610
        %2643 = vst.msk [vmem:[#allocation3 + $0x48] sm:$0xff] %vm701, %v2611
        %2644 = vst.msk [vmem:[#allocation3 + $0x50] sm:$0xff] %vm701, %v2612
        %2645 = vst.msk [vmem:[#allocation3 + $0x58] sm:$0xff] %vm701, %v2613
        %2646 = vst.msk [vmem:[#allocation3 + $0x60] sm:$0xff] %vm701, %v2614
        %2647 = vst.msk [vmem:[#allocation3 + $0x68] sm:$0xff] %vm701, %v2615
        %2648 = vst.msk [vmem:[#allocation3 + $0x70] sm:$0xff] %vm701, %v2616
        %2649 = vst.msk [vmem:[#allocation3 + $0x78] sm:$0xff] %vm701, %v2617
        %2650 = vst.msk [vmem:[#allocation3 + $0x80] sm:$0xff] %vm701, %v2618
        %2651 = vst.msk [vmem:[#allocation3 + $0x88] sm:$0xff] %vm701, %v2619
        %2652 = vst.msk [vmem:[#allocation3 + $0x90] sm:$0xff] %vm701, %v2620
        %2653 = vst.msk [vmem:[#allocation3 + $0x98] sm:$0xff] %vm701, %v2621
        %2654 = vst.msk [vmem:[#allocation3 + $0xa0] sm:$0xff] %vm701, %v2622
        %2655 = vst.msk [vmem:[#allocation3 + $0xa8] sm:$0xff] %vm701, %v2623
        %2656 = vst.msk [vmem:[#allocation3 + $0xb0] sm:$0xff] %vm701, %v2624
        %2657 = vst.msk [vmem:[#allocation3 + $0xb8] sm:$0xff] %vm701, %v2625
        %2658 = vst.msk [vmem:[#allocation3 + $0xc0] sm:$0xff] %vm701, %v2626
        %2659 = vst.msk [vmem:[#allocation3 + $0xc8] sm:$0xff] %vm701, %v2627
        %2660 = vst.msk [vmem:[#allocation3 + $0xd0] sm:$0xff] %vm701, %v2628
        %2661 = vst.msk [vmem:[#allocation3 + $0xd8] sm:$0xff] %vm701, %v2629
        %2662 = vst.msk [vmem:[#allocation3 + $0xe0] sm:$0xff] %vm701, %v2630
        %2663 = vst.msk [vmem:[#allocation3 + $0xe8] sm:$0xff] %vm701, %v2631
        %2664 = vst.msk [vmem:[#allocation3 + $0xf0] sm:$0xff] %vm701, %v2632
        %2665 = vst.msk [vmem:[#allocation3 + $0xf8] sm:$0xff] %vm701, %v2633
        %v2666 = vrot.slane %v838, 2
        %v2667 = vrot.slane %v839, 2
        %v2668 = vsel %vm1688, %v2666, %v2667
        %v2669 = vrot.slane %v840, 2
        %v2670 = vsel %vm1688, %v2667, %v2669
        %v2673 = vpack.c.bf16 %v2670, %v2668
        %v2674 = vld [vmem:[%s3 + $0x14] sm:$0xf]
        %v2675 = vld [vmem:[#allocation3] sm:$0xff]
        %v2676 = vld [vmem:[#allocation3 + $0x8] sm:$0xff]
        %v2677 = vld [vmem:[#allocation3 + $0x10] sm:$0xff]
        %v2678 = vld [vmem:[#allocation3 + $0x18] sm:$0xff]
        %v2679 = vld [vmem:[#allocation3 + $0x20] sm:$0xff]
        %v2680 = vld [vmem:[#allocation3 + $0x28] sm:$0xff]
        %v2681 = vld [vmem:[#allocation3 + $0x30] sm:$0xff]
        %v2682 = vld [vmem:[#allocation3 + $0x38] sm:$0xff]
        %v2683 = vld [vmem:[#allocation3 + $0x40] sm:$0xff]
        %v2684 = vld [vmem:[#allocation3 + $0x48] sm:$0xff]
        %v2685 = vld [vmem:[#allocation3 + $0x50] sm:$0xff]
        %v2686 = vld [vmem:[#allocation3 + $0x58] sm:$0xff]
        %v2687 = vld [vmem:[#allocation3 + $0x60] sm:$0xff]
        %v2688 = vld [vmem:[#allocation3 + $0x68] sm:$0xff]
        %v2689 = vld [vmem:[#allocation3 + $0x70] sm:$0xff]
        %v2690 = vld [vmem:[#allocation3 + $0x78] sm:$0xff]
        %v2691 = vld [vmem:[#allocation3 + $0x80] sm:$0xff]
        %v2692 = vld [vmem:[#allocation3 + $0x88] sm:$0xff]
        %v2693 = vld [vmem:[#allocation3 + $0x90] sm:$0xff]
        %v2694 = vld [vmem:[#allocation3 + $0x98] sm:$0xff]
        %v2695 = vld [vmem:[#allocation3 + $0xa0] sm:$0xff]
        %v2696 = vld [vmem:[#allocation3 + $0xa8] sm:$0xff]
        %v2697 = vld [vmem:[#allocation3 + $0xb0] sm:$0xff]
        %v2698 = vld [vmem:[#allocation3 + $0xb8] sm:$0xff]
        %v2699 = vld [vmem:[#allocation3 + $0xc0] sm:$0xff]
        %v2700 = vld [vmem:[#allocation3 + $0xc8] sm:$0xff]
        %v2701 = vld [vmem:[#allocation3 + $0xd0] sm:$0xff]
        %v2702 = vld [vmem:[#allocation3 + $0xd8] sm:$0xff]
        %v2703 = vld [vmem:[#allocation3 + $0xe0] sm:$0xff]
        %v2704 = vld [vmem:[#allocation3 + $0xe8] sm:$0xff]
        %v2705 = vld [vmem:[#allocation3 + $0xf0] sm:$0xff]
        %v2706 = vld [vmem:[#allocation3 + $0xf8] sm:$0xff]
        %v2708 = vsel %vm701, %v2673, 0
        %v2711 = vsel %vm973, %v2674, 0
        %2713 = vmatprep.subr.bf16.mxu0 0
        %2714 = vmatpush1.bf16.msra.mxu0 %v2711
        %2715 = vmatprep.subr.bf16.mxu0 0
        %2716 = vmatpush1.bf16.msra.mxu0 0
        %2717 = vmatprep.subr.bf16.mxu0 0
        %2718 = vmatpush1.bf16.msra.mxu0 0
        %2719 = vmatprep.subr.bf16.mxu0 0
        %2720 = vmatpush1.bf16.msra.mxu0 0
        %2721 = vmatprep.subr.bf16.mxu0 0
        %2722 = vmatpush1.bf16.msra.mxu0 0
        %2723 = vmatprep.subr.bf16.mxu0 0
        %2724 = vmatpush1.bf16.msra.mxu0 0
        %2725 = vmatprep.subr.bf16.mxu0 0
        %2726 = vmatpush1.bf16.msra.mxu0 0
        %2727 = vmatprep.subr.bf16.mxu0 0
        %2728 = vmatpush1.bf16.msra.mxu0 0
        %2729 = vmatprep.subr.bf16.mxu0 0
        %2730 = vmatpush1.bf16.msra.mxu0 0
        %2731 = vmatprep.subr.bf16.mxu0 0
        %2732 = vmatpush1.bf16.msra.mxu0 0
        %2733 = vmatprep.subr.bf16.mxu0 0
        %2734 = vmatpush1.bf16.msra.mxu0 0
        %2735 = vmatprep.subr.bf16.mxu0 0
        %2736 = vmatpush1.bf16.msra.mxu0 0
        %2737 = vmatprep.subr.bf16.mxu0 0
        %2738 = vmatpush1.bf16.msra.mxu0 0
        %2739 = vmatprep.subr.bf16.mxu0 0
        %2740 = vmatpush1.bf16.msra.mxu0 0
        %2741 = vmatprep.subr.bf16.mxu0 0
        %2742 = vmatpush1.bf16.msra.mxu0 0
        %2743 = vmatprep.subr.bf16.mxu0 0
        %2744 = vmatpush1.bf16.msra.mxu0 0
        %2745 = vmatprep.mubr.bf16.mxu0 0
        %2746 = vmatmul.mubr.bf16.gmra.mrb[0].mxu0 %v1854
        %v2747 = vpop.f32.mrb[0].mxu0
        %v2748 = vadd.f32 0.0, %v2747
        %v2749 = vpop.f32.mrb[0].mxu0
        %v2750 = vpop.f32.mrb[0].mxu0
        %v2751 = vadd.f32 0.0, %v2750
        %v2752 = vpop.f32.mrb[0].mxu0
        %2753 = vmatprep.mubr.bf16.mxu0 0
        %2754 = vmatmul.mubr.bf16.gmra.mrb[0].mxu0 %v1857
        %v2755 = vpop.f32.mrb[0].mxu0
        %v2756 = vadd.f32 0.0, %v2755
        %v2757 = vpop.f32.mrb[0].mxu0
        %v2758 = vpop.f32.mrb[0].mxu0
        %v2759 = vadd.f32 0.0, %v2758
        %v2760 = vpop.f32.mrb[0].mxu0
        %2761 = vmatprep.mubr.bf16.mxu0 0
        %2762 = vmatmul.mubr.bf16.gmra.mrb[0].mxu0 %v1860
        %v2763 = vpop.f32.mrb[0].mxu0
        %v2764 = vadd.f32 0.0, %v2763
        %v2765 = vpop.f32.mrb[0].mxu0
        %v2766 = vpop.f32.mrb[0].mxu0
        %v2767 = vadd.f32 0.0, %v2766
        %v2768 = vpop.f32.mrb[0].mxu0
        %2769 = vmatprep.mubr.bf16.mxu0 0
        %2770 = vmatmul.mubr.bf16.gmra.mrb[0].mxu0 %v1863
        %v2771 = vpop.f32.mrb[0].mxu0
        %v2772 = vadd.f32 0.0, %v2771
        %v2773 = vpop.f32.mrb[0].mxu0
        %v2774 = vpop.f32.mrb[0].mxu0
        %v2775 = vadd.f32 0.0, %v2774
        %v2776 = vpop.f32.mrb[0].mxu0
        %2777 = vmatprep.mubr.bf16.mxu0 0
        %2778 = vmatmul.mubr.bf16.gmra.mrb[0].mxu0 %v1866
        %v2779 = vpop.f32.mrb[0].mxu0
        %v2780 = vadd.f32 0.0, %v2779
        %v2781 = vpop.f32.mrb[0].mxu0
        %v2782 = vpop.f32.mrb[0].mxu0
        %v2783 = vadd.f32 0.0, %v2782
        %v2784 = vpop.f32.mrb[0].mxu0
        %2785 = vmatprep.mubr.bf16.mxu0 0
        %2786 = vmatmul.mubr.bf16.gmra.mrb[0].mxu0 %v1869
        %v2787 = vpop.f32.mrb[0].mxu0
        %v2788 = vadd.f32 0.0, %v2787
        %v2789 = vpop.f32.mrb[0].mxu0
        %v2790 = vpop.f32.mrb[0].mxu0
        %v2791 = vadd.f32 0.0, %v2790
        %v2792 = vpop.f32.mrb[0].mxu0
        %2793 = vmatprep.mubr.bf16.mxu0 0
        %2794 = vmatmul.mubr.bf16.gmra.mrb[0].mxu0 %v1872
        %v2795 = vpop.f32.mrb[0].mxu0
        %v2796 = vadd.f32 0.0, %v2795
        %v2797 = vpop.f32.mrb[0].mxu0
        %v2798 = vpop.f32.mrb[0].mxu0
        %v2799 = vadd.f32 0.0, %v2798
        %v2800 = vpop.f32.mrb[0].mxu0
        %2801 = vmatprep.mubr.bf16.mxu0 0
        %2802 = vmatmul.mubr.bf16.gmra.mrb[0].mxu0 %v1875
        %v2803 = vpop.f32.mrb[0].mxu0
        %v2804 = vadd.f32 0.0, %v2803
        %v2805 = vpop.f32.mrb[0].mxu0
        %v2806 = vpop.f32.mrb[0].mxu0
        %v2807 = vadd.f32 0.0, %v2806
        %v2808 = vpop.f32.mrb[0].mxu0
        %2809 = vmatprep.mubr.bf16.mxu0 0
        %2810 = vmatmul.mubr.bf16.gmra.mrb[0].mxu0 %v1878
        %v2811 = vpop.f32.mrb[0].mxu0
        %v2812 = vadd.f32 0.0, %v2811
        %v2813 = vpop.f32.mrb[0].mxu0
        %v2814 = vpop.f32.mrb[0].mxu0
        %v2815 = vadd.f32 0.0, %v2814
        %v2816 = vpop.f32.mrb[0].mxu0
        %2817 = vmatprep.mubr.bf16.mxu0 0
        %2818 = vmatmul.mubr.bf16.gmra.mrb[0].mxu0 %v1881
        %v2819 = vpop.f32.mrb[0].mxu0
        %v2820 = vadd.f32 0.0, %v2819
        %v2821 = vpop.f32.mrb[0].mxu0
        %v2822 = vpop.f32.mrb[0].mxu0
        %v2823 = vadd.f32 0.0, %v2822
        %v2824 = vpop.f32.mrb[0].mxu0
        %2825 = vmatprep.mubr.bf16.mxu0 0
        %2826 = vmatmul.mubr.bf16.gmra.mrb[0].mxu0 %v1884
        %v2827 = vpop.f32.mrb[0].mxu0
        %v2828 = vadd.f32 0.0, %v2827
        %v2829 = vpop.f32.mrb[0].mxu0
        %v2830 = vpop.f32.mrb[0].mxu0
        %v2831 = vadd.f32 0.0, %v2830
        %v2832 = vpop.f32.mrb[0].mxu0
        %2833 = vmatprep.mubr.bf16.mxu0 0
        %2834 = vmatmul.mubr.bf16.gmra.mrb[0].mxu0 %v1887
        %v2835 = vpop.f32.mrb[0].mxu0
        %v2836 = vadd.f32 0.0, %v2835
        %v2837 = vpop.f32.mrb[0].mxu0
        %v2838 = vpop.f32.mrb[0].mxu0
        %v2839 = vadd.f32 0.0, %v2838
        %v2840 = vpop.f32.mrb[0].mxu0
        %2841 = vmatprep.mubr.bf16.mxu0 0
        %2842 = vmatmul.mubr.bf16.gmra.mrb[0].mxu0 %v1890
        %v2843 = vpop.f32.mrb[0].mxu0
        %v2844 = vadd.f32 0.0, %v2843
        %v2845 = vpop.f32.mrb[0].mxu0
        %v2846 = vpop.f32.mrb[0].mxu0
        %v2847 = vadd.f32 0.0, %v2846
        %v2848 = vpop.f32.mrb[0].mxu0
        %2849 = vmatprep.mubr.bf16.mxu0 0
        %2850 = vmatmul.mubr.bf16.gmra.mrb[0].mxu0 %v1893
        %v2851 = vpop.f32.mrb[0].mxu0
        %v2852 = vadd.f32 0.0, %v2851
        %v2853 = vpop.f32.mrb[0].mxu0
        %v2854 = vpop.f32.mrb[0].mxu0
        %v2855 = vadd.f32 0.0, %v2854
        %v2856 = vpop.f32.mrb[0].mxu0
        %2857 = vmatprep.mubr.bf16.mxu0 0
        %2858 = vmatmul.mubr.bf16.gmra.mrb[0].mxu0 %v1896
        %v2859 = vpop.f32.mrb[0].mxu0
        %v2860 = vadd.f32 0.0, %v2859
        %v2861 = vpop.f32.mrb[0].mxu0
        %v2862 = vpop.f32.mrb[0].mxu0
        %v2863 = vadd.f32 0.0, %v2862
        %v2864 = vpop.f32.mrb[0].mxu0
        %2865 = vmatprep.mubr.bf16.mxu0 0
        %2866 = vmatmul.mubr.bf16.gmra.mrb[0].mxu0 %v2708
        %v2867 = vpop.f32.mrb[0].mxu0
        %v2868 = vadd.f32 0.0, %v2867
        %v2869 = vpop.f32.mrb[0].mxu0
        %v2870 = vpop.f32.mrb[0].mxu0
        %v2871 = vadd.f32 0.0, %v2870
        %v2872 = vpop.f32.mrb[0].mxu0
        %2873 = vdwg.mxu0
        %v2874 = vadd.f32 %v2675, %v2748
        %v2875 = vadd.f32 %v2676, %v2751
        %v2876 = vadd.f32 %v2677, %v2756
        %v2877 = vadd.f32 %v2678, %v2759
        %v2878 = vadd.f32 %v2679, %v2764
        %v2879 = vadd.f32 %v2680, %v2767
        %v2880 = vadd.f32 %v2681, %v2772
        %v2881 = vadd.f32 %v2682, %v2775
        %v2882 = vadd.f32 %v2683, %v2780
        %v2883 = vadd.f32 %v2684, %v2783
        %v2884 = vadd.f32 %v2685, %v2788
        %v2885 = vadd.f32 %v2686, %v2791
        %v2886 = vadd.f32 %v2687, %v2796
        %v2887 = vadd.f32 %v2688, %v2799
        %v2888 = vadd.f32 %v2689, %v2804
        %v2889 = vadd.f32 %v2690, %v2807
        %v2890 = vadd.f32 %v2691, %v2812
        %v2891 = vadd.f32 %v2692, %v2815
        %v2892 = vadd.f32 %v2693, %v2820
        %v2893 = vadd.f32 %v2694, %v2823
        %v2894 = vadd.f32 %v2695, %v2828
        %v2895 = vadd.f32 %v2696, %v2831
        %v2896 = vadd.f32 %v2697, %v2836
        %v2897 = vadd.f32 %v2698, %v2839
        %v2898 = vadd.f32 %v2699, %v2844
        %v2899 = vadd.f32 %v2700, %v2847
        %v2900 = vadd.f32 %v2701, %v2852
        %v2901 = vadd.f32 %v2702, %v2855
        %v2902 = vadd.f32 %v2703, %v2860
        %v2903 = vadd.f32 %v2704, %v2863
        %v2904 = vadd.f32 %v2705, %v2868
        %v2905 = vadd.f32 %v2706, %v2871
        %2906 = vst.msk [vmem:[#allocation3] sm:$0xff] %vm701, %v2874
        %2907 = vst.msk [vmem:[#allocation3 + $0x8] sm:$0xff] %vm701, %v2875
        %2908 = vst.msk [vmem:[#allocation3 + $0x10] sm:$0xff] %vm701, %v2876
        %2909 = vst.msk [vmem:[#allocation3 + $0x18] sm:$0xff] %vm701, %v2877
        %2910 = vst.msk [vmem:[#allocation3 + $0x20] sm:$0xff] %vm701, %v2878
        %2911 = vst.msk [vmem:[#allocation3 + $0x28] sm:$0xff] %vm701, %v2879
        %2912 = vst.msk [vmem:[#allocation3 + $0x30] sm:$0xff] %vm701, %v2880
        %2913 = vst.msk [vmem:[#allocation3 + $0x38] sm:$0xff] %vm701, %v2881
        %2914 = vst.msk [vmem:[#allocation3 + $0x40] sm:$0xff] %vm701, %v2882
        %2915 = vst.msk [vmem:[#allocation3 + $0x48] sm:$0xff] %vm701, %v2883
        %2916 = vst.msk [vmem:[#allocation3 + $0x50] sm:$0xff] %vm701, %v2884
        %2917 = vst.msk [vmem:[#allocation3 + $0x58] sm:$0xff] %vm701, %v2885
        %2918 = vst.msk [vmem:[#allocation3 + $0x60] sm:$0xff] %vm701, %v2886
        %2919 = vst.msk [vmem:[#allocation3 + $0x68] sm:$0xff] %vm701, %v2887
        %2920 = vst.msk [vmem:[#allocation3 + $0x70] sm:$0xff] %vm701, %v2888
        %2921 = vst.msk [vmem:[#allocation3 + $0x78] sm:$0xff] %vm701, %v2889
        %2922 = vst.msk [vmem:[#allocation3 + $0x80] sm:$0xff] %vm701, %v2890
        %2923 = vst.msk [vmem:[#allocation3 + $0x88] sm:$0xff] %vm701, %v2891
        %2924 = vst.msk [vmem:[#allocation3 + $0x90] sm:$0xff] %vm701, %v2892
        %2925 = vst.msk [vmem:[#allocation3 + $0x98] sm:$0xff] %vm701, %v2893
        %2926 = vst.msk [vmem:[#allocation3 + $0xa0] sm:$0xff] %vm701, %v2894
        %2927 = vst.msk [vmem:[#allocation3 + $0xa8] sm:$0xff] %vm701, %v2895
        %2928 = vst.msk [vmem:[#allocation3 + $0xb0] sm:$0xff] %vm701, %v2896
        %2929 = vst.msk [vmem:[#allocation3 + $0xb8] sm:$0xff] %vm701, %v2897
        %2930 = vst.msk [vmem:[#allocation3 + $0xc0] sm:$0xff] %vm701, %v2898
        %2931 = vst.msk [vmem:[#allocation3 + $0xc8] sm:$0xff] %vm701, %v2899
        %2932 = vst.msk [vmem:[#allocation3 + $0xd0] sm:$0xff] %vm701, %v2900
        %2933 = vst.msk [vmem:[#allocation3 + $0xd8] sm:$0xff] %vm701, %v2901
        %2934 = vst.msk [vmem:[#allocation3 + $0xe0] sm:$0xff] %vm701, %v2902
        %2935 = vst.msk [vmem:[#allocation3 + $0xe8] sm:$0xff] %vm701, %v2903
        %2936 = vst.msk [vmem:[#allocation3 + $0xf0] sm:$0xff] %vm701, %v2904
        %2937 = vst.msk [vmem:[#allocation3 + $0xf8] sm:$0xff] %vm701, %v2905
        %v2938 = vpack.c.bf16 %v842, %v841
        %v2939 = vld [vmem:[%s3 + $0x18] sm:$0xf]
        %v2940 = vld [vmem:[#allocation3] sm:$0xff]
        %v2941 = vld [vmem:[#allocation3 + $0x8] sm:$0xff]
        %v2942 = vld [vmem:[#allocation3 + $0x10] sm:$0xff]
        %v2943 = vld [vmem:[#allocation3 + $0x18] sm:$0xff]
        %v2944 = vld [vmem:[#allocation3 + $0x20] sm:$0xff]
        %v2945 = vld [vmem:[#allocation3 + $0x28] sm:$0xff]
        %v2946 = vld [vmem:[#allocation3 + $0x30] sm:$0xff]
        %v2947 = vld [vmem:[#allocation3 + $0x38] sm:$0xff]
        %v2948 = vld [vmem:[#allocation3 + $0x40] sm:$0xff]
        %v2949 = vld [vmem:[#allocation3 + $0x48] sm:$0xff]
        %v2950 = vld [vmem:[#allocation3 + $0x50] sm:$0xff]
        %v2951 = vld [vmem:[#allocation3 + $0x58] sm:$0xff]
        %v2952 = vld [vmem:[#allocation3 + $0x60] sm:$0xff]
        %v2953 = vld [vmem:[#allocation3 + $0x68] sm:$0xff]
        %v2954 = vld [vmem:[#allocation3 + $0x70] sm:$0xff]
        %v2955 = vld [vmem:[#allocation3 + $0x78] sm:$0xff]
        %v2956 = vld [vmem:[#allocation3 + $0x80] sm:$0xff]
        %v2957 = vld [vmem:[#allocation3 + $0x88] sm:$0xff]
        %v2958 = vld [vmem:[#allocation3 + $0x90] sm:$0xff]
        %v2959 = vld [vmem:[#allocation3 + $0x98] sm:$0xff]
        %v2960 = vld [vmem:[#allocation3 + $0xa0] sm:$0xff]
        %v2961 = vld [vmem:[#allocation3 + $0xa8] sm:$0xff]
        %v2962 = vld [vmem:[#allocation3 + $0xb0] sm:$0xff]
        %v2963 = vld [vmem:[#allocation3 + $0xb8] sm:$0xff]
        %v2964 = vld [vmem:[#allocation3 + $0xc0] sm:$0xff]
        %v2965 = vld [vmem:[#allocation3 + $0xc8] sm:$0xff]
        %v2966 = vld [vmem:[#allocation3 + $0xd0] sm:$0xff]
        %v2967 = vld [vmem:[#allocation3 + $0xd8] sm:$0xff]
        %v2968 = vld [vmem:[#allocation3 + $0xe0] sm:$0xff]
        %v2969 = vld [vmem:[#allocation3 + $0xe8] sm:$0xff]
        %v2970 = vld [vmem:[#allocation3 + $0xf0] sm:$0xff]
        %v2971 = vld [vmem:[#allocation3 + $0xf8] sm:$0xff]
        %v2973 = vsel %vm701, %v2938, 0
        %v2976 = vsel %vm973, %v2939, 0
        %2978 = vmatprep.subr.bf16.mxu0 0
        %2979 = vmatpush1.bf16.msra.mxu0 %v2976
        %2980 = vmatprep.subr.bf16.mxu0 0
        %2981 = vmatpush1.bf16.msra.mxu0 0
        %2982 = vmatprep.subr.bf16.mxu0 0
        %2983 = vmatpush1.bf16.msra.mxu0 0
        %2984 = vmatprep.subr.bf16.mxu0 0
        %2985 = vmatpush1.bf16.msra.mxu0 0
        %2986 = vmatprep.subr.bf16.mxu0 0
        %2987 = vmatpush1.bf16.msra.mxu0 0
        %2988 = vmatprep.subr.bf16.mxu0 0
        %2989 = vmatpush1.bf16.msra.mxu0 0
        %2990 = vmatprep.subr.bf16.mxu0 0
        %2991 = vmatpush1.bf16.msra.mxu0 0
        %2992 = vmatprep.subr.bf16.mxu0 0
        %2993 = vmatpush1.bf16.msra.mxu0 0
        %2994 = vmatprep.subr.bf16.mxu0 0
        %2995 = vmatpush1.bf16.msra.mxu0 0
        %2996 = vmatprep.subr.bf16.mxu0 0
        %2997 = vmatpush1.bf16.msra.mxu0 0
        %2998 = vmatprep.subr.bf16.mxu0 0
        %2999 = vmatpush1.bf16.msra.mxu0 0
        %3000 = vmatprep.subr.bf16.mxu0 0
        %3001 = vmatpush1.bf16.msra.mxu0 0
        %3002 = vmatprep.subr.bf16.mxu0 0
        %3003 = vmatpush1.bf16.msra.mxu0 0
        %3004 = vmatprep.subr.bf16.mxu0 0
        %3005 = vmatpush1.bf16.msra.mxu0 0
        %3006 = vmatprep.subr.bf16.mxu0 0
        %3007 = vmatpush1.bf16.msra.mxu0 0
        %3008 = vmatprep.subr.bf16.mxu0 0
        %3009 = vmatpush1.bf16.msra.mxu0 0
        %3010 = vmatprep.mubr.bf16.mxu0 0
        %3011 = vmatmul.mubr.bf16.gmra.mrb[0].mxu0 %v932
        %v3012 = vpop.f32.mrb[0].mxu0
        %v3013 = vadd.f32 0.0, %v3012
        %v3014 = vpop.f32.mrb[0].mxu0
        %v3015 = vpop.f32.mrb[0].mxu0
        %v3016 = vadd.f32 0.0, %v3015
        %v3017 = vpop.f32.mrb[0].mxu0
        %3018 = vmatprep.mubr.bf16.mxu0 0
        %3019 = vmatmul.mubr.bf16.gmra.mrb[0].mxu0 %v935
        %v3020 = vpop.f32.mrb[0].mxu0
        %v3021 = vadd.f32 0.0, %v3020
        %v3022 = vpop.f32.mrb[0].mxu0
        %v3023 = vpop.f32.mrb[0].mxu0
        %v3024 = vadd.f32 0.0, %v3023
        %v3025 = vpop.f32.mrb[0].mxu0
        %3026 = vmatprep.mubr.bf16.mxu0 0
        %3027 = vmatmul.mubr.bf16.gmra.mrb[0].mxu0 %v938
        %v3028 = vpop.f32.mrb[0].mxu0
        %v3029 = vadd.f32 0.0, %v3028
        %v3030 = vpop.f32.mrb[0].mxu0
        %v3031 = vpop.f32.mrb[0].mxu0
        %v3032 = vadd.f32 0.0, %v3031
        %v3033 = vpop.f32.mrb[0].mxu0
        %3034 = vmatprep.mubr.bf16.mxu0 0
        %3035 = vmatmul.mubr.bf16.gmra.mrb[0].mxu0 %v941
        %v3036 = vpop.f32.mrb[0].mxu0
        %v3037 = vadd.f32 0.0, %v3036
        %v3038 = vpop.f32.mrb[0].mxu0
        %v3039 = vpop.f32.mrb[0].mxu0
        %v3040 = vadd.f32 0.0, %v3039
        %v3041 = vpop.f32.mrb[0].mxu0
        %3042 = vmatprep.mubr.bf16.mxu0 0
        %3043 = vmatmul.mubr.bf16.gmra.mrb[0].mxu0 %v944
        %v3044 = vpop.f32.mrb[0].mxu0
        %v3045 = vadd.f32 0.0, %v3044
        %v3046 = vpop.f32.mrb[0].mxu0
        %v3047 = vpop.f32.mrb[0].mxu0
        %v3048 = vadd.f32 0.0, %v3047
        %v3049 = vpop.f32.mrb[0].mxu0
        %3050 = vmatprep.mubr.bf16.mxu0 0
        %3051 = vmatmul.mubr.bf16.gmra.mrb[0].mxu0 %v947
        %v3052 = vpop.f32.mrb[0].mxu0
        %v3053 = vadd.f32 0.0, %v3052
        %v3054 = vpop.f32.mrb[0].mxu0
        %v3055 = vpop.f32.mrb[0].mxu0
        %v3056 = vadd.f32 0.0, %v3055
        %v3057 = vpop.f32.mrb[0].mxu0
        %3058 = vmatprep.mubr.bf16.mxu0 0
        %3059 = vmatmul.mubr.bf16.gmra.mrb[0].mxu0 %v950
        %v3060 = vpop.f32.mrb[0].mxu0
        %v3061 = vadd.f32 0.0, %v3060
        %v3062 = vpop.f32.mrb[0].mxu0
        %v3063 = vpop.f32.mrb[0].mxu0
        %v3064 = vadd.f32 0.0, %v3063
        %v3065 = vpop.f32.mrb[0].mxu0
        %3066 = vmatprep.mubr.bf16.mxu0 0
        %3067 = vmatmul.mubr.bf16.gmra.mrb[0].mxu0 %v953
        %v3068 = vpop.f32.mrb[0].mxu0
        %v3069 = vadd.f32 0.0, %v3068
        %v3070 = vpop.f32.mrb[0].mxu0
        %v3071 = vpop.f32.mrb[0].mxu0
        %v3072 = vadd.f32 0.0, %v3071
        %v3073 = vpop.f32.mrb[0].mxu0
        %3074 = vmatprep.mubr.bf16.mxu0 0
        %3075 = vmatmul.mubr.bf16.gmra.mrb[0].mxu0 %v956
        %v3076 = vpop.f32.mrb[0].mxu0
        %v3077 = vadd.f32 0.0, %v3076
        %v3078 = vpop.f32.mrb[0].mxu0
        %v3079 = vpop.f32.mrb[0].mxu0
        %v3080 = vadd.f32 0.0, %v3079
        %v3081 = vpop.f32.mrb[0].mxu0
        %3082 = vmatprep.mubr.bf16.mxu0 0
        %3083 = vmatmul.mubr.bf16.gmra.mrb[0].mxu0 %v959
        %v3084 = vpop.f32.mrb[0].mxu0
        %v3085 = vadd.f32 0.0, %v3084
        %v3086 = vpop.f32.mrb[0].mxu0
        %v3087 = vpop.f32.mrb[0].mxu0
        %v3088 = vadd.f32 0.0, %v3087
        %v3089 = vpop.f32.mrb[0].mxu0
        %3090 = vmatprep.mubr.bf16.mxu0 0
        %3091 = vmatmul.mubr.bf16.gmra.mrb[0].mxu0 %v962
        %v3092 = vpop.f32.mrb[0].mxu0
        %v3093 = vadd.f32 0.0, %v3092
        %v3094 = vpop.f32.mrb[0].mxu0
        %v3095 = vpop.f32.mrb[0].mxu0
        %v3096 = vadd.f32 0.0, %v3095
        %v3097 = vpop.f32.mrb[0].mxu0
        %3098 = vmatprep.mubr.bf16.mxu0 0
        %3099 = vmatmul.mubr.bf16.gmra.mrb[0].mxu0 %v965
        %v3100 = vpop.f32.mrb[0].mxu0
        %v3101 = vadd.f32 0.0, %v3100
        %v3102 = vpop.f32.mrb[0].mxu0
        %v3103 = vpop.f32.mrb[0].mxu0
        %v3104 = vadd.f32 0.0, %v3103
        %v3105 = vpop.f32.mrb[0].mxu0
        %3106 = vmatprep.mubr.bf16.mxu0 0
        %3107 = vmatmul.mubr.bf16.gmra.mrb[0].mxu0 %v968
        %v3108 = vpop.f32.mrb[0].mxu0
        %v3109 = vadd.f32 0.0, %v3108
        %v3110 = vpop.f32.mrb[0].mxu0
        %v3111 = vpop.f32.mrb[0].mxu0
        %v3112 = vadd.f32 0.0, %v3111
        %v3113 = vpop.f32.mrb[0].mxu0
        %3114 = vmatprep.mubr.bf16.mxu0 0
        %3115 = vmatmul.mubr.bf16.gmra.mrb[0].mxu0 %v971
        %v3116 = vpop.f32.mrb[0].mxu0
        %v3117 = vadd.f32 0.0, %v3116
        %v3118 = vpop.f32.mrb[0].mxu0
        %v3119 = vpop.f32.mrb[0].mxu0
        %v3120 = vadd.f32 0.0, %v3119
        %v3121 = vpop.f32.mrb[0].mxu0
        %3122 = vmatprep.mubr.bf16.mxu0 0
        %3123 = vmatmul.mubr.bf16.gmra.mrb[0].mxu0 %v2161
        %v3124 = vpop.f32.mrb[0].mxu0
        %v3125 = vadd.f32 0.0, %v3124
        %v3126 = vpop.f32.mrb[0].mxu0
        %v3127 = vpop.f32.mrb[0].mxu0
        %v3128 = vadd.f32 0.0, %v3127
        %v3129 = vpop.f32.mrb[0].mxu0
        %3130 = vmatprep.mubr.bf16.mxu0 0
        %3131 = vmatmul.mubr.bf16.gmra.mrb[0].mxu0 %v2973
        %v3132 = vpop.f32.mrb[0].mxu0
        %v3133 = vadd.f32 0.0, %v3132
        %v3134 = vpop.f32.mrb[0].mxu0
        %v3135 = vpop.f32.mrb[0].mxu0
        %v3136 = vadd.f32 0.0, %v3135
        %v3137 = vpop.f32.mrb[0].mxu0
        %3138 = vdwg.mxu0
        %v3139 = vadd.f32 %v2940, %v3013
        %v3140 = vadd.f32 %v2941, %v3016
        %v3141 = vadd.f32 %v2942, %v3021
        %v3142 = vadd.f32 %v2943, %v3024
        %v3143 = vadd.f32 %v2944, %v3029
        %v3144 = vadd.f32 %v2945, %v3032
        %v3145 = vadd.f32 %v2946, %v3037
        %v3146 = vadd.f32 %v2947, %v3040
        %v3147 = vadd.f32 %v2948, %v3045
        %v3148 = vadd.f32 %v2949, %v3048
        %v3149 = vadd.f32 %v2950, %v3053
        %v3150 = vadd.f32 %v2951, %v3056
        %v3151 = vadd.f32 %v2952, %v3061
        %v3152 = vadd.f32 %v2953, %v3064
        %v3153 = vadd.f32 %v2954, %v3069
        %v3154 = vadd.f32 %v2955, %v3072
        %v3155 = vadd.f32 %v2956, %v3077
        %v3156 = vadd.f32 %v2957, %v3080
        %v3157 = vadd.f32 %v2958, %v3085
        %v3158 = vadd.f32 %v2959, %v3088
        %v3159 = vadd.f32 %v2960, %v3093
        %v3160 = vadd.f32 %v2961, %v3096
        %v3161 = vadd.f32 %v2962, %v3101
        %v3162 = vadd.f32 %v2963, %v3104
        %v3163 = vadd.f32 %v2964, %v3109
        %v3164 = vadd.f32 %v2965, %v3112
        %v3165 = vadd.f32 %v2966, %v3117
        %v3166 = vadd.f32 %v2967, %v3120
        %v3167 = vadd.f32 %v2968, %v3125
        %v3168 = vadd.f32 %v2969, %v3128
        %v3169 = vadd.f32 %v2970, %v3133
        %v3170 = vadd.f32 %v2971, %v3136
        %3171 = vst.msk [vmem:[#allocation3] sm:$0xff] %vm701, %v3139
        %3172 = vst.msk [vmem:[#allocation3 + $0x8] sm:$0xff] %vm701, %v3140
        %3173 = vst.msk [vmem:[#allocation3 + $0x10] sm:$0xff] %vm701, %v3141
        %3174 = vst.msk [vmem:[#allocation3 + $0x18] sm:$0xff] %vm701, %v3142
        %3175 = vst.msk [vmem:[#allocation3 + $0x20] sm:$0xff] %vm701, %v3143
        %3176 = vst.msk [vmem:[#allocation3 + $0x28] sm:$0xff] %vm701, %v3144
        %3177 = vst.msk [vmem:[#allocation3 + $0x30] sm:$0xff] %vm701, %v3145
        %3178 = vst.msk [vmem:[#allocation3 + $0x38] sm:$0xff] %vm701, %v3146
        %3179 = vst.msk [vmem:[#allocation3 + $0x40] sm:$0xff] %vm701, %v3147
        %3180 = vst.msk [vmem:[#allocation3 + $0x48] sm:$0xff] %vm701, %v3148
        %3181 = vst.msk [vmem:[#allocation3 + $0x50] sm:$0xff] %vm701, %v3149
        %3182 = vst.msk [vmem:[#allocation3 + $0x58] sm:$0xff] %vm701, %v3150
        %3183 = vst.msk [vmem:[#allocation3 + $0x60] sm:$0xff] %vm701, %v3151
        %3184 = vst.msk [vmem:[#allocation3 + $0x68] sm:$0xff] %vm701, %v3152
        %3185 = vst.msk [vmem:[#allocation3 + $0x70] sm:$0xff] %vm701, %v3153
        %3186 = vst.msk [vmem:[#allocation3 + $0x78] sm:$0xff] %vm701, %v3154
        %3187 = vst.msk [vmem:[#allocation3 + $0x80] sm:$0xff] %vm701, %v3155
        %3188 = vst.msk [vmem:[#allocation3 + $0x88] sm:$0xff] %vm701, %v3156
        %3189 = vst.msk [vmem:[#allocation3 + $0x90] sm:$0xff] %vm701, %v3157
        %3190 = vst.msk [vmem:[#allocation3 + $0x98] sm:$0xff] %vm701, %v3158
        %3191 = vst.msk [vmem:[#allocation3 + $0xa0] sm:$0xff] %vm701, %v3159
        %3192 = vst.msk [vmem:[#allocation3 + $0xa8] sm:$0xff] %vm701, %v3160
        %3193 = vst.msk [vmem:[#allocation3 + $0xb0] sm:$0xff] %vm701, %v3161
        %3194 = vst.msk [vmem:[#allocation3 + $0xb8] sm:$0xff] %vm701, %v3162
        %3195 = vst.msk [vmem:[#allocation3 + $0xc0] sm:$0xff] %vm701, %v3163
        %3196 = vst.msk [vmem:[#allocation3 + $0xc8] sm:$0xff] %vm701, %v3164
        %3197 = vst.msk [vmem:[#allocation3 + $0xd0] sm:$0xff] %vm701, %v3165
        %3198 = vst.msk [vmem:[#allocation3 + $0xd8] sm:$0xff] %vm701, %v3166
        %3199 = vst.msk [vmem:[#allocation3 + $0xe0] sm:$0xff] %vm701, %v3167
        %3200 = vst.msk [vmem:[#allocation3 + $0xe8] sm:$0xff] %vm701, %v3168
        %3201 = vst.msk [vmem:[#allocation3 + $0xf0] sm:$0xff] %vm701, %v3169
        %3202 = vst.msk [vmem:[#allocation3 + $0xf8] sm:$0xff] %vm701, %v3170
        %v3206 = vrot.slane %v841, 1
        %v3207 = vrot.slane %v842, 1
        %v3208 = vsel %vm1250, %v3206, %v3207
        %v3209 = vrot.slane %v843, 1
        %v3210 = vsel %vm1250, %v3207, %v3209
        %v3213 = vpack.c.bf16 %v3210, %v3208
        %v3214 = vld [vmem:[%s3 + $0x1c] sm:$0xf]
        %v3215 = vld [vmem:[#allocation3] sm:$0xff]
        %v3216 = vld [vmem:[#allocation3 + $0x8] sm:$0xff]
        %v3217 = vld [vmem:[#allocation3 + $0x10] sm:$0xff]
        %v3218 = vld [vmem:[#allocation3 + $0x18] sm:$0xff]
        %v3219 = vld [vmem:[#allocation3 + $0x20] sm:$0xff]
        %v3220 = vld [vmem:[#allocation3 + $0x28] sm:$0xff]
        %v3221 = vld [vmem:[#allocation3 + $0x30] sm:$0xff]
        %v3222 = vld [vmem:[#allocation3 + $0x38] sm:$0xff]
        %v3223 = vld [vmem:[#allocation3 + $0x40] sm:$0xff]
        %v3224 = vld [vmem:[#allocation3 + $0x48] sm:$0xff]
        %v3225 = vld [vmem:[#allocation3 + $0x50] sm:$0xff]
        %v3226 = vld [vmem:[#allocation3 + $0x58] sm:$0xff]
        %v3227 = vld [vmem:[#allocation3 + $0x60] sm:$0xff]
        %v3228 = vld [vmem:[#allocation3 + $0x68] sm:$0xff]
        %v3229 = vld [vmem:[#allocation3 + $0x70] sm:$0xff]
        %v3230 = vld [vmem:[#allocation3 + $0x78] sm:$0xff]
        %v3231 = vld [vmem:[#allocation3 + $0x80] sm:$0xff]
        %v3232 = vld [vmem:[#allocation3 + $0x88] sm:$0xff]
        %v3233 = vld [vmem:[#allocation3 + $0x90] sm:$0xff]
        %v3234 = vld [vmem:[#allocation3 + $0x98] sm:$0xff]
        %v3235 = vld [vmem:[#allocation3 + $0xa0] sm:$0xff]
        %v3236 = vld [vmem:[#allocation3 + $0xa8] sm:$0xff]
        %v3237 = vld [vmem:[#allocation3 + $0xb0] sm:$0xff]
        %v3238 = vld [vmem:[#allocation3 + $0xb8] sm:$0xff]
        %v3239 = vld [vmem:[#allocation3 + $0xc0] sm:$0xff]
        %v3240 = vld [vmem:[#allocation3 + $0xc8] sm:$0xff]
        %v3241 = vld [vmem:[#allocation3 + $0xd0] sm:$0xff]
        %v3242 = vld [vmem:[#allocation3 + $0xd8] sm:$0xff]
        %v3243 = vld [vmem:[#allocation3 + $0xe0] sm:$0xff]
        %v3244 = vld [vmem:[#allocation3 + $0xe8] sm:$0xff]
        %v3245 = vld [vmem:[#allocation3 + $0xf0] sm:$0xff]
        %v3246 = vld [vmem:[#allocation3 + $0xf8] sm:$0xff]
        %v3248 = vsel %vm701, %v3213, 0
        %v3251 = vsel %vm973, %v3214, 0
        %3253 = vmatprep.subr.bf16.mxu0 0
        %3254 = vmatpush1.bf16.msra.mxu0 %v3251
        %3255 = vmatprep.subr.bf16.mxu0 0
        %3256 = vmatpush1.bf16.msra.mxu0 0
        %3257 = vmatprep.subr.bf16.mxu0 0
        %3258 = vmatpush1.bf16.msra.mxu0 0
        %3259 = vmatprep.subr.bf16.mxu0 0
        %3260 = vmatpush1.bf16.msra.mxu0 0
        %3261 = vmatprep.subr.bf16.mxu0 0
        %3262 = vmatpush1.bf16.msra.mxu0 0
        %3263 = vmatprep.subr.bf16.mxu0 0
        %3264 = vmatpush1.bf16.msra.mxu0 0
        %3265 = vmatprep.subr.bf16.mxu0 0
        %3266 = vmatpush1.bf16.msra.mxu0 0
        %3267 = vmatprep.subr.bf16.mxu0 0
        %3268 = vmatpush1.bf16.msra.mxu0 0
        %3269 = vmatprep.subr.bf16.mxu0 0
        %3270 = vmatpush1.bf16.msra.mxu0 0
        %3271 = vmatprep.subr.bf16.mxu0 0
        %3272 = vmatpush1.bf16.msra.mxu0 0
        %3273 = vmatprep.subr.bf16.mxu0 0
        %3274 = vmatpush1.bf16.msra.mxu0 0
        %3275 = vmatprep.subr.bf16.mxu0 0
        %3276 = vmatpush1.bf16.msra.mxu0 0
        %3277 = vmatprep.subr.bf16.mxu0 0
        %3278 = vmatpush1.bf16.msra.mxu0 0
        %3279 = vmatprep.subr.bf16.mxu0 0
        %3280 = vmatpush1.bf16.msra.mxu0 0
        %3281 = vmatprep.subr.bf16.mxu0 0
        %3282 = vmatpush1.bf16.msra.mxu0 0
        %3283 = vmatprep.subr.bf16.mxu0 0
        %3284 = vmatpush1.bf16.msra.mxu0 0
        %3285 = vmatprep.mubr.bf16.mxu0 0
        %3286 = vmatmul.mubr.bf16.gmra.mrb[0].mxu0 %v1419
        %v3287 = vpop.f32.mrb[0].mxu0
        %v3288 = vadd.f32 0.0, %v3287
        %v3289 = vpop.f32.mrb[0].mxu0
        %v3290 = vpop.f32.mrb[0].mxu0
        %v3291 = vadd.f32 0.0, %v3290
        %v3292 = vpop.f32.mrb[0].mxu0
        %3293 = vmatprep.mubr.bf16.mxu0 0
        %3294 = vmatmul.mubr.bf16.gmra.mrb[0].mxu0 %v1422
        %v3295 = vpop.f32.mrb[0].mxu0
        %v3296 = vadd.f32 0.0, %v3295
        %v3297 = vpop.f32.mrb[0].mxu0
        %v3298 = vpop.f32.mrb[0].mxu0
        %v3299 = vadd.f32 0.0, %v3298
        %v3300 = vpop.f32.mrb[0].mxu0
        %3301 = vmatprep.mubr.bf16.mxu0 0
        %3302 = vmatmul.mubr.bf16.gmra.mrb[0].mxu0 %v1425
        %v3303 = vpop.f32.mrb[0].mxu0
        %v3304 = vadd.f32 0.0, %v3303
        %v3305 = vpop.f32.mrb[0].mxu0
        %v3306 = vpop.f32.mrb[0].mxu0
        %v3307 = vadd.f32 0.0, %v3306
        %v3308 = vpop.f32.mrb[0].mxu0
        %3309 = vmatprep.mubr.bf16.mxu0 0
        %3310 = vmatmul.mubr.bf16.gmra.mrb[0].mxu0 %v1428
        %v3311 = vpop.f32.mrb[0].mxu0
        %v3312 = vadd.f32 0.0, %v3311
        %v3313 = vpop.f32.mrb[0].mxu0
        %v3314 = vpop.f32.mrb[0].mxu0
        %v3315 = vadd.f32 0.0, %v3314
        %v3316 = vpop.f32.mrb[0].mxu0
        %3317 = vmatprep.mubr.bf16.mxu0 0
        %3318 = vmatmul.mubr.bf16.gmra.mrb[0].mxu0 %v1431
        %v3319 = vpop.f32.mrb[0].mxu0
        %v3320 = vadd.f32 0.0, %v3319
        %v3321 = vpop.f32.mrb[0].mxu0
        %v3322 = vpop.f32.mrb[0].mxu0
        %v3323 = vadd.f32 0.0, %v3322
        %v3324 = vpop.f32.mrb[0].mxu0
        %3325 = vmatprep.mubr.bf16.mxu0 0
        %3326 = vmatmul.mubr.bf16.gmra.mrb[0].mxu0 %v1434
        %v3327 = vpop.f32.mrb[0].mxu0
        %v3328 = vadd.f32 0.0, %v3327
        %v3329 = vpop.f32.mrb[0].mxu0
        %v3330 = vpop.f32.mrb[0].mxu0
        %v3331 = vadd.f32 0.0, %v3330
        %v3332 = vpop.f32.mrb[0].mxu0
        %3333 = vmatprep.mubr.bf16.mxu0 0
        %3334 = vmatmul.mubr.bf16.gmra.mrb[0].mxu0 %v1437
        %v3335 = vpop.f32.mrb[0].mxu0
        %v3336 = vadd.f32 0.0, %v3335
        %v3337 = vpop.f32.mrb[0].mxu0
        %v3338 = vpop.f32.mrb[0].mxu0
        %v3339 = vadd.f32 0.0, %v3338
        %v3340 = vpop.f32.mrb[0].mxu0
        %3341 = vmatprep.mubr.bf16.mxu0 0
        %3342 = vmatmul.mubr.bf16.gmra.mrb[0].mxu0 %v1440
        %v3343 = vpop.f32.mrb[0].mxu0
        %v3344 = vadd.f32 0.0, %v3343
        %v3345 = vpop.f32.mrb[0].mxu0
        %v3346 = vpop.f32.mrb[0].mxu0
        %v3347 = vadd.f32 0.0, %v3346
        %v3348 = vpop.f32.mrb[0].mxu0
        %3349 = vmatprep.mubr.bf16.mxu0 0
        %3350 = vmatmul.mubr.bf16.gmra.mrb[0].mxu0 %v1443
        %v3351 = vpop.f32.mrb[0].mxu0
        %v3352 = vadd.f32 0.0, %v3351
        %v3353 = vpop.f32.mrb[0].mxu0
        %v3354 = vpop.f32.mrb[0].mxu0
        %v3355 = vadd.f32 0.0, %v3354
        %v3356 = vpop.f32.mrb[0].mxu0
        %3357 = vmatprep.mubr.bf16.mxu0 0
        %3358 = vmatmul.mubr.bf16.gmra.mrb[0].mxu0 %v1446
        %v3359 = vpop.f32.mrb[0].mxu0
        %v3360 = vadd.f32 0.0, %v3359
        %v3361 = vpop.f32.mrb[0].mxu0
        %v3362 = vpop.f32.mrb[0].mxu0
        %v3363 = vadd.f32 0.0, %v3362
        %v3364 = vpop.f32.mrb[0].mxu0
        %3365 = vmatprep.mubr.bf16.mxu0 0
        %3366 = vmatmul.mubr.bf16.gmra.mrb[0].mxu0 %v1449
        %v3367 = vpop.f32.mrb[0].mxu0
        %v3368 = vadd.f32 0.0, %v3367
        %v3369 = vpop.f32.mrb[0].mxu0
        %v3370 = vpop.f32.mrb[0].mxu0
        %v3371 = vadd.f32 0.0, %v3370
        %v3372 = vpop.f32.mrb[0].mxu0
        %3373 = vmatprep.mubr.bf16.mxu0 0
        %3374 = vmatmul.mubr.bf16.gmra.mrb[0].mxu0 %v1452
        %v3375 = vpop.f32.mrb[0].mxu0
        %v3376 = vadd.f32 0.0, %v3375
        %v3377 = vpop.f32.mrb[0].mxu0
        %v3378 = vpop.f32.mrb[0].mxu0
        %v3379 = vadd.f32 0.0, %v3378
        %v3380 = vpop.f32.mrb[0].mxu0
        %3381 = vmatprep.mubr.bf16.mxu0 0
        %3382 = vmatmul.mubr.bf16.gmra.mrb[0].mxu0 %v1455
        %v3383 = vpop.f32.mrb[0].mxu0
        %v3384 = vadd.f32 0.0, %v3383
        %v3385 = vpop.f32.mrb[0].mxu0
        %v3386 = vpop.f32.mrb[0].mxu0
        %v3387 = vadd.f32 0.0, %v3386
        %v3388 = vpop.f32.mrb[0].mxu0
        %3389 = vmatprep.mubr.bf16.mxu0 0
        %3390 = vmatmul.mubr.bf16.gmra.mrb[0].mxu0 %v1458
        %v3391 = vpop.f32.mrb[0].mxu0
        %v3392 = vadd.f32 0.0, %v3391
        %v3393 = vpop.f32.mrb[0].mxu0
        %v3394 = vpop.f32.mrb[0].mxu0
        %v3395 = vadd.f32 0.0, %v3394
        %v3396 = vpop.f32.mrb[0].mxu0
        %3397 = vmatprep.mubr.bf16.mxu0 0
        %3398 = vmatmul.mubr.bf16.gmra.mrb[0].mxu0 %v2436
        %v3399 = vpop.f32.mrb[0].mxu0
        %v3400 = vadd.f32 0.0, %v3399
        %v3401 = vpop.f32.mrb[0].mxu0
        %v3402 = vpop.f32.mrb[0].mxu0
        %v3403 = vadd.f32 0.0, %v3402
        %v3404 = vpop.f32.mrb[0].mxu0
        %3405 = vmatprep.mubr.bf16.mxu0 0
        %3406 = vmatmul.mubr.bf16.gmra.mrb[0].mxu0 %v3248
        %v3407 = vpop.f32.mrb[0].mxu0
        %v3408 = vadd.f32 0.0, %v3407
        %v3409 = vpop.f32.mrb[0].mxu0
        %v3410 = vpop.f32.mrb[0].mxu0
        %v3411 = vadd.f32 0.0, %v3410
        %v3412 = vpop.f32.mrb[0].mxu0
        %3413 = vdwg.mxu0
        %v3414 = vadd.f32 %v3215, %v3288
        %v3415 = vadd.f32 %v3216, %v3291
        %v3416 = vadd.f32 %v3217, %v3296
        %v3417 = vadd.f32 %v3218, %v3299
        %v3418 = vadd.f32 %v3219, %v3304
        %v3419 = vadd.f32 %v3220, %v3307
        %v3420 = vadd.f32 %v3221, %v3312
        %v3421 = vadd.f32 %v3222, %v3315
        %v3422 = vadd.f32 %v3223, %v3320
        %v3423 = vadd.f32 %v3224, %v3323
        %v3424 = vadd.f32 %v3225, %v3328
        %v3425 = vadd.f32 %v3226, %v3331
        %v3426 = vadd.f32 %v3227, %v3336
        %v3427 = vadd.f32 %v3228, %v3339
        %v3428 = vadd.f32 %v3229, %v3344
        %v3429 = vadd.f32 %v3230, %v3347
        %v3430 = vadd.f32 %v3231, %v3352
        %v3431 = vadd.f32 %v3232, %v3355
        %v3432 = vadd.f32 %v3233, %v3360
        %v3433 = vadd.f32 %v3234, %v3363
        %v3434 = vadd.f32 %v3235, %v3368
        %v3435 = vadd.f32 %v3236, %v3371
        %v3436 = vadd.f32 %v3237, %v3376
        %v3437 = vadd.f32 %v3238, %v3379
        %v3438 = vadd.f32 %v3239, %v3384
        %v3439 = vadd.f32 %v3240, %v3387
        %v3440 = vadd.f32 %v3241, %v3392
        %v3441 = vadd.f32 %v3242, %v3395
        %v3442 = vadd.f32 %v3243, %v3400
        %v3443 = vadd.f32 %v3244, %v3403
        %v3444 = vadd.f32 %v3245, %v3408
        %v3445 = vadd.f32 %v3246, %v3411
        %3446 = vst.msk [vmem:[#allocation3] sm:$0xff] %vm701, %v3414
        %3447 = vst.msk [vmem:[#allocation3 + $0x8] sm:$0xff] %vm701, %v3415
        %3448 = vst.msk [vmem:[#allocation3 + $0x10] sm:$0xff] %vm701, %v3416
        %3449 = vst.msk [vmem:[#allocation3 + $0x18] sm:$0xff] %vm701, %v3417
        %3450 = vst.msk [vmem:[#allocation3 + $0x20] sm:$0xff] %vm701, %v3418
        %3451 = vst.msk [vmem:[#allocation3 + $0x28] sm:$0xff] %vm701, %v3419
        %3452 = vst.msk [vmem:[#allocation3 + $0x30] sm:$0xff] %vm701, %v3420
        %3453 = vst.msk [vmem:[#allocation3 + $0x38] sm:$0xff] %vm701, %v3421
        %3454 = vst.msk [vmem:[#allocation3 + $0x40] sm:$0xff] %vm701, %v3422
        %3455 = vst.msk [vmem:[#allocation3 + $0x48] sm:$0xff] %vm701, %v3423
        %3456 = vst.msk [vmem:[#allocation3 + $0x50] sm:$0xff] %vm701, %v3424
        %3457 = vst.msk [vmem:[#allocation3 + $0x58] sm:$0xff] %vm701, %v3425
        %3458 = vst.msk [vmem:[#allocation3 + $0x60] sm:$0xff] %vm701, %v3426
        %3459 = vst.msk [vmem:[#allocation3 + $0x68] sm:$0xff] %vm701, %v3427
        %3460 = vst.msk [vmem:[#allocation3 + $0x70] sm:$0xff] %vm701, %v3428
        %3461 = vst.msk [vmem:[#allocation3 + $0x78] sm:$0xff] %vm701, %v3429
        %3462 = vst.msk [vmem:[#allocation3 + $0x80] sm:$0xff] %vm701, %v3430
        %3463 = vst.msk [vmem:[#allocation3 + $0x88] sm:$0xff] %vm701, %v3431
        %3464 = vst.msk [vmem:[#allocation3 + $0x90] sm:$0xff] %vm701, %v3432
        %3465 = vst.msk [vmem:[#allocation3 + $0x98] sm:$0xff] %vm701, %v3433
        %3466 = vst.msk [vmem:[#allocation3 + $0xa0] sm:$0xff] %vm701, %v3434
        %3467 = vst.msk [vmem:[#allocation3 + $0xa8] sm:$0xff] %vm701, %v3435
        %3468 = vst.msk [vmem:[#allocation3 + $0xb0] sm:$0xff] %vm701, %v3436
        %3469 = vst.msk [vmem:[#allocation3 + $0xb8] sm:$0xff] %vm701, %v3437
        %3470 = vst.msk [vmem:[#allocation3 + $0xc0] sm:$0xff] %vm701, %v3438
        %3471 = vst.msk [vmem:[#allocation3 + $0xc8] sm:$0xff] %vm701, %v3439
        %3472 = vst.msk [vmem:[#allocation3 + $0xd0] sm:$0xff] %vm701, %v3440
        %3473 = vst.msk [vmem:[#allocation3 + $0xd8] sm:$0xff] %vm701, %v3441
        %3474 = vst.msk [vmem:[#allocation3 + $0xe0] sm:$0xff] %vm701, %v3442
        %3475 = vst.msk [vmem:[#allocation3 + $0xe8] sm:$0xff] %vm701, %v3443
        %3476 = vst.msk [vmem:[#allocation3 + $0xf0] sm:$0xff] %vm701, %v3444
        %3477 = vst.msk [vmem:[#allocation3 + $0xf8] sm:$0xff] %vm701, %v3445
        %v3478 = vrot.slane %v841, 2
        %v3479 = vrot.slane %v842, 2
        %v3480 = vsel %vm1688, %v3478, %v3479
        %v3481 = vrot.slane %v843, 2
        %v3482 = vsel %vm1688, %v3479, %v3481
        %v3485 = vpack.c.bf16 %v3482, %v3480
        %v3486 = vld [vmem:[%s3 + $0x20] sm:$0xf]
        %v3487 = vld [vmem:[#allocation3] sm:$0xff]
        %v3488 = vld [vmem:[#allocation3 + $0x8] sm:$0xff]
        %v3489 = vld [vmem:[#allocation3 + $0x10] sm:$0xff]
        %v3490 = vld [vmem:[#allocation3 + $0x18] sm:$0xff]
        %v3491 = vld [vmem:[#allocation3 + $0x20] sm:$0xff]
        %v3492 = vld [vmem:[#allocation3 + $0x28] sm:$0xff]
        %v3493 = vld [vmem:[#allocation3 + $0x30] sm:$0xff]
        %v3494 = vld [vmem:[#allocation3 + $0x38] sm:$0xff]
        %v3495 = vld [vmem:[#allocation3 + $0x40] sm:$0xff]
        %v3496 = vld [vmem:[#allocation3 + $0x48] sm:$0xff]
        %v3497 = vld [vmem:[#allocation3 + $0x50] sm:$0xff]
        %v3498 = vld [vmem:[#allocation3 + $0x58] sm:$0xff]
        %v3499 = vld [vmem:[#allocation3 + $0x60] sm:$0xff]
        %v3500 = vld [vmem:[#allocation3 + $0x68] sm:$0xff]
        %v3501 = vld [vmem:[#allocation3 + $0x70] sm:$0xff]
        %v3502 = vld [vmem:[#allocation3 + $0x78] sm:$0xff]
        %v3503 = vld [vmem:[#allocation3 + $0x80] sm:$0xff]
        %v3504 = vld [vmem:[#allocation3 + $0x88] sm:$0xff]
        %v3505 = vld [vmem:[#allocation3 + $0x90] sm:$0xff]
        %v3506 = vld [vmem:[#allocation3 + $0x98] sm:$0xff]
        %v3507 = vld [vmem:[#allocation3 + $0xa0] sm:$0xff]
        %v3508 = vld [vmem:[#allocation3 + $0xa8] sm:$0xff]
        %v3509 = vld [vmem:[#allocation3 + $0xb0] sm:$0xff]
        %v3510 = vld [vmem:[#allocation3 + $0xb8] sm:$0xff]
        %v3511 = vld [vmem:[#allocation3 + $0xc0] sm:$0xff]
        %v3512 = vld [vmem:[#allocation3 + $0xc8] sm:$0xff]
        %v3513 = vld [vmem:[#allocation3 + $0xd0] sm:$0xff]
        %v3514 = vld [vmem:[#allocation3 + $0xd8] sm:$0xff]
        %v3515 = vld [vmem:[#allocation3 + $0xe0] sm:$0xff]
        %v3516 = vld [vmem:[#allocation3 + $0xe8] sm:$0xff]
        %v3517 = vld [vmem:[#allocation3 + $0xf0] sm:$0xff]
        %v3518 = vld [vmem:[#allocation3 + $0xf8] sm:$0xff]
        %v3520 = vsel %vm701, %v3485, 0
        %v3523 = vsel %vm973, %v3486, 0
        %3525 = vmatprep.subr.bf16.mxu0 0
        %3526 = vmatpush1.bf16.msra.mxu0 %v3523
        %3527 = vmatprep.subr.bf16.mxu0 0
        %3528 = vmatpush1.bf16.msra.mxu0 0
        %3529 = vmatprep.subr.bf16.mxu0 0
        %3530 = vmatpush1.bf16.msra.mxu0 0
        %3531 = vmatprep.subr.bf16.mxu0 0
        %3532 = vmatpush1.bf16.msra.mxu0 0
        %3533 = vmatprep.subr.bf16.mxu0 0
        %3534 = vmatpush1.bf16.msra.mxu0 0
        %3535 = vmatprep.subr.bf16.mxu0 0
        %3536 = vmatpush1.bf16.msra.mxu0 0
        %3537 = vmatprep.subr.bf16.mxu0 0
        %3538 = vmatpush1.bf16.msra.mxu0 0
        %3539 = vmatprep.subr.bf16.mxu0 0
        %3540 = vmatpush1.bf16.msra.mxu0 0
        %3541 = vmatprep.subr.bf16.mxu0 0
        %3542 = vmatpush1.bf16.msra.mxu0 0
        %3543 = vmatprep.subr.bf16.mxu0 0
        %3544 = vmatpush1.bf16.msra.mxu0 0
        %3545 = vmatprep.subr.bf16.mxu0 0
        %3546 = vmatpush1.bf16.msra.mxu0 0
        %3547 = vmatprep.subr.bf16.mxu0 0
        %3548 = vmatpush1.bf16.msra.mxu0 0
        %3549 = vmatprep.subr.bf16.mxu0 0
        %3550 = vmatpush1.bf16.msra.mxu0 0
        %3551 = vmatprep.subr.bf16.mxu0 0
        %3552 = vmatpush1.bf16.msra.mxu0 0
        %3553 = vmatprep.subr.bf16.mxu0 0
        %3554 = vmatpush1.bf16.msra.mxu0 0
        %3555 = vmatprep.subr.bf16.mxu0 0
        %3556 = vmatpush1.bf16.msra.mxu0 0
        %3557 = vmatprep.mubr.bf16.mxu0 0
        %3558 = vmatmul.mubr.bf16.gmra.mrb[0].mxu0 %v1857
        %v3559 = vpop.f32.mrb[0].mxu0
        %v3560 = vadd.f32 0.0, %v3559
        %v3561 = vpop.f32.mrb[0].mxu0
        %v3562 = vpop.f32.mrb[0].mxu0
        %v3563 = vadd.f32 0.0, %v3562
        %v3564 = vpop.f32.mrb[0].mxu0
        %3565 = vmatprep.mubr.bf16.mxu0 0
        %3566 = vmatmul.mubr.bf16.gmra.mrb[0].mxu0 %v1860
        %v3567 = vpop.f32.mrb[0].mxu0
        %v3568 = vadd.f32 0.0, %v3567
        %v3569 = vpop.f32.mrb[0].mxu0
        %v3570 = vpop.f32.mrb[0].mxu0
        %v3571 = vadd.f32 0.0, %v3570
        %v3572 = vpop.f32.mrb[0].mxu0
        %3573 = vmatprep.mubr.bf16.mxu0 0
        %3574 = vmatmul.mubr.bf16.gmra.mrb[0].mxu0 %v1863
        %v3575 = vpop.f32.mrb[0].mxu0
        %v3576 = vadd.f32 0.0, %v3575
        %v3577 = vpop.f32.mrb[0].mxu0
        %v3578 = vpop.f32.mrb[0].mxu0
        %v3579 = vadd.f32 0.0, %v3578
        %v3580 = vpop.f32.mrb[0].mxu0
        %3581 = vmatprep.mubr.bf16.mxu0 0
        %3582 = vmatmul.mubr.bf16.gmra.mrb[0].mxu0 %v1866
        %v3583 = vpop.f32.mrb[0].mxu0
        %v3584 = vadd.f32 0.0, %v3583
        %v3585 = vpop.f32.mrb[0].mxu0
        %v3586 = vpop.f32.mrb[0].mxu0
        %v3587 = vadd.f32 0.0, %v3586
        %v3588 = vpop.f32.mrb[0].mxu0
        %3589 = vmatprep.mubr.bf16.mxu0 0
        %3590 = vmatmul.mubr.bf16.gmra.mrb[0].mxu0 %v1869
        %v3591 = vpop.f32.mrb[0].mxu0
        %v3592 = vadd.f32 0.0, %v3591
        %v3593 = vpop.f32.mrb[0].mxu0
        %v3594 = vpop.f32.mrb[0].mxu0
        %v3595 = vadd.f32 0.0, %v3594
        %v3596 = vpop.f32.mrb[0].mxu0
        %3597 = vmatprep.mubr.bf16.mxu0 0
        %3598 = vmatmul.mubr.bf16.gmra.mrb[0].mxu0 %v1872
        %v3599 = vpop.f32.mrb[0].mxu0
        %v3600 = vadd.f32 0.0, %v3599
        %v3601 = vpop.f32.mrb[0].mxu0
        %v3602 = vpop.f32.mrb[0].mxu0
        %v3603 = vadd.f32 0.0, %v3602
        %v3604 = vpop.f32.mrb[0].mxu0
        %3605 = vmatprep.mubr.bf16.mxu0 0
        %3606 = vmatmul.mubr.bf16.gmra.mrb[0].mxu0 %v1875
        %v3607 = vpop.f32.mrb[0].mxu0
        %v3608 = vadd.f32 0.0, %v3607
        %v3609 = vpop.f32.mrb[0].mxu0
        %v3610 = vpop.f32.mrb[0].mxu0
        %v3611 = vadd.f32 0.0, %v3610
        %v3612 = vpop.f32.mrb[0].mxu0
        %3613 = vmatprep.mubr.bf16.mxu0 0
        %3614 = vmatmul.mubr.bf16.gmra.mrb[0].mxu0 %v1878
        %v3615 = vpop.f32.mrb[0].mxu0
        %v3616 = vadd.f32 0.0, %v3615
        %v3617 = vpop.f32.mrb[0].mxu0
        %v3618 = vpop.f32.mrb[0].mxu0
        %v3619 = vadd.f32 0.0, %v3618
        %v3620 = vpop.f32.mrb[0].mxu0
        %3621 = vmatprep.mubr.bf16.mxu0 0
        %3622 = vmatmul.mubr.bf16.gmra.mrb[0].mxu0 %v1881
        %v3623 = vpop.f32.mrb[0].mxu0
        %v3624 = vadd.f32 0.0, %v3623
        %v3625 = vpop.f32.mrb[0].mxu0
        %v3626 = vpop.f32.mrb[0].mxu0
        %v3627 = vadd.f32 0.0, %v3626
        %v3628 = vpop.f32.mrb[0].mxu0
        %3629 = vmatprep.mubr.bf16.mxu0 0
        %3630 = vmatmul.mubr.bf16.gmra.mrb[0].mxu0 %v1884
        %v3631 = vpop.f32.mrb[0].mxu0
        %v3632 = vadd.f32 0.0, %v3631
        %v3633 = vpop.f32.mrb[0].mxu0
        %v3634 = vpop.f32.mrb[0].mxu0
        %v3635 = vadd.f32 0.0, %v3634
        %v3636 = vpop.f32.mrb[0].mxu0
        %3637 = vmatprep.mubr.bf16.mxu0 0
        %3638 = vmatmul.mubr.bf16.gmra.mrb[0].mxu0 %v1887
        %v3639 = vpop.f32.mrb[0].mxu0
        %v3640 = vadd.f32 0.0, %v3639
        %v3641 = vpop.f32.mrb[0].mxu0
        %v3642 = vpop.f32.mrb[0].mxu0
        %v3643 = vadd.f32 0.0, %v3642
        %v3644 = vpop.f32.mrb[0].mxu0
        %3645 = vmatprep.mubr.bf16.mxu0 0
        %3646 = vmatmul.mubr.bf16.gmra.mrb[0].mxu0 %v1890
        %v3647 = vpop.f32.mrb[0].mxu0
        %v3648 = vadd.f32 0.0, %v3647
        %v3649 = vpop.f32.mrb[0].mxu0
        %v3650 = vpop.f32.mrb[0].mxu0
        %v3651 = vadd.f32 0.0, %v3650
        %v3652 = vpop.f32.mrb[0].mxu0
        %3653 = vmatprep.mubr.bf16.mxu0 0
        %3654 = vmatmul.mubr.bf16.gmra.mrb[0].mxu0 %v1893
        %v3655 = vpop.f32.mrb[0].mxu0
        %v3656 = vadd.f32 0.0, %v3655
        %v3657 = vpop.f32.mrb[0].mxu0
        %v3658 = vpop.f32.mrb[0].mxu0
        %v3659 = vadd.f32 0.0, %v3658
        %v3660 = vpop.f32.mrb[0].mxu0
        %3661 = vmatprep.mubr.bf16.mxu0 0
        %3662 = vmatmul.mubr.bf16.gmra.mrb[0].mxu0 %v1896
        %v3663 = vpop.f32.mrb[0].mxu0
        %v3664 = vadd.f32 0.0, %v3663
        %v3665 = vpop.f32.mrb[0].mxu0
        %v3666 = vpop.f32.mrb[0].mxu0
        %v3667 = vadd.f32 0.0, %v3666
        %v3668 = vpop.f32.mrb[0].mxu0
        %3669 = vmatprep.mubr.bf16.mxu0 0
        %3670 = vmatmul.mubr.bf16.gmra.mrb[0].mxu0 %v2708
        %v3671 = vpop.f32.mrb[0].mxu0
        %v3672 = vadd.f32 0.0, %v3671
        %v3673 = vpop.f32.mrb[0].mxu0
        %v3674 = vpop.f32.mrb[0].mxu0
        %v3675 = vadd.f32 0.0, %v3674
        %v3676 = vpop.f32.mrb[0].mxu0
        %3677 = vmatprep.mubr.bf16.mxu0 0
        %3678 = vmatmul.mubr.bf16.gmra.mrb[0].mxu0 %v3520
        %v3679 = vpop.f32.mrb[0].mxu0
        %v3680 = vadd.f32 0.0, %v3679
        %v3681 = vpop.f32.mrb[0].mxu0
        %v3682 = vpop.f32.mrb[0].mxu0
        %v3683 = vadd.f32 0.0, %v3682
        %v3684 = vpop.f32.mrb[0].mxu0
        %3685 = vdwg.mxu0
        %v3686 = vadd.f32 %v3487, %v3560
        %v3687 = vadd.f32 %v3488, %v3563
        %v3688 = vadd.f32 %v3489, %v3568
        %v3689 = vadd.f32 %v3490, %v3571
        %v3690 = vadd.f32 %v3491, %v3576
        %v3691 = vadd.f32 %v3492, %v3579
        %v3692 = vadd.f32 %v3493, %v3584
        %v3693 = vadd.f32 %v3494, %v3587
        %v3694 = vadd.f32 %v3495, %v3592
        %v3695 = vadd.f32 %v3496, %v3595
        %v3696 = vadd.f32 %v3497, %v3600
        %v3697 = vadd.f32 %v3498, %v3603
        %v3698 = vadd.f32 %v3499, %v3608
        %v3699 = vadd.f32 %v3500, %v3611
        %v3700 = vadd.f32 %v3501, %v3616
        %v3701 = vadd.f32 %v3502, %v3619
        %v3702 = vadd.f32 %v3503, %v3624
        %v3703 = vadd.f32 %v3504, %v3627
        %v3704 = vadd.f32 %v3505, %v3632
        %v3705 = vadd.f32 %v3506, %v3635
        %v3706 = vadd.f32 %v3507, %v3640
        %v3707 = vadd.f32 %v3508, %v3643
        %v3708 = vadd.f32 %v3509, %v3648
        %v3709 = vadd.f32 %v3510, %v3651
        %v3710 = vadd.f32 %v3511, %v3656
        %v3711 = vadd.f32 %v3512, %v3659
        %v3712 = vadd.f32 %v3513, %v3664
        %v3713 = vadd.f32 %v3514, %v3667
        %v3714 = vadd.f32 %v3515, %v3672
        %v3715 = vadd.f32 %v3516, %v3675
        %v3716 = vadd.f32 %v3517, %v3680
        %v3717 = vadd.f32 %v3518, %v3683
        %3718 = vst.msk [vmem:[#allocation3] sm:$0xff] %vm701, %v3686
        %3719 = vst.msk [vmem:[#allocation3 + $0x8] sm:$0xff] %vm701, %v3687
        %3720 = vst.msk [vmem:[#allocation3 + $0x10] sm:$0xff] %vm701, %v3688
        %3721 = vst.msk [vmem:[#allocation3 + $0x18] sm:$0xff] %vm701, %v3689
        %3722 = vst.msk [vmem:[#allocation3 + $0x20] sm:$0xff] %vm701, %v3690
        %3723 = vst.msk [vmem:[#allocation3 + $0x28] sm:$0xff] %vm701, %v3691
        %3724 = vst.msk [vmem:[#allocation3 + $0x30] sm:$0xff] %vm701, %v3692
        %3725 = vst.msk [vmem:[#allocation3 + $0x38] sm:$0xff] %vm701, %v3693
        %3726 = vst.msk [vmem:[#allocation3 + $0x40] sm:$0xff] %vm701, %v3694
        %3727 = vst.msk [vmem:[#allocation3 + $0x48] sm:$0xff] %vm701, %v3695
        %3728 = vst.msk [vmem:[#allocation3 + $0x50] sm:$0xff] %vm701, %v3696
        %3729 = vst.msk [vmem:[#allocation3 + $0x58] sm:$0xff] %vm701, %v3697
        %3730 = vst.msk [vmem:[#allocation3 + $0x60] sm:$0xff] %vm701, %v3698
        %3731 = vst.msk [vmem:[#allocation3 + $0x68] sm:$0xff] %vm701, %v3699
        %3732 = vst.msk [vmem:[#allocation3 + $0x70] sm:$0xff] %vm701, %v3700
        %3733 = vst.msk [vmem:[#allocation3 + $0x78] sm:$0xff] %vm701, %v3701
        %3734 = vst.msk [vmem:[#allocation3 + $0x80] sm:$0xff] %vm701, %v3702
        %3735 = vst.msk [vmem:[#allocation3 + $0x88] sm:$0xff] %vm701, %v3703
        %3736 = vst.msk [vmem:[#allocation3 + $0x90] sm:$0xff] %vm701, %v3704
        %3737 = vst.msk [vmem:[#allocation3 + $0x98] sm:$0xff] %vm701, %v3705
        %3738 = vst.msk [vmem:[#allocation3 + $0xa0] sm:$0xff] %vm701, %v3706
        %3739 = vst.msk [vmem:[#allocation3 + $0xa8] sm:$0xff] %vm701, %v3707
        %3740 = vst.msk [vmem:[#allocation3 + $0xb0] sm:$0xff] %vm701, %v3708
        %3741 = vst.msk [vmem:[#allocation3 + $0xb8] sm:$0xff] %vm701, %v3709
        %3742 = vst.msk [vmem:[#allocation3 + $0xc0] sm:$0xff] %vm701, %v3710
        %3743 = vst.msk [vmem:[#allocation3 + $0xc8] sm:$0xff] %vm701, %v3711
        %3744 = vst.msk [vmem:[#allocation3 + $0xd0] sm:$0xff] %vm701, %v3712
        %3745 = vst.msk [vmem:[#allocation3 + $0xd8] sm:$0xff] %vm701, %v3713
        %3746 = vst.msk [vmem:[#allocation3 + $0xe0] sm:$0xff] %vm701, %v3714
        %3747 = vst.msk [vmem:[#allocation3 + $0xe8] sm:$0xff] %vm701, %v3715
        %3748 = vst.msk [vmem:[#allocation3 + $0xf0] sm:$0xff] %vm701, %v3716
        %3749 = vst.msk [vmem:[#allocation3 + $0xf8] sm:$0xff] %vm701, %v3717
        %v3750 = vld [vmem:[#allocation3] sm:$0xff]
        %v3751 = vld [vmem:[#allocation3 + $0x8] sm:$0xff]
        %v3752 = vld [vmem:[#allocation3 + $0x10] sm:$0xff]
        %v3753 = vld [vmem:[#allocation3 + $0x18] sm:$0xff]
        %v3754 = vld [vmem:[#allocation3 + $0x20] sm:$0xff]
        %v3755 = vld [vmem:[#allocation3 + $0x28] sm:$0xff]
        %v3756 = vld [vmem:[#allocation3 + $0x30] sm:$0xff]
        %v3757 = vld [vmem:[#allocation3 + $0x38] sm:$0xff]
        %v3758 = vld [vmem:[#allocation3 + $0x40] sm:$0xff]
        %v3759 = vld [vmem:[#allocation3 + $0x48] sm:$0xff]
        %v3760 = vld [vmem:[#allocation3 + $0x50] sm:$0xff]
        %v3761 = vld [vmem:[#allocation3 + $0x58] sm:$0xff]
        %v3762 = vld [vmem:[#allocation3 + $0x60] sm:$0xff]
        %v3763 = vld [vmem:[#allocation3 + $0x68] sm:$0xff]
        %v3764 = vld [vmem:[#allocation3 + $0x70] sm:$0xff]
        %v3765 = vld [vmem:[#allocation3 + $0x78] sm:$0xff]
        %v3766 = vld [vmem:[#allocation3 + $0x80] sm:$0xff]
        %v3767 = vld [vmem:[#allocation3 + $0x88] sm:$0xff]
        %v3768 = vld [vmem:[#allocation3 + $0x90] sm:$0xff]
        %v3769 = vld [vmem:[#allocation3 + $0x98] sm:$0xff]
        %v3770 = vld [vmem:[#allocation3 + $0xa0] sm:$0xff]
        %v3771 = vld [vmem:[#allocation3 + $0xa8] sm:$0xff]
        %v3772 = vld [vmem:[#allocation3 + $0xb0] sm:$0xff]
        %v3773 = vld [vmem:[#allocation3 + $0xb8] sm:$0xff]
        %v3774 = vld [vmem:[#allocation3 + $0xc0] sm:$0xff]
        %v3775 = vld [vmem:[#allocation3 + $0xc8] sm:$0xff]
        %v3776 = vld [vmem:[#allocation3 + $0xd0] sm:$0xff]
        %v3777 = vld [vmem:[#allocation3 + $0xd8] sm:$0xff]
        %v3778 = vld [vmem:[#allocation3 + $0xe0] sm:$0xff]
        %v3779 = vld [vmem:[#allocation3 + $0xe8] sm:$0xff]
        %v3780 = vld [vmem:[#allocation3 + $0xf0] sm:$0xff]
        %v3781 = vld [vmem:[#allocation3 + $0xf8] sm:$0xff]
        %v3782 = vld [vmem:[%s4] sm:$0x1]
        %v3784 = vlaneseq
        %v3785 = vshrl.u32 %v3784, 7
        %v3786 = vsub.s32 0, %v3785
        %v3787 = vrot.slane %v3782, %v3786
        %v3789 = vadd.f32 %v3750, %v3787
        %v3790 = vadd.f32 %v3751, %v3787
        %v3791 = vadd.f32 %v3752, %v3787
        %v3792 = vadd.f32 %v3753, %v3787
        %v3793 = vadd.f32 %v3754, %v3787
        %v3794 = vadd.f32 %v3755, %v3787
        %v3795 = vadd.f32 %v3756, %v3787
        %v3796 = vadd.f32 %v3757, %v3787
        %v3797 = vadd.f32 %v3758, %v3787
        %v3798 = vadd.f32 %v3759, %v3787
        %v3799 = vadd.f32 %v3760, %v3787
        %v3800 = vadd.f32 %v3761, %v3787
        %v3801 = vadd.f32 %v3762, %v3787
        %v3802 = vadd.f32 %v3763, %v3787
        %v3803 = vadd.f32 %v3764, %v3787
        %v3804 = vadd.f32 %v3765, %v3787
        %v3805 = vadd.f32 %v3766, %v3787
        %v3806 = vadd.f32 %v3767, %v3787
        %v3807 = vadd.f32 %v3768, %v3787
        %v3808 = vadd.f32 %v3769, %v3787
        %v3809 = vadd.f32 %v3770, %v3787
        %v3810 = vadd.f32 %v3771, %v3787
        %v3811 = vadd.f32 %v3772, %v3787
        %v3812 = vadd.f32 %v3773, %v3787
        %v3813 = vadd.f32 %v3774, %v3787
        %v3814 = vadd.f32 %v3775, %v3787
        %v3815 = vadd.f32 %v3776, %v3787
        %v3816 = vadd.f32 %v3777, %v3787
        %v3817 = vadd.f32 %v3778, %v3787
        %v3818 = vadd.f32 %v3779, %v3787
        %v3819 = vadd.f32 %v3780, %v3787
        %v3820 = vadd.f32 %v3781, %v3787
        %v3821 = vmax.f32 %v3789, 0.0
        %v3822 = vmax.f32 %v3790, 0.0
        %v3823 = vmax.f32 %v3791, 0.0
        %v3824 = vmax.f32 %v3792, 0.0
        %v3825 = vmax.f32 %v3793, 0.0
        %v3826 = vmax.f32 %v3794, 0.0
        %v3827 = vmax.f32 %v3795, 0.0
        %v3828 = vmax.f32 %v3796, 0.0
        %v3829 = vmax.f32 %v3797, 0.0
        %v3830 = vmax.f32 %v3798, 0.0
        %v3831 = vmax.f32 %v3799, 0.0
        %v3832 = vmax.f32 %v3800, 0.0
        %v3833 = vmax.f32 %v3801, 0.0
        %v3834 = vmax.f32 %v3802, 0.0
        %v3835 = vmax.f32 %v3803, 0.0
        %v3836 = vmax.f32 %v3804, 0.0
        %v3837 = vmax.f32 %v3805, 0.0
        %v3838 = vmax.f32 %v3806, 0.0
        %v3839 = vmax.f32 %v3807, 0.0
        %v3840 = vmax.f32 %v3808, 0.0
        %v3841 = vmax.f32 %v3809, 0.0
        %v3842 = vmax.f32 %v3810, 0.0
        %v3843 = vmax.f32 %v3811, 0.0
        %v3844 = vmax.f32 %v3812, 0.0
        %v3845 = vmax.f32 %v3813, 0.0
        %v3846 = vmax.f32 %v3814, 0.0
        %v3847 = vmax.f32 %v3815, 0.0
        %v3848 = vmax.f32 %v3816, 0.0
        %v3849 = vmax.f32 %v3817, 0.0
        %v3850 = vmax.f32 %v3818, 0.0
        %v3851 = vmax.f32 %v3819, 0.0
        %v3852 = vmax.f32 %v3820, 0.0
        %v3853 = vpack.c.bf16 %v3822, %v3821
        %v3854 = vpack.c.bf16 %v3824, %v3823
        %v3855 = vpack.c.bf16 %v3826, %v3825
        %v3856 = vpack.c.bf16 %v3828, %v3827
        %v3857 = vpack.c.bf16 %v3830, %v3829
        %v3858 = vpack.c.bf16 %v3832, %v3831
        %v3859 = vpack.c.bf16 %v3834, %v3833
        %v3860 = vpack.c.bf16 %v3836, %v3835
        %v3861 = vpack.c.bf16 %v3838, %v3837
        %v3862 = vpack.c.bf16 %v3840, %v3839
        %v3863 = vpack.c.bf16 %v3842, %v3841
        %v3864 = vpack.c.bf16 %v3844, %v3843
        %v3865 = vpack.c.bf16 %v3846, %v3845
        %v3866 = vpack.c.bf16 %v3848, %v3847
        %v3867 = vpack.c.bf16 %v3850, %v3849
        %v3868 = vpack.c.bf16 %v3852, %v3851
        %v3869 = vld [vmem:[%s5] sm:$0xf]
        %v3870 = vld [vmem:[%s6] sm:$0x1]
        %v3872 = vlaneseq
        %v3873 = vshrl.u32 %v3872, 7
        %v3874 = vsub.s32 0, %v3873
        %v3875 = vrot.slane %v3870, %v3874
        %v3878 = vsel %vm701, %v3853, 0
        %v3881 = vsel %vm701, %v3854, 0
        %v3884 = vsel %vm701, %v3855, 0
        %v3887 = vsel %vm701, %v3856, 0
        %v3890 = vsel %vm701, %v3857, 0
        %v3893 = vsel %vm701, %v3858, 0
        %v3896 = vsel %vm701, %v3859, 0
        %v3899 = vsel %vm701, %v3860, 0
        %v3902 = vsel %vm701, %v3861, 0
        %v3905 = vsel %vm701, %v3862, 0
        %v3908 = vsel %vm701, %v3863, 0
        %v3911 = vsel %vm701, %v3864, 0
        %v3914 = vsel %vm701, %v3865, 0
        %v3917 = vsel %vm701, %v3866, 0
        %v3920 = vsel %vm701, %v3867, 0
        %v3923 = vsel %vm701, %v3868, 0
        %v3926 = vsel %vm973, %v3869, 0
        %3928 = vmatprep.subr.bf16.mxu0 0
        %3929 = vmatpush1.bf16.msra.mxu0 %v3926
        %3930 = vmatprep.subr.bf16.mxu0 0
        %3931 = vmatpush1.bf16.msra.mxu0 0
        %3932 = vmatprep.subr.bf16.mxu0 0
        %3933 = vmatpush1.bf16.msra.mxu0 0
        %3934 = vmatprep.subr.bf16.mxu0 0
        %3935 = vmatpush1.bf16.msra.mxu0 0
        %3936 = vmatprep.subr.bf16.mxu0 0
        %3937 = vmatpush1.bf16.msra.mxu0 0
        %3938 = vmatprep.subr.bf16.mxu0 0
        %3939 = vmatpush1.bf16.msra.mxu0 0
        %3940 = vmatprep.subr.bf16.mxu0 0
        %3941 = vmatpush1.bf16.msra.mxu0 0
        %3942 = vmatprep.subr.bf16.mxu0 0
        %3943 = vmatpush1.bf16.msra.mxu0 0
        %3944 = vmatprep.subr.bf16.mxu0 0
        %3945 = vmatpush1.bf16.msra.mxu0 0
        %3946 = vmatprep.subr.bf16.mxu0 0
        %3947 = vmatpush1.bf16.msra.mxu0 0
        %3948 = vmatprep.subr.bf16.mxu0 0
        %3949 = vmatpush1.bf16.msra.mxu0 0
        %3950 = vmatprep.subr.bf16.mxu0 0
        %3951 = vmatpush1.bf16.msra.mxu0 0
        %3952 = vmatprep.subr.bf16.mxu0 0
        %3953 = vmatpush1.bf16.msra.mxu0 0
        %3954 = vmatprep.subr.bf16.mxu0 0
        %3955 = vmatpush1.bf16.msra.mxu0 0
        %3956 = vmatprep.subr.bf16.mxu0 0
        %3957 = vmatpush1.bf16.msra.mxu0 0
        %3958 = vmatprep.subr.bf16.mxu0 0
        %3959 = vmatpush1.bf16.msra.mxu0 0
        %3960 = vmatprep.mubr.bf16.mxu0 0
        %3961 = vmatmul.mubr.bf16.gmra.mrb[0].mxu0 %v3878
        %v3962 = vpop.f32.mrb[0].mxu0
        %v3963 = vadd.f32 %v3875, %v3962
        %v3964 = vpop.f32.mrb[0].mxu0
        %v3965 = vpop.f32.mrb[0].mxu0
        %v3966 = vadd.f32 %v3875, %v3965
        %v3967 = vpop.f32.mrb[0].mxu0
        %3968 = vmatprep.mubr.bf16.mxu0 0
        %3969 = vmatmul.mubr.bf16.gmra.mrb[0].mxu0 %v3881
        %v3970 = vpop.f32.mrb[0].mxu0
        %v3971 = vadd.f32 %v3875, %v3970
        %v3972 = vpop.f32.mrb[0].mxu0
        %v3973 = vpop.f32.mrb[0].mxu0
        %v3974 = vadd.f32 %v3875, %v3973
        %v3975 = vpop.f32.mrb[0].mxu0
        %3976 = vmatprep.mubr.bf16.mxu0 0
        %3977 = vmatmul.mubr.bf16.gmra.mrb[0].mxu0 %v3884
        %v3978 = vpop.f32.mrb[0].mxu0
        %v3979 = vadd.f32 %v3875, %v3978
        %v3980 = vpop.f32.mrb[0].mxu0
        %v3981 = vpop.f32.mrb[0].mxu0
        %v3982 = vadd.f32 %v3875, %v3981
        %v3983 = vpop.f32.mrb[0].mxu0
        %3984 = vmatprep.mubr.bf16.mxu0 0
        %3985 = vmatmul.mubr.bf16.gmra.mrb[0].mxu0 %v3887
        %v3986 = vpop.f32.mrb[0].mxu0
        %v3987 = vadd.f32 %v3875, %v3986
        %v3988 = vpop.f32.mrb[0].mxu0
        %v3989 = vpop.f32.mrb[0].mxu0
        %v3990 = vadd.f32 %v3875, %v3989
        %v3991 = vpop.f32.mrb[0].mxu0
        %3992 = vmatprep.mubr.bf16.mxu0 0
        %3993 = vmatmul.mubr.bf16.gmra.mrb[0].mxu0 %v3890
        %v3994 = vpop.f32.mrb[0].mxu0
        %v3995 = vadd.f32 %v3875, %v3994
        %v3996 = vpop.f32.mrb[0].mxu0
        %v3997 = vpop.f32.mrb[0].mxu0
        %v3998 = vadd.f32 %v3875, %v3997
        %v3999 = vpop.f32.mrb[0].mxu0
        %4000 = vmatprep.mubr.bf16.mxu0 0
        %4001 = vmatmul.mubr.bf16.gmra.mrb[0].mxu0 %v3893
        %v4002 = vpop.f32.mrb[0].mxu0
        %v4003 = vadd.f32 %v3875, %v4002
        %v4004 = vpop.f32.mrb[0].mxu0
        %v4005 = vpop.f32.mrb[0].mxu0
        %v4006 = vadd.f32 %v3875, %v4005
        %v4007 = vpop.f32.mrb[0].mxu0
        %4008 = vmatprep.mubr.bf16.mxu0 0
        %4009 = vmatmul.mubr.bf16.gmra.mrb[0].mxu0 %v3896
        %v4010 = vpop.f32.mrb[0].mxu0
        %v4011 = vadd.f32 %v3875, %v4010
        %v4012 = vpop.f32.mrb[0].mxu0
        %v4013 = vpop.f32.mrb[0].mxu0
        %v4014 = vadd.f32 %v3875, %v4013
        %v4015 = vpop.f32.mrb[0].mxu0
        %4016 = vmatprep.mubr.bf16.mxu0 0
        %4017 = vmatmul.mubr.bf16.gmra.mrb[0].mxu0 %v3899
        %v4018 = vpop.f32.mrb[0].mxu0
        %v4019 = vadd.f32 %v3875, %v4018
        %v4020 = vpop.f32.mrb[0].mxu0
        %v4021 = vpop.f32.mrb[0].mxu0
        %v4022 = vadd.f32 %v3875, %v4021
        %v4023 = vpop.f32.mrb[0].mxu0
        %4024 = vmatprep.mubr.bf16.mxu0 0
        %4025 = vmatmul.mubr.bf16.gmra.mrb[0].mxu0 %v3902
        %v4026 = vpop.f32.mrb[0].mxu0
        %v4027 = vadd.f32 %v3875, %v4026
        %v4028 = vpop.f32.mrb[0].mxu0
        %v4029 = vpop.f32.mrb[0].mxu0
        %v4030 = vadd.f32 %v3875, %v4029
        %v4031 = vpop.f32.mrb[0].mxu0
        %4032 = vmatprep.mubr.bf16.mxu0 0
        %4033 = vmatmul.mubr.bf16.gmra.mrb[0].mxu0 %v3905
        %v4034 = vpop.f32.mrb[0].mxu0
        %v4035 = vadd.f32 %v3875, %v4034
        %v4036 = vpop.f32.mrb[0].mxu0
        %v4037 = vpop.f32.mrb[0].mxu0
        %v4038 = vadd.f32 %v3875, %v4037
        %v4039 = vpop.f32.mrb[0].mxu0
        %4040 = vmatprep.mubr.bf16.mxu0 0
        %4041 = vmatmul.mubr.bf16.gmra.mrb[0].mxu0 %v3908
        %v4042 = vpop.f32.mrb[0].mxu0
        %v4043 = vadd.f32 %v3875, %v4042
        %v4044 = vpop.f32.mrb[0].mxu0
        %v4045 = vpop.f32.mrb[0].mxu0
        %v4046 = vadd.f32 %v3875, %v4045
        %v4047 = vpop.f32.mrb[0].mxu0
        %4048 = vmatprep.mubr.bf16.mxu0 0
        %4049 = vmatmul.mubr.bf16.gmra.mrb[0].mxu0 %v3911
        %v4050 = vpop.f32.mrb[0].mxu0
        %v4051 = vadd.f32 %v3875, %v4050
        %v4052 = vpop.f32.mrb[0].mxu0
        %v4053 = vpop.f32.mrb[0].mxu0
        %v4054 = vadd.f32 %v3875, %v4053
        %v4055 = vpop.f32.mrb[0].mxu0
        %4056 = vmatprep.mubr.bf16.mxu0 0
        %4057 = vmatmul.mubr.bf16.gmra.mrb[0].mxu0 %v3914
        %v4058 = vpop.f32.mrb[0].mxu0
        %v4059 = vadd.f32 %v3875, %v4058
        %v4060 = vpop.f32.mrb[0].mxu0
        %v4061 = vpop.f32.mrb[0].mxu0
        %v4062 = vadd.f32 %v3875, %v4061
        %v4063 = vpop.f32.mrb[0].mxu0
        %4064 = vmatprep.mubr.bf16.mxu0 0
        %4065 = vmatmul.mubr.bf16.gmra.mrb[0].mxu0 %v3917
        %v4066 = vpop.f32.mrb[0].mxu0
        %v4067 = vadd.f32 %v3875, %v4066
        %v4068 = vpop.f32.mrb[0].mxu0
        %v4069 = vpop.f32.mrb[0].mxu0
        %v4070 = vadd.f32 %v3875, %v4069
        %v4071 = vpop.f32.mrb[0].mxu0
        %4072 = vmatprep.mubr.bf16.mxu0 0
        %4073 = vmatmul.mubr.bf16.gmra.mrb[0].mxu0 %v3920
        %v4074 = vpop.f32.mrb[0].mxu0
        %v4075 = vadd.f32 %v3875, %v4074
        %v4076 = vpop.f32.mrb[0].mxu0
        %v4077 = vpop.f32.mrb[0].mxu0
        %v4078 = vadd.f32 %v3875, %v4077
        %v4079 = vpop.f32.mrb[0].mxu0
        %4080 = vmatprep.mubr.bf16.mxu0 0
        %4081 = vmatmul.mubr.bf16.gmra.mrb[0].mxu0 %v3923
        %v4082 = vpop.f32.mrb[0].mxu0
        %v4083 = vadd.f32 %v3875, %v4082
        %v4084 = vpop.f32.mrb[0].mxu0
        %v4085 = vpop.f32.mrb[0].mxu0
        %v4086 = vadd.f32 %v3875, %v4085
        %v4087 = vpop.f32.mrb[0].mxu0
        %4088 = vdwg.mxu0
        %v4089 = vld [vmem:[%s7] sm:$0xf]
        %v4090 = vld [vmem:[%s7 + $0x4] sm:$0xf]
        %v4091 = vld [vmem:[%s8] sm:$0x1]
        %v4093 = vlaneseq
        %v4094 = vshrl.u32 %v4093, 7
        %v4095 = vsub.s32 0, %v4094
        %v4096 = vrot.slane %v4091, %v4095
        %v4100 = vunpack.c.l.b16 %v4089
        %v4101 = vunpack.c.l.b16 %v4090
        %v4102 = vpack.c.b16 %v4101, %v4100
        %4104 = vmatprep.subr.bf16.mxu0 0
        %4105 = vmatpush1.bf16.msra.mxu0 %v4102
        %4106 = vmatprep.subr.bf16.mxu0 0
        %4107 = vmatpush1.bf16.msra.mxu0 0
        %4108 = vmatprep.subr.bf16.mxu0 0
        %4109 = vmatpush1.bf16.msra.mxu0 0
        %4110 = vmatprep.subr.bf16.mxu0 0
        %4111 = vmatpush1.bf16.msra.mxu0 0
        %4112 = vmatprep.subr.bf16.mxu0 0
        %4113 = vmatpush1.bf16.msra.mxu0 0
        %4114 = vmatprep.subr.bf16.mxu0 0
        %4115 = vmatpush1.bf16.msra.mxu0 0
        %4116 = vmatprep.subr.bf16.mxu0 0
        %4117 = vmatpush1.bf16.msra.mxu0 0
        %4118 = vmatprep.subr.bf16.mxu0 0
        %4119 = vmatpush1.bf16.msra.mxu0 0
        %4120 = vmatprep.subr.bf16.mxu0 0
        %4121 = vmatpush1.bf16.msra.mxu0 0
        %4122 = vmatprep.subr.bf16.mxu0 0
        %4123 = vmatpush1.bf16.msra.mxu0 0
        %4124 = vmatprep.subr.bf16.mxu0 0
        %4125 = vmatpush1.bf16.msra.mxu0 0
        %4126 = vmatprep.subr.bf16.mxu0 0
        %4127 = vmatpush1.bf16.msra.mxu0 0
        %4128 = vmatprep.subr.bf16.mxu0 0
        %4129 = vmatpush1.bf16.msra.mxu0 0
        %4130 = vmatprep.subr.bf16.mxu0 0
        %4131 = vmatpush1.bf16.msra.mxu0 0
        %4132 = vmatprep.subr.bf16.mxu0 0
        %4133 = vmatpush1.bf16.msra.mxu0 0
        %4134 = vmatprep.subr.bf16.mxu0 0
        %4135 = vmatpush1.bf16.msra.mxu0 0
        %4136 = vmatprep.mubr.bf16.mxu0 0
        %4137 = vmatmul.mubr.bf16.gmra.mrb[0].mxu0 %v461
        %v4138 = vpop.f32.mrb[0].mxu0
        %v4139 = vadd.f32 %v4096, %v4138
        %v4140 = vpop.f32.mrb[0].mxu0
        %v4141 = vpop.f32.mrb[0].mxu0
        %v4142 = vadd.f32 %v4096, %v4141
        %v4143 = vpop.f32.mrb[0].mxu0
        %4144 = vmatprep.mubr.bf16.mxu0 0
        %4145 = vmatmul.mubr.bf16.gmra.mrb[0].mxu0 %v464
        %v4146 = vpop.f32.mrb[0].mxu0
        %v4147 = vadd.f32 %v4096, %v4146
        %v4148 = vpop.f32.mrb[0].mxu0
        %v4149 = vpop.f32.mrb[0].mxu0
        %v4150 = vadd.f32 %v4096, %v4149
        %v4151 = vpop.f32.mrb[0].mxu0
        %4152 = vmatprep.mubr.bf16.mxu0 0
        %4153 = vmatmul.mubr.bf16.gmra.mrb[0].mxu0 %v467
        %v4154 = vpop.f32.mrb[0].mxu0
        %v4155 = vadd.f32 %v4096, %v4154
        %v4156 = vpop.f32.mrb[0].mxu0
        %v4157 = vpop.f32.mrb[0].mxu0
        %v4158 = vadd.f32 %v4096, %v4157
        %v4159 = vpop.f32.mrb[0].mxu0
        %4160 = vmatprep.mubr.bf16.mxu0 0
        %4161 = vmatmul.mubr.bf16.gmra.mrb[0].mxu0 %v470
        %v4162 = vpop.f32.mrb[0].mxu0
        %v4163 = vadd.f32 %v4096, %v4162
        %v4164 = vpop.f32.mrb[0].mxu0
        %v4165 = vpop.f32.mrb[0].mxu0
        %v4166 = vadd.f32 %v4096, %v4165
        %v4167 = vpop.f32.mrb[0].mxu0
        %4168 = vmatprep.mubr.bf16.mxu0 0
        %4169 = vmatmul.mubr.bf16.gmra.mrb[0].mxu0 %v473
        %v4170 = vpop.f32.mrb[0].mxu0
        %v4171 = vadd.f32 %v4096, %v4170
        %v4172 = vpop.f32.mrb[0].mxu0
        %v4173 = vpop.f32.mrb[0].mxu0
        %v4174 = vadd.f32 %v4096, %v4173
        %v4175 = vpop.f32.mrb[0].mxu0
        %4176 = vmatprep.mubr.bf16.mxu0 0
        %4177 = vmatmul.mubr.bf16.gmra.mrb[0].mxu0 %v476
        %v4178 = vpop.f32.mrb[0].mxu0
        %v4179 = vadd.f32 %v4096, %v4178
        %v4180 = vpop.f32.mrb[0].mxu0
        %v4181 = vpop.f32.mrb[0].mxu0
        %v4182 = vadd.f32 %v4096, %v4181
        %v4183 = vpop.f32.mrb[0].mxu0
        %4184 = vmatprep.mubr.bf16.mxu0 0
        %4185 = vmatmul.mubr.bf16.gmra.mrb[0].mxu0 %v479
        %v4186 = vpop.f32.mrb[0].mxu0
        %v4187 = vadd.f32 %v4096, %v4186
        %v4188 = vpop.f32.mrb[0].mxu0
        %v4189 = vpop.f32.mrb[0].mxu0
        %v4190 = vadd.f32 %v4096, %v4189
        %v4191 = vpop.f32.mrb[0].mxu0
        %4192 = vmatprep.mubr.bf16.mxu0 0
        %4193 = vmatmul.mubr.bf16.gmra.mrb[0].mxu0 %v482
        %v4194 = vpop.f32.mrb[0].mxu0
        %v4195 = vadd.f32 %v4096, %v4194
        %v4196 = vpop.f32.mrb[0].mxu0
        %v4197 = vpop.f32.mrb[0].mxu0
        %v4198 = vadd.f32 %v4096, %v4197
        %v4199 = vpop.f32.mrb[0].mxu0
        %4200 = vmatprep.mubr.bf16.mxu0 0
        %4201 = vmatmul.mubr.bf16.gmra.mrb[0].mxu0 %v485
        %v4202 = vpop.f32.mrb[0].mxu0
        %v4203 = vadd.f32 %v4096, %v4202
        %v4204 = vpop.f32.mrb[0].mxu0
        %v4205 = vpop.f32.mrb[0].mxu0
        %v4206 = vadd.f32 %v4096, %v4205
        %v4207 = vpop.f32.mrb[0].mxu0
        %4208 = vmatprep.mubr.bf16.mxu0 0
        %4209 = vmatmul.mubr.bf16.gmra.mrb[0].mxu0 %v488
        %v4210 = vpop.f32.mrb[0].mxu0
        %v4211 = vadd.f32 %v4096, %v4210
        %v4212 = vpop.f32.mrb[0].mxu0
        %v4213 = vpop.f32.mrb[0].mxu0
        %v4214 = vadd.f32 %v4096, %v4213
        %v4215 = vpop.f32.mrb[0].mxu0
        %4216 = vmatprep.mubr.bf16.mxu0 0
        %4217 = vmatmul.mubr.bf16.gmra.mrb[0].mxu0 %v491
        %v4218 = vpop.f32.mrb[0].mxu0
        %v4219 = vadd.f32 %v4096, %v4218
        %v4220 = vpop.f32.mrb[0].mxu0
        %v4221 = vpop.f32.mrb[0].mxu0
        %v4222 = vadd.f32 %v4096, %v4221
        %v4223 = vpop.f32.mrb[0].mxu0
        %4224 = vmatprep.mubr.bf16.mxu0 0
        %4225 = vmatmul.mubr.bf16.gmra.mrb[0].mxu0 %v494
        %v4226 = vpop.f32.mrb[0].mxu0
        %v4227 = vadd.f32 %v4096, %v4226
        %v4228 = vpop.f32.mrb[0].mxu0
        %v4229 = vpop.f32.mrb[0].mxu0
        %v4230 = vadd.f32 %v4096, %v4229
        %v4231 = vpop.f32.mrb[0].mxu0
        %4232 = vmatprep.mubr.bf16.mxu0 0
        %4233 = vmatmul.mubr.bf16.gmra.mrb[0].mxu0 %v497
        %v4234 = vpop.f32.mrb[0].mxu0
        %v4235 = vadd.f32 %v4096, %v4234
        %v4236 = vpop.f32.mrb[0].mxu0
        %v4237 = vpop.f32.mrb[0].mxu0
        %v4238 = vadd.f32 %v4096, %v4237
        %v4239 = vpop.f32.mrb[0].mxu0
        %4240 = vmatprep.mubr.bf16.mxu0 0
        %4241 = vmatmul.mubr.bf16.gmra.mrb[0].mxu0 %v500
        %v4242 = vpop.f32.mrb[0].mxu0
        %v4243 = vadd.f32 %v4096, %v4242
        %v4244 = vpop.f32.mrb[0].mxu0
        %v4245 = vpop.f32.mrb[0].mxu0
        %v4246 = vadd.f32 %v4096, %v4245
        %v4247 = vpop.f32.mrb[0].mxu0
        %4248 = vmatprep.mubr.bf16.mxu0 0
        %4249 = vmatmul.mubr.bf16.gmra.mrb[0].mxu0 %v503
        %v4250 = vpop.f32.mrb[0].mxu0
        %v4251 = vadd.f32 %v4096, %v4250
        %v4252 = vpop.f32.mrb[0].mxu0
        %v4253 = vpop.f32.mrb[0].mxu0
        %v4254 = vadd.f32 %v4096, %v4253
        %v4255 = vpop.f32.mrb[0].mxu0
        %4256 = vmatprep.mubr.bf16.mxu0 0
        %4257 = vmatmul.mubr.bf16.gmra.mrb[0].mxu0 %v506
        %v4258 = vpop.f32.mrb[0].mxu0
        %v4259 = vadd.f32 %v4096, %v4258
        %v4260 = vpop.f32.mrb[0].mxu0
        %v4261 = vpop.f32.mrb[0].mxu0
        %v4262 = vadd.f32 %v4096, %v4261
        %v4263 = vpop.f32.mrb[0].mxu0
        %4264 = vdwg.mxu0
        %v4265 = vadd.f32 %v3963, %v4139
        %v4266 = vadd.f32 %v3966, %v4142
        %v4267 = vadd.f32 %v3971, %v4147
        %v4268 = vadd.f32 %v3974, %v4150
        %v4269 = vadd.f32 %v3979, %v4155
        %v4270 = vadd.f32 %v3982, %v4158
        %v4271 = vadd.f32 %v3987, %v4163
        %v4272 = vadd.f32 %v3990, %v4166
        %v4273 = vadd.f32 %v3995, %v4171
        %v4274 = vadd.f32 %v3998, %v4174
        %v4275 = vadd.f32 %v4003, %v4179
        %v4276 = vadd.f32 %v4006, %v4182
        %v4277 = vadd.f32 %v4011, %v4187
        %v4278 = vadd.f32 %v4014, %v4190
        %v4279 = vadd.f32 %v4019, %v4195
        %v4280 = vadd.f32 %v4022, %v4198
        %v4281 = vadd.f32 %v4027, %v4203
        %v4282 = vadd.f32 %v4030, %v4206
        %v4283 = vadd.f32 %v4035, %v4211
        %v4284 = vadd.f32 %v4038, %v4214
        %v4285 = vadd.f32 %v4043, %v4219
        %v4286 = vadd.f32 %v4046, %v4222
        %v4287 = vadd.f32 %v4051, %v4227
        %v4288 = vadd.f32 %v4054, %v4230
        %v4289 = vadd.f32 %v4059, %v4235
        %v4290 = vadd.f32 %v4062, %v4238
        %v4291 = vadd.f32 %v4067, %v4243
        %v4292 = vadd.f32 %v4070, %v4246
        %v4293 = vadd.f32 %v4075, %v4251
        %v4294 = vadd.f32 %v4078, %v4254
        %v4295 = vadd.f32 %v4083, %v4259
        %v4296 = vadd.f32 %v4086, %v4262
        %v4297 = vmax.f32 %v4265, 0.0
        %v4298 = vmax.f32 %v4266, 0.0
        %v4299 = vmax.f32 %v4267, 0.0
        %v4300 = vmax.f32 %v4268, 0.0
        %v4301 = vmax.f32 %v4269, 0.0
        %v4302 = vmax.f32 %v4270, 0.0
        %v4303 = vmax.f32 %v4271, 0.0
        %v4304 = vmax.f32 %v4272, 0.0
        %v4305 = vmax.f32 %v4273, 0.0
        %v4306 = vmax.f32 %v4274, 0.0
        %v4307 = vmax.f32 %v4275, 0.0
        %v4308 = vmax.f32 %v4276, 0.0
        %v4309 = vmax.f32 %v4277, 0.0
        %v4310 = vmax.f32 %v4278, 0.0
        %v4311 = vmax.f32 %v4279, 0.0
        %v4312 = vmax.f32 %v4280, 0.0
        %v4313 = vmax.f32 %v4281, 0.0
        %v4314 = vmax.f32 %v4282, 0.0
        %v4315 = vmax.f32 %v4283, 0.0
        %v4316 = vmax.f32 %v4284, 0.0
        %v4317 = vmax.f32 %v4285, 0.0
        %v4318 = vmax.f32 %v4286, 0.0
        %v4319 = vmax.f32 %v4287, 0.0
        %v4320 = vmax.f32 %v4288, 0.0
        %v4321 = vmax.f32 %v4289, 0.0
        %v4322 = vmax.f32 %v4290, 0.0
        %v4323 = vmax.f32 %v4291, 0.0
        %v4324 = vmax.f32 %v4292, 0.0
        %v4325 = vmax.f32 %v4293, 0.0
        %v4326 = vmax.f32 %v4294, 0.0
        %v4327 = vmax.f32 %v4295, 0.0
        %v4328 = vmax.f32 %v4296, 0.0
        %vm4329 = vcmask 261120
        %4330 = vst.msk [vmem:[%s325] sm:$0xff] %vm4329, %v4297
        %4331 = vst.msk [vmem:[%s325 + $0x8] sm:$0xff] %vm4329, %v4298
        %4332 = vst.msk [vmem:[%s325 + $0x10] sm:$0xff] %vm4329, %v4299
        %4333 = vst.msk [vmem:[%s325 + $0x18] sm:$0xff] %vm4329, %v4300
        %4334 = vst.msk [vmem:[%s325 + $0x20] sm:$0xff] %vm4329, %v4301
        %4335 = vst.msk [vmem:[%s325 + $0x28] sm:$0xff] %vm4329, %v4302
        %4336 = vst.msk [vmem:[%s325 + $0x30] sm:$0xff] %vm4329, %v4303
        %4337 = vst.msk [vmem:[%s325 + $0x38] sm:$0xff] %vm4329, %v4304
        %4338 = vst.msk [vmem:[%s325 + $0x40] sm:$0xff] %vm4329, %v4305
        %4339 = vst.msk [vmem:[%s325 + $0x48] sm:$0xff] %vm4329, %v4306
        %4340 = vst.msk [vmem:[%s325 + $0x50] sm:$0xff] %vm4329, %v4307
        %4341 = vst.msk [vmem:[%s325 + $0x58] sm:$0xff] %vm4329, %v4308
        %4342 = vst.msk [vmem:[%s325 + $0x60] sm:$0xff] %vm4329, %v4309
        %4343 = vst.msk [vmem:[%s325 + $0x68] sm:$0xff] %vm4329, %v4310
        %4344 = vst.msk [vmem:[%s325 + $0x70] sm:$0xff] %vm4329, %v4311
        %4345 = vst.msk [vmem:[%s325 + $0x78] sm:$0xff] %vm4329, %v4312
        %4346 = vst.msk [vmem:[%s325 + $0x80] sm:$0xff] %vm4329, %v4313
        %4347 = vst.msk [vmem:[%s325 + $0x88] sm:$0xff] %vm4329, %v4314
        %4348 = vst.msk [vmem:[%s325 + $0x90] sm:$0xff] %vm4329, %v4315
        %4349 = vst.msk [vmem:[%s325 + $0x98] sm:$0xff] %vm4329, %v4316
        %4350 = vst.msk [vmem:[%s325 + $0xa0] sm:$0xff] %vm4329, %v4317
        %4351 = vst.msk [vmem:[%s325 + $0xa8] sm:$0xff] %vm4329, %v4318
        %4352 = vst.msk [vmem:[%s325 + $0xb0] sm:$0xff] %vm4329, %v4319
        %4353 = vst.msk [vmem:[%s325 + $0xb8] sm:$0xff] %vm4329, %v4320
        %4354 = vst.msk [vmem:[%s325 + $0xc0] sm:$0xff] %vm4329, %v4321
        %4355 = vst.msk [vmem:[%s325 + $0xc8] sm:$0xff] %vm4329, %v4322
        %4356 = vst.msk [vmem:[%s325 + $0xd0] sm:$0xff] %vm4329, %v4323
        %4357 = vst.msk [vmem:[%s325 + $0xd8] sm:$0xff] %vm4329, %v4324
        %4358 = vst.msk [vmem:[%s325 + $0xe0] sm:$0xff] %vm4329, %v4325
        %4359 = vst.msk [vmem:[%s325 + $0xe8] sm:$0xff] %vm4329, %v4326
        %4360 = vst.msk [vmem:[%s325 + $0xf0] sm:$0xff] %vm4329, %v4327
        %4361 = vst.msk [vmem:[%s325 + $0xf8] sm:$0xff] %vm4329, %v4328
        %s4362 = sand.u32 %s225, 1
        %s4363 = scalar_lea.sflag [#allocation5], %s4362
        %s4364 = sand.u32 %s225, 1
        %s4365 = smul.addr %s4364, 256
        %s4366 = scalar_lea.vmem [#allocation4], %s4365
        // Predicated region
        $region57: #{bottleneck_forward.1} parent=55 // pred_check
          %p4367 = pneg %p235
        $region58: #{bottleneck_forward.1} parent=55 // pred_check_branch
          %4369 = sbr.rel (%p4367) target = $region60
        $region59: #{bottleneck_forward.1} parent=55 // pred_region
          %s4371 = ssub.s32 4096, 4096
          %4372 = vsyncadd %s4363, %s4371
          %s4373 = smul.addr %s23, 32
          %s4374 = smul.addr %s4373, 128
          %s4375 = scalar_lea.hbm %s9, %s4374
          %s4376 = sshll.u32 %s4366, 4
          %s4377 = int_to_ptr.vmem [resolvable:$true] %s4376
          %4382 = dma.vmem_to_hbm [thread:$0]  %s4377, 4096, %s4375, %s4363, 128, 128, 8
        $region60: #{bottleneck_forward.1} parent=55 // pred_fallthru
          _
      $region56: #{bottleneck_forward.1} parent=5 // pred_fallthru
        _
      %p4383 = scmp.le.s32.totalorder 2, %s18
      // Predicated region
      $region61: #{bottleneck_forward.1} parent=5 // pred_check
        %p4384 = pneg %p4383
      $region62: #{bottleneck_forward.1} parent=5 // pred_check_branch
        %4386 = sbr.rel (%p4384) target = $region64
      $region63: #{bottleneck_forward.1} parent=5 // pred_region
        %s4387 = ssub.s32 %s18, 2
        // Predicated region
        $region65: #{bottleneck_forward.1} parent=63 // pred_check
          %p4388 = pneg %p241
        $region66: #{bottleneck_forward.1} parent=63 // pred_check_branch
          %4390 = sbr.rel (%p4388) target = $region68
        $region67: #{bottleneck_forward.1} parent=63 // pred_region
          %s4391 = sand.u32 %s226, 1
          %s4392 = scalar_lea.sflag [#allocation5], %s4391
          %s4393 = sand.u32 %s226, 1
          %s4394 = smul.addr %s4393, 256
          %s4395 = scalar_lea.vmem [#allocation4], %s4394
          %4396 = dma.done %s4392, 4096
        $region68: #{bottleneck_forward.1} parent=63 // pred_fallthru
          _
      $region64: #{bottleneck_forward.1} parent=5 // pred_fallthru
        _
    $region6: #{bottleneck_forward.1} parent=1 // loop_footer
      %s22 = sadd.s32 1, %s18
    $region7: #{bottleneck_forward.1} parent=1 // loop_footer_branch
      %17 = sbr.rel target = $region3
    $region8: #{bottleneck_forward.1} parent=1 // loop_exit
      _
    %4397 = vsyncpa [#allocation5], 1
    %s4398 = scalar_lea.sflag [#allocation5], 1
    %4399 = vsyncpa %s4398, 1

</llo_original>
